<compile_context>
chip_gen: v7x
topology: tpu7x:2x2x1
jax: 0.10.0
libtpu: 0.0.40
codegen_flags: <defaults>
</compile_context>

<pallas_src>
import functools

import jax
import jax.numpy as jnp
from jax.experimental import pallas as pl
from jax.experimental.pallas import tpu as pltpu

# ----------------------------- configuration ------------------------------
LATENT_DIM = 32
NUM_FEATURES = 8
IMG_SHAPE = (3, 32, 32)          # (C, H, W)  -> img_shape[1] == 32 branch
SCALER = IMG_SHAPE[1] // 16      # = 2
NUM_TASKS = 4
# (kernel, stride, padding, output_padding) for the 5 ConvTranspose2d layers
CONV_SPECS = [(4, 2, 1, 0), (4, 2, 1, 0), (4, 2, 1, 0), (4, 2, 1, 0), (5, 1, 2, 0)]
BN_EPS = 1e-5
DOT_DTYPE = jnp.bfloat16         # MXU operand dtype for the conv matmuls


# ------------------------------ Pallas kernels ----------------------------
def _head_kernel(z_ref, wt_ref, bt_ref, wl_ref, bl_ref, avg_ref, g_ref, b_ref,
                 emb_ref, x_ref):
    """translator (linear + task bias) -> l1 -> BatchNorm2d, fused.

    l1 weight columns are pre-permuted to (h, w, c) order, so the (B, 64) output
    is the NHWC row matrix (B*2*2, 16).  BatchNorm channel c occupies columns
    {c, 16+c, 32+c, 48+c}; `avg_ref` is the (64, 64) group-averaging matrix that
    turns per-column row-means into per-channel means broadcast back to 64 cols.
    """
    emb = jnp.dot(z_ref[...], wt_ref[...],
                  preferred_element_type=jnp.float32) + bt_ref[...]
    emb_ref[...] = emb
    y = jnp.dot(emb, wl_ref[...], preferred_element_type=jnp.float32) + bl_ref[...]
    mean = jnp.dot(jnp.mean(y, axis=0, keepdims=True), avg_ref[...],
                   preferred_element_type=jnp.float32)
    d = y - mean
    var = jnp.dot(jnp.mean(d * d, axis=0, keepdims=True), avg_ref[...],
                  preferred_element_type=jnp.float32)
    x = d * jax.lax.rsqrt(var + BN_EPS) * g_ref[...] + b_ref[...]
    x_ref[...] = x.astype(x_ref.dtype)


def _convbn_kernel(p_ref, w_ref, avg_ref, g_ref, b_ref, o_ref):
    """Sub-pixel ConvTranspose2d (as one bf16 matmul) + BatchNorm2d + ReLU.

    Output columns are grouped (r, s, c_out); BN stats for channel c must pool
    the 4 sub-pixel groups as well as all rows, which the group-averaging
    matmul with `avg_ref` provides (biased variance, training mode, eps=1e-5).
    """
    y = jnp.dot(p_ref[...], w_ref[...], preferred_element_type=jnp.float32)
    mean = jnp.dot(jnp.mean(y, axis=0, keepdims=True), avg_ref[...],
                   preferred_element_type=jnp.float32)
    d = y - mean
    var = jnp.dot(jnp.mean(d * d, axis=0, keepdims=True), avg_ref[...],
                  preferred_element_type=jnp.float32)
    y = d * jax.lax.rsqrt(var + BN_EPS) * g_ref[...] + b_ref[...]
    o_ref[...] = jnp.maximum(y, 0.0).astype(o_ref.dtype)


def _final_kernel(w_ref, x_ref, o_ref):
    """Final ConvTranspose2d(k=5,s=1,p=2) + tanh, transposed so the 3-channel
    output sits on sublanes and B*H*W sits on (dense) lanes."""
    o_ref[...] = jnp.tanh(
        jnp.dot(w_ref[...], x_ref[...], preferred_element_type=jnp.float32))


# ------------------------------ kernel wrappers ----------------------------
def head_forward(z, wt, bt, wl, bl, avg, gamma, beta):
    B, L = z.shape
    D = wl.shape[1]
    return pl.pallas_call(
        _head_kernel,
        out_shape=(jax.ShapeDtypeStruct((B, L), jnp.float32),   # translator emb
                   jax.ShapeDtypeStruct((B, D), DOT_DTYPE)),    # bn0(l1) as NHWC rows
        grid=(1,),
        in_specs=[pl.BlockSpec((B, L), lambda i: (0, 0)),
                  pl.BlockSpec((L, L), lambda i: (0, 0)),
                  pl.BlockSpec((1, L), lambda i: (0, 0)),
                  pl.BlockSpec((L, D), lambda i: (0, 0)),
                  pl.BlockSpec((1, D), lambda i: (0, 0)),
                  pl.BlockSpec((D, D), lambda i: (0, 0)),
                  pl.BlockSpec((1, D), lambda i: (0, 0)),
                  pl.BlockSpec((1, D), lambda i: (0, 0))],
        out_specs=(pl.BlockSpec((B, L), lambda i: (0, 0)),
                   pl.BlockSpec((B, D), lambda i: (0, 0))),
    )(z, wt, bt, wl, bl, avg, gamma, beta)


def conv_bn_relu(patches, w_block, avg, gamma4, beta4):
    """One stride-2 transposed-conv block: (M, 9*Cin)@(9*Cin, 4*Cout) + BN + ReLU.

    Single M block: BN statistics must span all B*H*W rows (tiny at these sizes;
    see TODO at top of file for a two-pass tiling at very large batch)."""
    M, K = patches.shape
    N = w_block.shape[1]
    return pl.pallas_call(
        _convbn_kernel,
        out_shape=jax.ShapeDtypeStruct((M, N), DOT_DTYPE),
        grid=(1,),
        in_specs=[pl.BlockSpec((M, K), lambda i: (0, 0)),
                  pl.BlockSpec((K, N), lambda i: (0, 0)),
                  pl.BlockSpec((N, N), lambda i: (0, 0)),
                  pl.BlockSpec((1, N), lambda i: (0, 0)),
                  pl.BlockSpec((1, N), lambda i: (0, 0))],
        out_specs=pl.BlockSpec((M, N), lambda i: (0, 0)),
    )(patches, w_block, avg, gamma4, beta4)


def final_conv_tanh(w_t, patches_t, *, tn=1024):
    """(Cout, K) @ (K, B*H*W) + tanh, tiled (parallel) over the lane axis."""
    C, K = w_t.shape
    M = patches_t.shape[1]
    if M % tn != 0:
        tn = M
    return pl.pallas_call(
        _final_kernel,
        out_shape=jax.ShapeDtypeStruct((C, M), jnp.float32),
        grid=(M // tn,),
        in_specs=[pl.BlockSpec((C, K), lambda i: (0, 0)),
                  pl.BlockSpec((K, tn), lambda i: (0, i))],
        out_specs=pl.BlockSpec((C, tn), lambda i: (0, i)),
        compiler_params=pltpu.CompilerParams(
            dimension_semantics=("parallel",)),
    )(w_t, patches_t)


# --------------------- glue: layout / patch construction -------------------
def im2col_3x3(x):
    """(B, H, W, C) -> (B*H*W, 9*C); 3x3 window, pad 1, column order (dy, dx, c)."""
    B, H, W, C = x.shape
    xp = jnp.pad(x, ((0, 0), (1, 1), (1, 1), (0, 0)))
    cols = [xp[:, dy:dy + H, dx:dx + W, :] for dy in range(3) for dx in range(3)]
    return jnp.concatenate(cols, axis=-1).reshape(B * H * W, 9 * C)


def pixel_shuffle(y, B, H, W, cout):
    """(B*H*W, 4*cout) with (r, s, c) channel order -> (B, 2H, 2W, cout) NHWC."""
    return (y.reshape(B, H, W, 2, 2, cout)
             .transpose(0, 1, 3, 2, 4, 5)
             .reshape(B, 2 * H, 2 * W, cout))


def im2col_5x5_t(x):
    """(B, H, W, C) -> transposed im2col (25*C, B*H*W); 5x5 window, pad 2."""
    B, H, W, C = x.shape
    xc = jnp.pad(x.transpose(3, 0, 1, 2), ((0, 0), (0, 0), (2, 2), (2, 2)))
    cols = [xc[:, :, dy:dy + H, dx:dx + W] for dy in range(5) for dx in range(5)]
    return jnp.stack(cols, axis=0).reshape(25 * C, B * H * W)


def make_s2_block_weight(w_pt):
    """ConvTranspose2d(k=4, s=2, p=1) weight (Cin, Cout, 4, 4) -> (9*Cin, 4*Cout).

    Sub-pixel decomposition on the UN-dilated input: output pixel (2m+r, 2n+s)
    only sees input window rows m-1..m+1 / cols n-1..n+1 with kernel taps
    ky = r + 3 - 2*dy, kx = s + 3 - 2*dx (taps outside [0,3] are structural 0).
    Rows ordered (dy, dx, ci); columns ordered (r, s, co)."""
    cin, cout = int(w_pt.shape[0]), int(w_pt.shape[1])
    zeros = jnp.zeros((cin, cout), w_pt.dtype)
    row_blocks = []
    for dy in range(3):
        for dx in range(3):
            parts = []
            for r in range(2):
                ky = r + 3 - 2 * dy
                for s in range(2):
                    kx = s + 3 - 2 * dx
                    parts.append(w_pt[:, :, ky, kx]
                                 if (0 <= ky <= 3 and 0 <= kx <= 3) else zeros)
            row_blocks.append(jnp.concatenate(parts, axis=1))     # (cin, 4*cout)
    return jnp.concatenate(row_blocks, axis=0)                    # (9*cin, 4*cout)


def make_s1_weight_t(w_pt):
    """ConvTranspose2d(k=5, s=1, p=2) weight (Cin, Cout, 5, 5) -> (Cout, 25*Cin)
    direct-conv weight, transposed, K ordered (dy, dx, ci)."""
    w_eff = jnp.flip(w_pt, axis=(2, 3)).transpose(2, 3, 0, 1)     # (5,5,cin,cout)
    return w_eff.reshape(-1, w_pt.shape[1]).T                     # (cout, 25*cin)


# ------------------------------- parameters --------------------------------
def init_params(key):
    """Parameters in PyTorch layout (ConvTranspose2d weight = (Cin, Cout, kH, kW))."""
    ks = jax.random.split(key, 16)
    nf, s = NUM_FEATURES, SCALER
    p = {}
    # TODO(synk): `translator` is an externally-injected nn.Module in the original
    # code; we use a deterministic linear + task-embedding stand-in.
    p["trans_w"] = 0.1 * jax.random.normal(ks[0], (LATENT_DIM, LATENT_DIM), jnp.float32)
    p["trans_b"] = 0.1 * jax.random.normal(ks[1], (1, LATENT_DIM), jnp.float32)
    p["task_emb"] = 0.1 * jax.random.normal(ks[2], (NUM_TASKS, LATENT_DIM), jnp.float32)
    d1 = nf * s * s * s
    p["l1_w"] = 0.1 * jax.random.normal(ks[3], (LATENT_DIM, d1), jnp.float32)
    p["l1_b"] = 0.1 * jax.random.normal(ks[4], (1, d1), jnp.float32)
    c0 = nf * s
    p["bn0_g"] = 1.0 + 0.1 * jax.random.normal(ks[5], (1, c0), jnp.float32)
    p["bn0_b"] = 0.1 * jax.random.normal(ks[6], (1, c0), jnp.float32)
    chans = [c0, nf * 8, nf * 4, nf * 2, nf, IMG_SHAPE[0]]
    convs = []
    for li, (k, _, _, _) in enumerate(CONV_SPECS):
        cin, cout = chans[li], chans[li + 1]
        sub = jax.random.split(ks[7 + li], 3)
        convs.append({
            "w": 0.05 * jax.random.normal(sub[0], (cin, cout, k, k), jnp.float32),
            "g": 1.0 + 0.1 * jax.random.normal(sub[1], (1, cout), jnp.float32),
            "b": 0.1 * jax.random.normal(sub[2], (1, cout), jnp.float32),
        })
    p["convs"] = convs
    return p


def prepare_params(raw):
    """One-time, semantics-preserving reparametrization into kernel layout."""
    nf, s = NUM_FEATURES, SCALER
    c0, d1 = nf * s, nf * s * s * s
    p = {"trans_w": raw["trans_w"], "trans_b": raw["trans_b"],
         "task_emb": raw["task_emb"]}
    # permute l1 output columns from NCHW feature order j = c*(s*s) + h*s + w to
    # (h, w, c) order q = (h*s+w)*c0 + c, so the head kernel's (B, d1) output is
    # bit-identical to the NHWC row matrix (B*s*s, c0).
    perm = jnp.array([(q % c0) * (s * s) + q // c0 for q in range(d1)], jnp.int32)
    p["l1_w"] = raw["l1_w"][:, perm]
    p["l1_b"] = raw["l1_b"][:, perm]
    p["bn0_g"] = jnp.tile(raw["bn0_g"], (1, s * s))                       # (1, d1)
    p["bn0_b"] = jnp.tile(raw["bn0_b"], (1, s * s))
    p["avg0"] = jnp.tile(jnp.eye(c0, dtype=jnp.float32), (s * s, s * s)) / (s * s)
    convs = []
    for li in range(4):
        cp = raw["convs"][li]
        cout = int(cp["w"].shape[1])
        convs.append({
            "w": make_s2_block_weight(cp["w"]).astype(DOT_DTYPE),   # (9*cin, 4*cout)
            "g": jnp.tile(cp["g"], (1, 4)),
            "b": jnp.tile(cp["b"], (1, 4)),
            "avg": jnp.tile(jnp.eye(cout, dtype=jnp.float32), (4, 4)) * 0.25,
        })
    p["convs"] = convs
    p["final_w_t"] = make_s1_weight_t(raw["convs"][4]["w"]).astype(DOT_DTYPE)  # (3,200)
    return p


# -------------------------------- forward ----------------------------------
def generator_forward(params, z, task_id, return_emb=False):
    B = z.shape[0]
    nf, s = NUM_FEATURES, SCALER
    c0 = nf * s
    # translator_emb = translator(z, task_id);  out = l1(emb);  BatchNorm2d(c0)
    bt = params["trans_b"] + params["task_emb"][task_id][None, :]
    emb, x = head_forward(z, params["trans_w"], bt, params["l1_w"], params["l1_b"],
                          params["avg0"], params["bn0_g"], params["bn0_b"])
    x = x.reshape(B, s, s, c0)          # free reshape: columns already (h, w, c)
    H = s
    # blocks 1..4: ConvTranspose2d(k4,s2,p1) -> BatchNorm2d -> ReLU, fused
    for li in range(4):
        cp = params["convs"][li]
        cout = cp["w"].shape[1] // 4
        patches = im2col_3x3(x).astype(DOT_DTYPE)                 # (B*H*W, 9*cin)
        y = conv_bn_relu(patches, cp["w"], cp["avg"], cp["g"], cp["b"])
        x = pixel_shuffle(y, B, H, H, cout)                        # (B, 2H, 2H, cout)
        H *= 2
    # final block: ConvTranspose2d(k5,s1,p2) -> Tanh, transposed & lane-tiled
    patches_t = im2col_5x5_t(x).astype(DOT_DTYPE)                  # (200, B*H*W)
    out = final_conv_tanh(params["final_w_t"], patches_t)          # (3, B*H*W)
    img = out.reshape(IMG_SHAPE[0], B, H, H).transpose(1, 0, 2, 3)  # NCHW
    if return_emb:
        return img, emb
    return img


# ---------------------------------- main ------------------------------------
if __name__ == "__main__":
    key = jax.random.PRNGKey(0)
    pkey, zkey = jax.random.split(key)
    params = prepare_params(init_params(pkey))
    z = jax.random.normal(zkey, (2, LATENT_DIM), jnp.float32)
    task_id = 1

    fwd = jax.jit(generator_forward, static_argnames=("return_emb",))
    img, emb = fwd(params, z, task_id, return_emb=True)
    img = jax.block_until_ready(img)

    assert img.shape == (2, IMG_SHAPE[0], IMG_SHAPE[1], IMG_SHAPE[2]), img.shape
    assert emb.shape == (2, LATENT_DIM), emb.shape
    assert bool(jnp.all(jnp.isfinite(img)))
    print("KERNEL_OK")
</pallas_src>

<mosaic_0001>
module attributes {stable_mosaic.version = 11 : i64} {
  func.func @_head_kernel(%arg0: i32, %arg1: memref<2x32xf32, #tpu.memory_space<vmem>>, %arg2: memref<32x32xf32, #tpu.memory_space<vmem>>, %arg3: memref<1x32xf32, #tpu.memory_space<vmem>>, %arg4: memref<32x64xf32, #tpu.memory_space<vmem>>, %arg5: memref<1x64xf32, #tpu.memory_space<vmem>>, %arg6: memref<64x64xf32, #tpu.memory_space<vmem>>, %arg7: memref<1x64xf32, #tpu.memory_space<vmem>>, %arg8: memref<1x64xf32, #tpu.memory_space<vmem>>, %arg9: memref<2x32xf32, #tpu.memory_space<vmem>>, %arg10: memref<2x64xbf16, #tpu.memory_space<vmem>>) attributes {dimension_semantics = [#tpu.dimension_semantics<arbitrary>], iteration_bounds = array<i64: 1>, scalar_prefetch = 0 : i64, scratch_operands = 0 : i64, tpu.core_type = #tpu.core_type<tc>, window_params = [{pipeline_mode = #tpu.pipeline_mode<synchronous>, transform_indices = @transform_0, window_bounds = array<i64: 2, 32>}, {pipeline_mode = #tpu.pipeline_mode<synchronous>, transform_indices = @transform_1, window_bounds = array<i64: 32, 32>}, {pipeline_mode = #tpu.pipeline_mode<synchronous>, transform_indices = @transform_2, window_bounds = array<i64: 1, 32>}, {pipeline_mode = #tpu.pipeline_mode<synchronous>, transform_indices = @transform_3, window_bounds = array<i64: 32, 64>}, {pipeline_mode = #tpu.pipeline_mode<synchronous>, transform_indices = @transform_4, window_bounds = array<i64: 1, 64>}, {pipeline_mode = #tpu.pipeline_mode<synchronous>, transform_indices = @transform_5, window_bounds = array<i64: 64, 64>}, {pipeline_mode = #tpu.pipeline_mode<synchronous>, transform_indices = @transform_6, window_bounds = array<i64: 1, 64>}, {pipeline_mode = #tpu.pipeline_mode<synchronous>, transform_indices = @transform_7, window_bounds = array<i64: 1, 64>}, {pipeline_mode = #tpu.pipeline_mode<synchronous>, transform_indices = @transform_8, window_bounds = array<i64: 2, 32>}, {pipeline_mode = #tpu.pipeline_mode<synchronous>, transform_indices = @transform_9, window_bounds = array<i64: 2, 64>}]} {
    %c0 = arith.constant 0 : index
    %c0_0 = arith.constant 0 : index
    %0 = vector.load %arg1[%c0, %c0_0] : memref<2x32xf32, #tpu.memory_space<vmem>>, vector<2x32xf32>
    %c0_1 = arith.constant 0 : index
    %c0_2 = arith.constant 0 : index
    %1 = vector.load %arg2[%c0_1, %c0_2] : memref<32x32xf32, #tpu.memory_space<vmem>>, vector<32x32xf32>
    %cst = arith.constant dense<0.000000e+00> : vector<2x32xf32>
    %2 = tpu.matmul %0, %1, %cst {dimension_numbers = #tpu.dot_dimension_numbers<[1], [0], [0], [1], [0, 0, 1, 1], [], []>} : vector<2x32xf32>, vector<32x32xf32>, vector<2x32xf32> -> vector<2x32xf32>
    %c0_3 = arith.constant 0 : index
    %c0_4 = arith.constant 0 : index
    %3 = vector.load %arg3[%c0_3, %c0_4] : memref<1x32xf32, #tpu.memory_space<vmem>>, vector<1x32xf32>
    %4 = vector.broadcast %3 : vector<1x32xf32> to vector<2x32xf32>
    %5 = arith.addf %2, %4 : vector<2x32xf32>
    %c0_5 = arith.constant 0 : index
    %c0_6 = arith.constant 0 : index
    %6 = vector.load %arg9[%c0_5, %c0_6] : memref<2x32xf32, #tpu.memory_space<vmem>>, vector<2x32xf32>
    tpu.vector_store %arg9[%c0_5, %c0_6], %5 {strides = array<i32>} : memref<2x32xf32, #tpu.memory_space<vmem>>, vector<2x32xf32>,
    %c0_7 = arith.constant 0 : index
    %c0_8 = arith.constant 0 : index
    %7 = vector.load %arg4[%c0_7, %c0_8] : memref<32x64xf32, #tpu.memory_space<vmem>>, vector<32x64xf32>
    %cst_9 = arith.constant dense<0.000000e+00> : vector<2x64xf32>
    %8 = tpu.matmul %5, %7, %cst_9 {dimension_numbers = #tpu.dot_dimension_numbers<[1], [0], [0], [1], [0, 0, 1, 1], [], []>} : vector<2x32xf32>, vector<32x64xf32>, vector<2x64xf32> -> vector<2x64xf32>
    %c0_10 = arith.constant 0 : index
    %c0_11 = arith.constant 0 : index
    %9 = vector.load %arg5[%c0_10, %c0_11] : memref<1x64xf32, #tpu.memory_space<vmem>>, vector<1x64xf32>
    %10 = vector.broadcast %9 : vector<1x64xf32> to vector<2x64xf32>
    %11 = arith.addf %8, %10 : vector<2x64xf32>
    %cst_12 = arith.constant dense<0.000000e+00> : vector<64xf32>
    %12 = vector.multi_reduction <add>, %11, %cst_12 [0] : vector<2x64xf32> to vector<64xf32>
    %13 = vector.shape_cast %12 : vector<64xf32> to vector<1x64xf32>
    %cst_13 = arith.constant 2.000000e+00 : f32
    %14 = vector.broadcast %cst_13 : f32 to vector<1x64xf32>
    %15 = arith.divf %13, %14 : vector<1x64xf32>
    %c0_14 = arith.constant 0 : index
    %c0_15 = arith.constant 0 : index
    %16 = vector.load %arg6[%c0_14, %c0_15] : memref<64x64xf32, #tpu.memory_space<vmem>>, vector<64x64xf32>
    %cst_16 = arith.constant dense<0.000000e+00> : vector<1x64xf32>
    %17 = tpu.matmul %15, %16, %cst_16 {dimension_numbers = #tpu.dot_dimension_numbers<[1], [0], [0], [1], [0, 0, 1, 1], [], []>} : vector<1x64xf32>, vector<64x64xf32>, vector<1x64xf32> -> vector<1x64xf32>
    %18 = vector.broadcast %17 : vector<1x64xf32> to vector<2x64xf32>
    %19 = arith.subf %11, %18 : vector<2x64xf32>
    %20 = arith.mulf %19, %19 : vector<2x64xf32>
    %cst_17 = arith.constant dense<0.000000e+00> : vector<64xf32>
    %21 = vector.multi_reduction <add>, %20, %cst_17 [0] : vector<2x64xf32> to vector<64xf32>
    %22 = vector.shape_cast %21 : vector<64xf32> to vector<1x64xf32>
    %cst_18 = arith.constant 2.000000e+00 : f32
    %23 = vector.broadcast %cst_18 : f32 to vector<1x64xf32>
    %24 = arith.divf %22, %23 : vector<1x64xf32>
    %c0_19 = arith.constant 0 : index
    %c0_20 = arith.constant 0 : index
    %25 = vector.load %arg6[%c0_19, %c0_20] : memref<64x64xf32, #tpu.memory_space<vmem>>, vector<64x64xf32>
    %cst_21 = arith.constant dense<0.000000e+00> : vector<1x64xf32>
    %26 = tpu.matmul %24, %25, %cst_21 {dimension_numbers = #tpu.dot_dimension_numbers<[1], [0], [0], [1], [0, 0, 1, 1], [], []>} : vector<1x64xf32>, vector<64x64xf32>, vector<1x64xf32> -> vector<1x64xf32>
    %cst_22 = arith.constant 9.99999974E-6 : f32
    %27 = vector.broadcast %cst_22 : f32 to vector<1x64xf32>
    %28 = arith.addf %26, %27 : vector<1x64xf32>
    %29 = math.rsqrt %28 : vector<1x64xf32>
    %30 = vector.broadcast %29 : vector<1x64xf32> to vector<2x64xf32>
    %31 = arith.mulf %19, %30 : vector<2x64xf32>
    %c0_23 = arith.constant 0 : index
    %c0_24 = arith.constant 0 : index
    %32 = vector.load %arg7[%c0_23, %c0_24] : memref<1x64xf32, #tpu.memory_space<vmem>>, vector<1x64xf32>
    %33 = vector.broadcast %32 : vector<1x64xf32> to vector<2x64xf32>
    %34 = arith.mulf %31, %33 : vector<2x64xf32>
    %c0_25 = arith.constant 0 : index
    %c0_26 = arith.constant 0 : index
    %35 = vector.load %arg8[%c0_25, %c0_26] : memref<1x64xf32, #tpu.memory_space<vmem>>, vector<1x64xf32>
    %36 = vector.broadcast %35 : vector<1x64xf32> to vector<2x64xf32>
    %37 = arith.addf %34, %36 : vector<2x64xf32>
    %38 = arith.truncf %37 : vector<2x64xf32> to vector<2x64xbf16>
    %c0_27 = arith.constant 0 : index
    %c0_28 = arith.constant 0 : index
    %39 = vector.load %arg10[%c0_27, %c0_28] : memref<2x64xbf16, #tpu.memory_space<vmem>>, vector<2x64xbf16>
    tpu.vector_store %arg10[%c0_27, %c0_28], %38 {strides = array<i32>} : memref<2x64xbf16, #tpu.memory_space<vmem>>, vector<2x64xbf16>,
    return
  }
  func.func @transform_0(%arg0: i32) -> (i32, i32) {
    %c0_i32 = arith.constant 0 : i32
    %c0_i32_0 = arith.constant 0 : i32
    %c0_i32_1 = arith.constant 0 : i32
    return %c0_i32, %c0_i32_0 : i32, i32
  }
  func.func @transform_1(%arg0: i32) -> (i32, i32) {
    %c0_i32 = arith.constant 0 : i32
    %c0_i32_0 = arith.constant 0 : i32
    %c0_i32_1 = arith.constant 0 : i32
    return %c0_i32, %c0_i32_0 : i32, i32
  }
  func.func @transform_2(%arg0: i32) -> (i32, i32) {
    %c0_i32 = arith.constant 0 : i32
    %c0_i32_0 = arith.constant 0 : i32
    %c0_i32_1 = arith.constant 0 : i32
    return %c0_i32, %c0_i32_0 : i32, i32
  }
  func.func @transform_3(%arg0: i32) -> (i32, i32) {
    %c0_i32 = arith.constant 0 : i32
    %c0_i32_0 = arith.constant 0 : i32
    %c0_i32_1 = arith.constant 0 : i32
    return %c0_i32, %c0_i32_0 : i32, i32
  }
  func.func @transform_4(%arg0: i32) -> (i32, i32) {
    %c0_i32 = arith.constant 0 : i32
    %c0_i32_0 = arith.constant 0 : i32
    %c0_i32_1 = arith.constant 0 : i32
    return %c0_i32, %c0_i32_0 : i32, i32
  }
  func.func @transform_5(%arg0: i32) -> (i32, i32) {
    %c0_i32 = arith.constant 0 : i32
    %c0_i32_0 = arith.constant 0 : i32
    %c0_i32_1 = arith.constant 0 : i32
    return %c0_i32, %c0_i32_0 : i32, i32
  }
  func.func @transform_6(%arg0: i32) -> (i32, i32) {
    %c0_i32 = arith.constant 0 : i32
    %c0_i32_0 = arith.constant 0 : i32
    %c0_i32_1 = arith.constant 0 : i32
    return %c0_i32, %c0_i32_0 : i32, i32
  }
  func.func @transform_7(%arg0: i32) -> (i32, i32) {
    %c0_i32 = arith.constant 0 : i32
    %c0_i32_0 = arith.constant 0 : i32
    %c0_i32_1 = arith.constant 0 : i32
    return %c0_i32, %c0_i32_0 : i32, i32
  }
  func.func @transform_8(%arg0: i32) -> (i32, i32) {
    %c0_i32 = arith.constant 0 : i32
    %c0_i32_0 = arith.constant 0 : i32
    %c0_i32_1 = arith.constant 0 : i32
    return %c0_i32, %c0_i32_0 : i32, i32
  }
  func.func @transform_9(%arg0: i32) -> (i32, i32) {
    %c0_i32 = arith.constant 0 : i32
    %c0_i32_0 = arith.constant 0 : i32
    %c0_i32_1 = arith.constant 0 : i32
    return %c0_i32, %c0_i32_0 : i32, i32
  }
}

module attributes {stable_mosaic.version = 11 : i64} {
  func.func @_convbn_kernel(%arg0: i32, %arg1: memref<8x144xbf16, #tpu.memory_space<vmem>>, %arg2: memref<144x256xbf16, #tpu.memory_space<vmem>>, %arg3: memref<256x256xf32, #tpu.memory_space<vmem>>, %arg4: memref<1x256xf32, #tpu.memory_space<vmem>>, %arg5: memref<1x256xf32, #tpu.memory_space<vmem>>, %arg6: memref<8x256xbf16, #tpu.memory_space<vmem>>) attributes {dimension_semantics = [#tpu.dimension_semantics<arbitrary>], iteration_bounds = array<i64: 1>, scalar_prefetch = 0 : i64, scratch_operands = 0 : i64, tpu.core_type = #tpu.core_type<tc>, window_params = [{pipeline_mode = #tpu.pipeline_mode<synchronous>, transform_indices = @transform_0, window_bounds = array<i64: 8, 144>}, {pipeline_mode = #tpu.pipeline_mode<synchronous>, transform_indices = @transform_1, window_bounds = array<i64: 144, 256>}, {pipeline_mode = #tpu.pipeline_mode<synchronous>, transform_indices = @transform_2, window_bounds = array<i64: 256, 256>}, {pipeline_mode = #tpu.pipeline_mode<synchronous>, transform_indices = @transform_3, window_bounds = array<i64: 1, 256>}, {pipeline_mode = #tpu.pipeline_mode<synchronous>, transform_indices = @transform_4, window_bounds = array<i64: 1, 256>}, {pipeline_mode = #tpu.pipeline_mode<synchronous>, transform_indices = @transform_5, window_bounds = array<i64: 8, 256>}]} {
    %c0 = arith.constant 0 : index
    %c0_0 = arith.constant 0 : index
    %0 = vector.load %arg1[%c0, %c0_0] : memref<8x144xbf16, #tpu.memory_space<vmem>>, vector<8x144xbf16>
    %c0_1 = arith.constant 0 : index
    %c0_2 = arith.constant 0 : index
    %1 = vector.load %arg2[%c0_1, %c0_2] : memref<144x256xbf16, #tpu.memory_space<vmem>>, vector<144x256xbf16>
    %cst = arith.constant dense<0.000000e+00> : vector<8x256xf32>
    %2 = tpu.matmul %0, %1, %cst {dimension_numbers = #tpu.dot_dimension_numbers<[1], [0], [0], [1], [0, 0, 1, 1], [], []>} : vector<8x144xbf16>, vector<144x256xbf16>, vector<8x256xf32> -> vector<8x256xf32>
    %cst_3 = arith.constant dense<0.000000e+00> : vector<256xf32>
    %3 = vector.multi_reduction <add>, %2, %cst_3 [0] : vector<8x256xf32> to vector<256xf32>
    %4 = vector.shape_cast %3 : vector<256xf32> to vector<1x256xf32>
    %cst_4 = arith.constant 8.000000e+00 : f32
    %5 = vector.broadcast %cst_4 : f32 to vector<1x256xf32>
    %6 = arith.divf %4, %5 : vector<1x256xf32>
    %c0_5 = arith.constant 0 : index
    %c0_6 = arith.constant 0 : index
    %7 = vector.load %arg3[%c0_5, %c0_6] : memref<256x256xf32, #tpu.memory_space<vmem>>, vector<256x256xf32>
    %cst_7 = arith.constant dense<0.000000e+00> : vector<1x256xf32>
    %8 = tpu.matmul %6, %7, %cst_7 {dimension_numbers = #tpu.dot_dimension_numbers<[1], [0], [0], [1], [0, 0, 1, 1], [], []>} : vector<1x256xf32>, vector<256x256xf32>, vector<1x256xf32> -> vector<1x256xf32>
    %9 = vector.broadcast %8 : vector<1x256xf32> to vector<8x256xf32>
    %10 = arith.subf %2, %9 : vector<8x256xf32>
    %11 = arith.mulf %10, %10 : vector<8x256xf32>
    %cst_8 = arith.constant dense<0.000000e+00> : vector<256xf32>
    %12 = vector.multi_reduction <add>, %11, %cst_8 [0] : vector<8x256xf32> to vector<256xf32>
    %13 = vector.shape_cast %12 : vector<256xf32> to vector<1x256xf32>
    %cst_9 = arith.constant 8.000000e+00 : f32
    %14 = vector.broadcast %cst_9 : f32 to vector<1x256xf32>
    %15 = arith.divf %13, %14 : vector<1x256xf32>
    %c0_10 = arith.constant 0 : index
    %c0_11 = arith.constant 0 : index
    %16 = vector.load %arg3[%c0_10, %c0_11] : memref<256x256xf32, #tpu.memory_space<vmem>>, vector<256x256xf32>
    %cst_12 = arith.constant dense<0.000000e+00> : vector<1x256xf32>
    %17 = tpu.matmul %15, %16, %cst_12 {dimension_numbers = #tpu.dot_dimension_numbers<[1], [0], [0], [1], [0, 0, 1, 1], [], []>} : vector<1x256xf32>, vector<256x256xf32>, vector<1x256xf32> -> vector<1x256xf32>
    %cst_13 = arith.constant 9.99999974E-6 : f32
    %18 = vector.broadcast %cst_13 : f32 to vector<1x256xf32>
    %19 = arith.addf %17, %18 : vector<1x256xf32>
    %20 = math.rsqrt %19 : vector<1x256xf32>
    %21 = vector.broadcast %20 : vector<1x256xf32> to vector<8x256xf32>
    %22 = arith.mulf %10, %21 : vector<8x256xf32>
    %c0_14 = arith.constant 0 : index
    %c0_15 = arith.constant 0 : index
    %23 = vector.load %arg4[%c0_14, %c0_15] : memref<1x256xf32, #tpu.memory_space<vmem>>, vector<1x256xf32>
    %24 = vector.broadcast %23 : vector<1x256xf32> to vector<8x256xf32>
    %25 = arith.mulf %22, %24 : vector<8x256xf32>
    %c0_16 = arith.constant 0 : index
    %c0_17 = arith.constant 0 : index
    %26 = vector.load %arg5[%c0_16, %c0_17] : memref<1x256xf32, #tpu.memory_space<vmem>>, vector<1x256xf32>
    %27 = vector.broadcast %26 : vector<1x256xf32> to vector<8x256xf32>
    %28 = arith.addf %25, %27 : vector<8x256xf32>
    %cst_18 = arith.constant 0.000000e+00 : f32
    %29 = vector.broadcast %cst_18 : f32 to vector<8x256xf32>
    %30 = arith.maximumf %28, %29 : vector<8x256xf32>
    %31 = arith.truncf %30 : vector<8x256xf32> to vector<8x256xbf16>
    %c0_19 = arith.constant 0 : index
    %c0_20 = arith.constant 0 : index
    %32 = vector.load %arg6[%c0_19, %c0_20] : memref<8x256xbf16, #tpu.memory_space<vmem>>, vector<8x256xbf16>
    tpu.vector_store %arg6[%c0_19, %c0_20], %31 {strides = array<i32>} : memref<8x256xbf16, #tpu.memory_space<vmem>>, vector<8x256xbf16>,
    return
  }
  func.func @transform_0(%arg0: i32) -> (i32, i32) {
    %c0_i32 = arith.constant 0 : i32
    %c0_i32_0 = arith.constant 0 : i32
    %c0_i32_1 = arith.constant 0 : i32
    return %c0_i32, %c0_i32_0 : i32, i32
  }
  func.func @transform_1(%arg0: i32) -> (i32, i32) {
    %c0_i32 = arith.constant 0 : i32
    %c0_i32_0 = arith.constant 0 : i32
    %c0_i32_1 = arith.constant 0 : i32
    return %c0_i32, %c0_i32_0 : i32, i32
  }
  func.func @transform_2(%arg0: i32) -> (i32, i32) {
    %c0_i32 = arith.constant 0 : i32
    %c0_i32_0 = arith.constant 0 : i32
    %c0_i32_1 = arith.constant 0 : i32
    return %c0_i32, %c0_i32_0 : i32, i32
  }
  func.func @transform_3(%arg0: i32) -> (i32, i32) {
    %c0_i32 = arith.constant 0 : i32
    %c0_i32_0 = arith.constant 0 : i32
    %c0_i32_1 = arith.constant 0 : i32
    return %c0_i32, %c0_i32_0 : i32, i32
  }
  func.func @transform_4(%arg0: i32) -> (i32, i32) {
    %c0_i32 = arith.constant 0 : i32
    %c0_i32_0 = arith.constant 0 : i32
    %c0_i32_1 = arith.constant 0 : i32
    return %c0_i32, %c0_i32_0 : i32, i32
  }
  func.func @transform_5(%arg0: i32) -> (i32, i32) {
    %c0_i32 = arith.constant 0 : i32
    %c0_i32_0 = arith.constant 0 : i32
    %c0_i32_1 = arith.constant 0 : i32
    return %c0_i32, %c0_i32_0 : i32, i32
  }
}

module attributes {stable_mosaic.version = 11 : i64} {
  func.func @_convbn_kernel(%arg0: i32, %arg1: memref<32x576xbf16, #tpu.memory_space<vmem>>, %arg2: memref<576x128xbf16, #tpu.memory_space<vmem>>, %arg3: memref<128x128xf32, #tpu.memory_space<vmem>>, %arg4: memref<1x128xf32, #tpu.memory_space<vmem>>, %arg5: memref<1x128xf32, #tpu.memory_space<vmem>>, %arg6: memref<32x128xbf16, #tpu.memory_space<vmem>>) attributes {dimension_semantics = [#tpu.dimension_semantics<arbitrary>], iteration_bounds = array<i64: 1>, scalar_prefetch = 0 : i64, scratch_operands = 0 : i64, tpu.core_type = #tpu.core_type<tc>, window_params = [{pipeline_mode = #tpu.pipeline_mode<synchronous>, transform_indices = @transform_0, window_bounds = array<i64: 32, 576>}, {pipeline_mode = #tpu.pipeline_mode<synchronous>, transform_indices = @transform_1, window_bounds = array<i64: 576, 128>}, {pipeline_mode = #tpu.pipeline_mode<synchronous>, transform_indices = @transform_2, window_bounds = array<i64: 128, 128>}, {pipeline_mode = #tpu.pipeline_mode<synchronous>, transform_indices = @transform_3, window_bounds = array<i64: 1, 128>}, {pipeline_mode = #tpu.pipeline_mode<synchronous>, transform_indices = @transform_4, window_bounds = array<i64: 1, 128>}, {pipeline_mode = #tpu.pipeline_mode<synchronous>, transform_indices = @transform_5, window_bounds = array<i64: 32, 128>}]} {
    %c0 = arith.constant 0 : index
    %c0_0 = arith.constant 0 : index
    %0 = vector.load %arg1[%c0, %c0_0] : memref<32x576xbf16, #tpu.memory_space<vmem>>, vector<32x576xbf16>
    %c0_1 = arith.constant 0 : index
    %c0_2 = arith.constant 0 : index
    %1 = vector.load %arg2[%c0_1, %c0_2] : memref<576x128xbf16, #tpu.memory_space<vmem>>, vector<576x128xbf16>
    %cst = arith.constant dense<0.000000e+00> : vector<32x128xf32>
    %2 = tpu.matmul %0, %1, %cst {dimension_numbers = #tpu.dot_dimension_numbers<[1], [0], [0], [1], [0, 0, 1, 1], [], []>} : vector<32x576xbf16>, vector<576x128xbf16>, vector<32x128xf32> -> vector<32x128xf32>
    %cst_3 = arith.constant dense<0.000000e+00> : vector<128xf32>
    %3 = vector.multi_reduction <add>, %2, %cst_3 [0] : vector<32x128xf32> to vector<128xf32>
    %4 = vector.shape_cast %3 : vector<128xf32> to vector<1x128xf32>
    %cst_4 = arith.constant 3.200000e+01 : f32
    %5 = vector.broadcast %cst_4 : f32 to vector<1x128xf32>
    %6 = arith.divf %4, %5 : vector<1x128xf32>
    %c0_5 = arith.constant 0 : index
    %c0_6 = arith.constant 0 : index
    %7 = vector.load %arg3[%c0_5, %c0_6] : memref<128x128xf32, #tpu.memory_space<vmem>>, vector<128x128xf32>
    %cst_7 = arith.constant dense<0.000000e+00> : vector<1x128xf32>
    %8 = tpu.matmul %6, %7, %cst_7 {dimension_numbers = #tpu.dot_dimension_numbers<[1], [0], [0], [1], [0, 0, 1, 1], [], []>} : vector<1x128xf32>, vector<128x128xf32>, vector<1x128xf32> -> vector<1x128xf32>
    %9 = vector.broadcast %8 : vector<1x128xf32> to vector<32x128xf32>
    %10 = arith.subf %2, %9 : vector<32x128xf32>
    %11 = arith.mulf %10, %10 : vector<32x128xf32>
    %cst_8 = arith.constant dense<0.000000e+00> : vector<128xf32>
    %12 = vector.multi_reduction <add>, %11, %cst_8 [0] : vector<32x128xf32> to vector<128xf32>
    %13 = vector.shape_cast %12 : vector<128xf32> to vector<1x128xf32>
    %cst_9 = arith.constant 3.200000e+01 : f32
    %14 = vector.broadcast %cst_9 : f32 to vector<1x128xf32>
    %15 = arith.divf %13, %14 : vector<1x128xf32>
    %c0_10 = arith.constant 0 : index
    %c0_11 = arith.constant 0 : index
    %16 = vector.load %arg3[%c0_10, %c0_11] : memref<128x128xf32, #tpu.memory_space<vmem>>, vector<128x128xf32>
    %cst_12 = arith.constant dense<0.000000e+00> : vector<1x128xf32>
    %17 = tpu.matmul %15, %16, %cst_12 {dimension_numbers = #tpu.dot_dimension_numbers<[1], [0], [0], [1], [0, 0, 1, 1], [], []>} : vector<1x128xf32>, vector<128x128xf32>, vector<1x128xf32> -> vector<1x128xf32>
    %cst_13 = arith.constant 9.99999974E-6 : f32
    %18 = vector.broadcast %cst_13 : f32 to vector<1x128xf32>
    %19 = arith.addf %17, %18 : vector<1x128xf32>
    %20 = math.rsqrt %19 : vector<1x128xf32>
    %21 = vector.broadcast %20 : vector<1x128xf32> to vector<32x128xf32>
    %22 = arith.mulf %10, %21 : vector<32x128xf32>
    %c0_14 = arith.constant 0 : index
    %c0_15 = arith.constant 0 : index
    %23 = vector.load %arg4[%c0_14, %c0_15] : memref<1x128xf32, #tpu.memory_space<vmem>>, vector<1x128xf32>
    %24 = vector.broadcast %23 : vector<1x128xf32> to vector<32x128xf32>
    %25 = arith.mulf %22, %24 : vector<32x128xf32>
    %c0_16 = arith.constant 0 : index
    %c0_17 = arith.constant 0 : index
    %26 = vector.load %arg5[%c0_16, %c0_17] : memref<1x128xf32, #tpu.memory_space<vmem>>, vector<1x128xf32>
    %27 = vector.broadcast %26 : vector<1x128xf32> to vector<32x128xf32>
    %28 = arith.addf %25, %27 : vector<32x128xf32>
    %cst_18 = arith.constant 0.000000e+00 : f32
    %29 = vector.broadcast %cst_18 : f32 to vector<32x128xf32>
    %30 = arith.maximumf %28, %29 : vector<32x128xf32>
    %31 = arith.truncf %30 : vector<32x128xf32> to vector<32x128xbf16>
    %c0_19 = arith.constant 0 : index
    %c0_20 = arith.constant 0 : index
    %32 = vector.load %arg6[%c0_19, %c0_20] : memref<32x128xbf16, #tpu.memory_space<vmem>>, vector<32x128xbf16>
    tpu.vector_store %arg6[%c0_19, %c0_20], %31 {strides = array<i32>} : memref<32x128xbf16, #tpu.memory_space<vmem>>, vector<32x128xbf16>,
    return
  }
  func.func @transform_0(%arg0: i32) -> (i32, i32) {
    %c0_i32 = arith.constant 0 : i32
    %c0_i32_0 = arith.constant 0 : i32
    %c0_i32_1 = arith.constant 0 : i32
    return %c0_i32, %c0_i32_0 : i32, i32
  }
  func.func @transform_1(%arg0: i32) -> (i32, i32) {
    %c0_i32 = arith.constant 0 : i32
    %c0_i32_0 = arith.constant 0 : i32
    %c0_i32_1 = arith.constant 0 : i32
    return %c0_i32, %c0_i32_0 : i32, i32
  }
  func.func @transform_2(%arg0: i32) -> (i32, i32) {
    %c0_i32 = arith.constant 0 : i32
    %c0_i32_0 = arith.constant 0 : i32
    %c0_i32_1 = arith.constant 0 : i32
    return %c0_i32, %c0_i32_0 : i32, i32
  }
  func.func @transform_3(%arg0: i32) -> (i32, i32) {
    %c0_i32 = arith.constant 0 : i32
    %c0_i32_0 = arith.constant 0 : i32
    %c0_i32_1 = arith.constant 0 : i32
    return %c0_i32, %c0_i32_0 : i32, i32
  }
  func.func @transform_4(%arg0: i32) -> (i32, i32) {
    %c0_i32 = arith.constant 0 : i32
    %c0_i32_0 = arith.constant 0 : i32
    %c0_i32_1 = arith.constant 0 : i32
    return %c0_i32, %c0_i32_0 : i32, i32
  }
  func.func @transform_5(%arg0: i32) -> (i32, i32) {
    %c0_i32 = arith.constant 0 : i32
    %c0_i32_0 = arith.constant 0 : i32
    %c0_i32_1 = arith.constant 0 : i32
    return %c0_i32, %c0_i32_0 : i32, i32
  }
}

module attributes {stable_mosaic.version = 11 : i64} {
  func.func @_convbn_kernel(%arg0: i32, %arg1: memref<128x288xbf16, #tpu.memory_space<vmem>>, %arg2: memref<288x64xbf16, #tpu.memory_space<vmem>>, %arg3: memref<64x64xf32, #tpu.memory_space<vmem>>, %arg4: memref<1x64xf32, #tpu.memory_space<vmem>>, %arg5: memref<1x64xf32, #tpu.memory_space<vmem>>, %arg6: memref<128x64xbf16, #tpu.memory_space<vmem>>) attributes {dimension_semantics = [#tpu.dimension_semantics<arbitrary>], iteration_bounds = array<i64: 1>, scalar_prefetch = 0 : i64, scratch_operands = 0 : i64, tpu.core_type = #tpu.core_type<tc>, window_params = [{pipeline_mode = #tpu.pipeline_mode<synchronous>, transform_indices = @transform_0, window_bounds = array<i64: 128, 288>}, {pipeline_mode = #tpu.pipeline_mode<synchronous>, transform_indices = @transform_1, window_bounds = array<i64: 288, 64>}, {pipeline_mode = #tpu.pipeline_mode<synchronous>, transform_indices = @transform_2, window_bounds = array<i64: 64, 64>}, {pipeline_mode = #tpu.pipeline_mode<synchronous>, transform_indices = @transform_3, window_bounds = array<i64: 1, 64>}, {pipeline_mode = #tpu.pipeline_mode<synchronous>, transform_indices = @transform_4, window_bounds = array<i64: 1, 64>}, {pipeline_mode = #tpu.pipeline_mode<synchronous>, transform_indices = @transform_5, window_bounds = array<i64: 128, 64>}]} {
    %c0 = arith.constant 0 : index
    %c0_0 = arith.constant 0 : index
    %0 = vector.load %arg1[%c0, %c0_0] : memref<128x288xbf16, #tpu.memory_space<vmem>>, vector<128x288xbf16>
    %c0_1 = arith.constant 0 : index
    %c0_2 = arith.constant 0 : index
    %1 = vector.load %arg2[%c0_1, %c0_2] : memref<288x64xbf16, #tpu.memory_space<vmem>>, vector<288x64xbf16>
    %cst = arith.constant dense<0.000000e+00> : vector<128x64xf32>
    %2 = tpu.matmul %0, %1, %cst {dimension_numbers = #tpu.dot_dimension_numbers<[1], [0], [0], [1], [0, 0, 1, 1], [], []>} : vector<128x288xbf16>, vector<288x64xbf16>, vector<128x64xf32> -> vector<128x64xf32>
    %cst_3 = arith.constant dense<0.000000e+00> : vector<64xf32>
    %3 = vector.multi_reduction <add>, %2, %cst_3 [0] : vector<128x64xf32> to vector<64xf32>
    %4 = vector.shape_cast %3 : vector<64xf32> to vector<1x64xf32>
    %cst_4 = arith.constant 1.280000e+02 : f32
    %5 = vector.broadcast %cst_4 : f32 to vector<1x64xf32>
    %6 = arith.divf %4, %5 : vector<1x64xf32>
    %c0_5 = arith.constant 0 : index
    %c0_6 = arith.constant 0 : index
    %7 = vector.load %arg3[%c0_5, %c0_6] : memref<64x64xf32, #tpu.memory_space<vmem>>, vector<64x64xf32>
    %cst_7 = arith.constant dense<0.000000e+00> : vector<1x64xf32>
    %8 = tpu.matmul %6, %7, %cst_7 {dimension_numbers = #tpu.dot_dimension_numbers<[1], [0], [0], [1], [0, 0, 1, 1], [], []>} : vector<1x64xf32>, vector<64x64xf32>, vector<1x64xf32> -> vector<1x64xf32>
    %9 = vector.broadcast %8 : vector<1x64xf32> to vector<128x64xf32>
    %10 = arith.subf %2, %9 : vector<128x64xf32>
    %11 = arith.mulf %10, %10 : vector<128x64xf32>
    %cst_8 = arith.constant dense<0.000000e+00> : vector<64xf32>
    %12 = vector.multi_reduction <add>, %11, %cst_8 [0] : vector<128x64xf32> to vector<64xf32>
    %13 = vector.shape_cast %12 : vector<64xf32> to vector<1x64xf32>
    %cst_9 = arith.constant 1.280000e+02 : f32
    %14 = vector.broadcast %cst_9 : f32 to vector<1x64xf32>
    %15 = arith.divf %13, %14 : vector<1x64xf32>
    %c0_10 = arith.constant 0 : index
    %c0_11 = arith.constant 0 : index
    %16 = vector.load %arg3[%c0_10, %c0_11] : memref<64x64xf32, #tpu.memory_space<vmem>>, vector<64x64xf32>
    %cst_12 = arith.constant dense<0.000000e+00> : vector<1x64xf32>
    %17 = tpu.matmul %15, %16, %cst_12 {dimension_numbers = #tpu.dot_dimension_numbers<[1], [0], [0], [1], [0, 0, 1, 1], [], []>} : vector<1x64xf32>, vector<64x64xf32>, vector<1x64xf32> -> vector<1x64xf32>
    %cst_13 = arith.constant 9.99999974E-6 : f32
    %18 = vector.broadcast %cst_13 : f32 to vector<1x64xf32>
    %19 = arith.addf %17, %18 : vector<1x64xf32>
    %20 = math.rsqrt %19 : vector<1x64xf32>
    %21 = vector.broadcast %20 : vector<1x64xf32> to vector<128x64xf32>
    %22 = arith.mulf %10, %21 : vector<128x64xf32>
    %c0_14 = arith.constant 0 : index
    %c0_15 = arith.constant 0 : index
    %23 = vector.load %arg4[%c0_14, %c0_15] : memref<1x64xf32, #tpu.memory_space<vmem>>, vector<1x64xf32>
    %24 = vector.broadcast %23 : vector<1x64xf32> to vector<128x64xf32>
    %25 = arith.mulf %22, %24 : vector<128x64xf32>
    %c0_16 = arith.constant 0 : index
    %c0_17 = arith.constant 0 : index
    %26 = vector.load %arg5[%c0_16, %c0_17] : memref<1x64xf32, #tpu.memory_space<vmem>>, vector<1x64xf32>
    %27 = vector.broadcast %26 : vector<1x64xf32> to vector<128x64xf32>
    %28 = arith.addf %25, %27 : vector<128x64xf32>
    %cst_18 = arith.constant 0.000000e+00 : f32
    %29 = vector.broadcast %cst_18 : f32 to vector<128x64xf32>
    %30 = arith.maximumf %28, %29 : vector<128x64xf32>
    %31 = arith.truncf %30 : vector<128x64xf32> to vector<128x64xbf16>
    %c0_19 = arith.constant 0 : index
    %c0_20 = arith.constant 0 : index
    %32 = vector.load %arg6[%c0_19, %c0_20] : memref<128x64xbf16, #tpu.memory_space<vmem>>, vector<128x64xbf16>
    tpu.vector_store %arg6[%c0_19, %c0_20], %31 {strides = array<i32>} : memref<128x64xbf16, #tpu.memory_space<vmem>>, vector<128x64xbf16>,
    return
  }
  func.func @transform_0(%arg0: i32) -> (i32, i32) {
    %c0_i32 = arith.constant 0 : i32
    %c0_i32_0 = arith.constant 0 : i32
    %c0_i32_1 = arith.constant 0 : i32
    return %c0_i32, %c0_i32_0 : i32, i32
  }
  func.func @transform_1(%arg0: i32) -> (i32, i32) {
    %c0_i32 = arith.constant 0 : i32
    %c0_i32_0 = arith.constant 0 : i32
    %c0_i32_1 = arith.constant 0 : i32
    return %c0_i32, %c0_i32_0 : i32, i32
  }
  func.func @transform_2(%arg0: i32) -> (i32, i32) {
    %c0_i32 = arith.constant 0 : i32
    %c0_i32_0 = arith.constant 0 : i32
    %c0_i32_1 = arith.constant 0 : i32
    return %c0_i32, %c0_i32_0 : i32, i32
  }
  func.func @transform_3(%arg0: i32) -> (i32, i32) {
    %c0_i32 = arith.constant 0 : i32
    %c0_i32_0 = arith.constant 0 : i32
    %c0_i32_1 = arith.constant 0 : i32
    return %c0_i32, %c0_i32_0 : i32, i32
  }
  func.func @transform_4(%arg0: i32) -> (i32, i32) {
    %c0_i32 = arith.constant 0 : i32
    %c0_i32_0 = arith.constant 0 : i32
    %c0_i32_1 = arith.constant 0 : i32
    return %c0_i32, %c0_i32_0 : i32, i32
  }
  func.func @transform_5(%arg0: i32) -> (i32, i32) {
    %c0_i32 = arith.constant 0 : i32
    %c0_i32_0 = arith.constant 0 : i32
    %c0_i32_1 = arith.constant 0 : i32
    return %c0_i32, %c0_i32_0 : i32, i32
  }
}

module attributes {stable_mosaic.version = 11 : i64} {
  func.func @_convbn_kernel(%arg0: i32, %arg1: memref<512x144xbf16, #tpu.memory_space<vmem>>, %arg2: memref<144x32xbf16, #tpu.memory_space<vmem>>, %arg3: memref<32x32xf32, #tpu.memory_space<vmem>>, %arg4: memref<1x32xf32, #tpu.memory_space<vmem>>, %arg5: memref<1x32xf32, #tpu.memory_space<vmem>>, %arg6: memref<512x32xbf16, #tpu.memory_space<vmem>>) attributes {dimension_semantics = [#tpu.dimension_semantics<arbitrary>], iteration_bounds = array<i64: 1>, scalar_prefetch = 0 : i64, scratch_operands = 0 : i64, tpu.core_type = #tpu.core_type<tc>, window_params = [{pipeline_mode = #tpu.pipeline_mode<synchronous>, transform_indices = @transform_0, window_bounds = array<i64: 512, 144>}, {pipeline_mode = #tpu.pipeline_mode<synchronous>, transform_indices = @transform_1, window_bounds = array<i64: 144, 32>}, {pipeline_mode = #tpu.pipeline_mode<synchronous>, transform_indices = @transform_2, window_bounds = array<i64: 32, 32>}, {pipeline_mode = #tpu.pipeline_mode<synchronous>, transform_indices = @transform_3, window_bounds = array<i64: 1, 32>}, {pipeline_mode = #tpu.pipeline_mode<synchronous>, transform_indices = @transform_4, window_bounds = array<i64: 1, 32>}, {pipeline_mode = #tpu.pipeline_mode<synchronous>, transform_indices = @transform_5, window_bounds = array<i64: 512, 32>}]} {
    %c0 = arith.constant 0 : index
    %c0_0 = arith.constant 0 : index
    %0 = vector.load %arg1[%c0, %c0_0] : memref<512x144xbf16, #tpu.memory_space<vmem>>, vector<512x144xbf16>
    %c0_1 = arith.constant 0 : index
    %c0_2 = arith.constant 0 : index
    %1 = vector.load %arg2[%c0_1, %c0_2] : memref<144x32xbf16, #tpu.memory_space<vmem>>, vector<144x32xbf16>
    %cst = arith.constant dense<0.000000e+00> : vector<512x32xf32>
    %2 = tpu.matmul %0, %1, %cst {dimension_numbers = #tpu.dot_dimension_numbers<[1], [0], [0], [1], [0, 0, 1, 1], [], []>} : vector<512x144xbf16>, vector<144x32xbf16>, vector<512x32xf32> -> vector<512x32xf32>
    %cst_3 = arith.constant dense<0.000000e+00> : vector<32xf32>
    %3 = vector.multi_reduction <add>, %2, %cst_3 [0] : vector<512x32xf32> to vector<32xf32>
    %4 = vector.shape_cast %3 : vector<32xf32> to vector<1x32xf32>
    %cst_4 = arith.constant 5.120000e+02 : f32
    %5 = vector.broadcast %cst_4 : f32 to vector<1x32xf32>
    %6 = arith.divf %4, %5 : vector<1x32xf32>
    %c0_5 = arith.constant 0 : index
    %c0_6 = arith.constant 0 : index
    %7 = vector.load %arg3[%c0_5, %c0_6] : memref<32x32xf32, #tpu.memory_space<vmem>>, vector<32x32xf32>
    %cst_7 = arith.constant dense<0.000000e+00> : vector<1x32xf32>
    %8 = tpu.matmul %6, %7, %cst_7 {dimension_numbers = #tpu.dot_dimension_numbers<[1], [0], [0], [1], [0, 0, 1, 1], [], []>} : vector<1x32xf32>, vector<32x32xf32>, vector<1x32xf32> -> vector<1x32xf32>
    %9 = vector.broadcast %8 : vector<1x32xf32> to vector<512x32xf32>
    %10 = arith.subf %2, %9 : vector<512x32xf32>
    %11 = arith.mulf %10, %10 : vector<512x32xf32>
    %cst_8 = arith.constant dense<0.000000e+00> : vector<32xf32>
    %12 = vector.multi_reduction <add>, %11, %cst_8 [0] : vector<512x32xf32> to vector<32xf32>
    %13 = vector.shape_cast %12 : vector<32xf32> to vector<1x32xf32>
    %cst_9 = arith.constant 5.120000e+02 : f32
    %14 = vector.broadcast %cst_9 : f32 to vector<1x32xf32>
    %15 = arith.divf %13, %14 : vector<1x32xf32>
    %c0_10 = arith.constant 0 : index
    %c0_11 = arith.constant 0 : index
    %16 = vector.load %arg3[%c0_10, %c0_11] : memref<32x32xf32, #tpu.memory_space<vmem>>, vector<32x32xf32>
    %cst_12 = arith.constant dense<0.000000e+00> : vector<1x32xf32>
    %17 = tpu.matmul %15, %16, %cst_12 {dimension_numbers = #tpu.dot_dimension_numbers<[1], [0], [0], [1], [0, 0, 1, 1], [], []>} : vector<1x32xf32>, vector<32x32xf32>, vector<1x32xf32> -> vector<1x32xf32>
    %cst_13 = arith.constant 9.99999974E-6 : f32
    %18 = vector.broadcast %cst_13 : f32 to vector<1x32xf32>
    %19 = arith.addf %17, %18 : vector<1x32xf32>
    %20 = math.rsqrt %19 : vector<1x32xf32>
    %21 = vector.broadcast %20 : vector<1x32xf32> to vector<512x32xf32>
    %22 = arith.mulf %10, %21 : vector<512x32xf32>
    %c0_14 = arith.constant 0 : index
    %c0_15 = arith.constant 0 : index
    %23 = vector.load %arg4[%c0_14, %c0_15] : memref<1x32xf32, #tpu.memory_space<vmem>>, vector<1x32xf32>
    %24 = vector.broadcast %23 : vector<1x32xf32> to vector<512x32xf32>
    %25 = arith.mulf %22, %24 : vector<512x32xf32>
    %c0_16 = arith.constant 0 : index
    %c0_17 = arith.constant 0 : index
    %26 = vector.load %arg5[%c0_16, %c0_17] : memref<1x32xf32, #tpu.memory_space<vmem>>, vector<1x32xf32>
    %27 = vector.broadcast %26 : vector<1x32xf32> to vector<512x32xf32>
    %28 = arith.addf %25, %27 : vector<512x32xf32>
    %cst_18 = arith.constant 0.000000e+00 : f32
    %29 = vector.broadcast %cst_18 : f32 to vector<512x32xf32>
    %30 = arith.maximumf %28, %29 : vector<512x32xf32>
    %31 = arith.truncf %30 : vector<512x32xf32> to vector<512x32xbf16>
    %c0_19 = arith.constant 0 : index
    %c0_20 = arith.constant 0 : index
    %32 = vector.load %arg6[%c0_19, %c0_20] : memref<512x32xbf16, #tpu.memory_space<vmem>>, vector<512x32xbf16>
    tpu.vector_store %arg6[%c0_19, %c0_20], %31 {strides = array<i32>} : memref<512x32xbf16, #tpu.memory_space<vmem>>, vector<512x32xbf16>,
    return
  }
  func.func @transform_0(%arg0: i32) -> (i32, i32) {
    %c0_i32 = arith.constant 0 : i32
    %c0_i32_0 = arith.constant 0 : i32
    %c0_i32_1 = arith.constant 0 : i32
    return %c0_i32, %c0_i32_0 : i32, i32
  }
  func.func @transform_1(%arg0: i32) -> (i32, i32) {
    %c0_i32 = arith.constant 0 : i32
    %c0_i32_0 = arith.constant 0 : i32
    %c0_i32_1 = arith.constant 0 : i32
    return %c0_i32, %c0_i32_0 : i32, i32
  }
  func.func @transform_2(%arg0: i32) -> (i32, i32) {
    %c0_i32 = arith.constant 0 : i32
    %c0_i32_0 = arith.constant 0 : i32
    %c0_i32_1 = arith.constant 0 : i32
    return %c0_i32, %c0_i32_0 : i32, i32
  }
  func.func @transform_3(%arg0: i32) -> (i32, i32) {
    %c0_i32 = arith.constant 0 : i32
    %c0_i32_0 = arith.constant 0 : i32
    %c0_i32_1 = arith.constant 0 : i32
    return %c0_i32, %c0_i32_0 : i32, i32
  }
  func.func @transform_4(%arg0: i32) -> (i32, i32) {
    %c0_i32 = arith.constant 0 : i32
    %c0_i32_0 = arith.constant 0 : i32
    %c0_i32_1 = arith.constant 0 : i32
    return %c0_i32, %c0_i32_0 : i32, i32
  }
  func.func @transform_5(%arg0: i32) -> (i32, i32) {
    %c0_i32 = arith.constant 0 : i32
    %c0_i32_0 = arith.constant 0 : i32
    %c0_i32_1 = arith.constant 0 : i32
    return %c0_i32, %c0_i32_0 : i32, i32
  }
}

module attributes {stable_mosaic.version = 11 : i64} {
  func.func @_final_kernel(%arg0: i32, %arg1: memref<3x200xbf16, #tpu.memory_space<vmem>>, %arg2: memref<200x1024xbf16, #tpu.memory_space<vmem>>, %arg3: memref<3x1024xf32, #tpu.memory_space<vmem>>) attributes {dimension_semantics = [#tpu.dimension_semantics<parallel>], iteration_bounds = array<i64: 2>, scalar_prefetch = 0 : i64, scratch_operands = 0 : i64, tpu.core_type = #tpu.core_type<tc>, window_params = [{pipeline_mode = #tpu.pipeline_mode<synchronous>, transform_indices = @transform_0, window_bounds = array<i64: 3, 200>}, {transform_indices = @transform_1, window_bounds = array<i64: 200, 1024>}, {transform_indices = @transform_2, window_bounds = array<i64: 3, 1024>}]} {
    %c0 = arith.constant 0 : index
    %c0_0 = arith.constant 0 : index
    %0 = vector.load %arg1[%c0, %c0_0] : memref<3x200xbf16, #tpu.memory_space<vmem>>, vector<3x200xbf16>
    %c0_1 = arith.constant 0 : index
    %c0_2 = arith.constant 0 : index
    %1 = vector.load %arg2[%c0_1, %c0_2] : memref<200x1024xbf16, #tpu.memory_space<vmem>>, vector<200x1024xbf16>
    %cst = arith.constant dense<0.000000e+00> : vector<3x1024xf32>
    %2 = tpu.matmul %0, %1, %cst {dimension_numbers = #tpu.dot_dimension_numbers<[1], [0], [0], [1], [0, 0, 1, 1], [], []>} : vector<3x200xbf16>, vector<200x1024xbf16>, vector<3x1024xf32> -> vector<3x1024xf32>
    %3 = math.tanh %2 : vector<3x1024xf32>
    %c0_3 = arith.constant 0 : index
    %c0_4 = arith.constant 0 : index
    %4 = vector.load %arg3[%c0_3, %c0_4] : memref<3x1024xf32, #tpu.memory_space<vmem>>, vector<3x1024xf32>
    tpu.vector_store %arg3[%c0_3, %c0_4], %3 {strides = array<i32>} : memref<3x1024xf32, #tpu.memory_space<vmem>>, vector<3x1024xf32>,
    return
  }
  func.func @transform_0(%arg0: i32) -> (i32, i32) {
    %c0_i32 = arith.constant 0 : i32
    %c0_i32_0 = arith.constant 0 : i32
    %c0_i32_1 = arith.constant 0 : i32
    return %c0_i32, %c0_i32_0 : i32, i32
  }
  func.func @transform_1(%arg0: i32) -> (i32, i32) {
    %c0_i32 = arith.constant 0 : i32
    %c0_i32_0 = arith.constant 0 : i32
    return %c0_i32, %arg0 : i32, i32
  }
  func.func @transform_2(%arg0: i32) -> (i32, i32) {
    %c0_i32 = arith.constant 0 : i32
    %c0_i32_0 = arith.constant 0 : i32
    return %c0_i32, %arg0 : i32, i32
  }
}

</mosaic_0001>

<llo_original>
// kernel: generator_forward.6
$region0: #{generator_forward.6}
  #allocation0 [shape = 'u32[]', space=smem, size = 0x4, offset = 0x4, fixed_abs, tag = 'smem constant byte address 0x4 - core index']
  #allocation1 [shape = 'u32[144,128]{1,0:T(1,128)}', space=vmem, size = 0x12000, scoped, tag = 'internal scratch']
  %s0 = inlined_call_operand.hbm [shape: f32[2,32], index: 0, kind: input, shape index: {}]
  %s1 = inlined_call_operand.hbm [shape: f32[32,32], index: 1, kind: input, shape index: {}]
  %s2 = inlined_call_operand.vmem [shape: f32[1,32], index: 2, kind: input, shape index: {}]
  %s3 = inlined_call_operand.hbm [shape: f32[32,64], index: 3, kind: input, shape index: {}]
  %s4 = inlined_call_operand.hbm [shape: f32[1,64], index: 4, kind: input, shape index: {}]
  %s5 = inlined_call_operand.hbm [shape: f32[64,64], index: 5, kind: input, shape index: {}]
  %s6 = inlined_call_operand.hbm [shape: f32[1,64], index: 6, kind: input, shape index: {}]
  %s7 = inlined_call_operand.hbm [shape: f32[1,64], index: 7, kind: input, shape index: {}]
  %s8 = inlined_call_operand.hbm [shape: f32[2,32], index: 8, kind: output, shape index: {0}]
  %s9 = inlined_call_operand.vmem [shape: bf16[2,64], index: 9, kind: output, shape index: {1}]
  %10 = xla_tuple %s8, %s9
  %s11 = sld [smem:[#allocation0]]
  $region78: #{generator_forward.6} parent=0
    _
  %s13 = ssub.s32 1, %s11
  %s14 = scalar_select 0, %s13, %s11
  $region1: #{generator_forward.6} parent=0
    #allocation2 [shape = 'u8[1024]{0}', space=vmem, size = 0x400, scoped, tag = 'input window, operand 0, single buffered']
    #allocation3 [shape = 's32[1]{0}', space=sflag, size = 0x4, scoped, tag = 'scoped memory for generator_forward.6']
    #allocation4 [shape = 's32[1]{0}', space=sflag, size = 0x4, scoped, tag = 'scoped memory for generator_forward.6']
    #allocation5 [shape = 'u8[16384]{0}', space=vmem, size = 0x4000, scoped, tag = 'input window, operand 1, single buffered']
    #allocation6 [shape = 's32[1]{0}', space=sflag, size = 0x4, scoped, tag = 'scoped memory for generator_forward.6']
    #allocation7 [shape = 'u8[16384]{0}', space=vmem, size = 0x4000, scoped, tag = 'input window, operand 3, single buffered']
    #allocation8 [shape = 'u8[512]{0}', space=vmem, size = 0x400, scoped, tag = 'input window, operand 4, single buffered']
    #allocation9 [shape = 's32[1]{0}', space=sflag, size = 0x4, scoped, tag = 'scoped memory for generator_forward.6']
    #allocation10 [shape = 'u8[32768]{0}', space=vmem, size = 0x8000, scoped, tag = 'input window, operand 5, single buffered']
    #allocation11 [shape = 'u8[512]{0}', space=vmem, size = 0x400, scoped, tag = 'input window, operand 6, single buffered']
    #allocation12 [shape = 's32[1]{0}', space=sflag, size = 0x4, scoped, tag = 'scoped memory for generator_forward.6']
    #allocation13 [shape = 'u8[512]{0}', space=vmem, size = 0x400, scoped, tag = 'input window, operand 7, single buffered']
    #allocation14 [shape = 'u8[1024]{0}', space=vmem, size = 0x400, scoped, tag = 'output window, operand 0, single buffered']
    %15 = vsyncpa [#allocation3], 0
    %16 = vsyncpa [#allocation6], 0
    %17 = vsyncpa [#allocation9], 0
    %18 = vsyncpa [#allocation12], 0
    %19 = vsyncpa [#allocation4], 0
    // Predicated region
    $region2: #{generator_forward.6} parent=1 // pred_check
      _
    $region3: #{generator_forward.6} parent=1 // pred_check_branch
      %21 = sbr.rel (0) target = $region5
    $region4: #{generator_forward.6} parent=1 // pred_region
      %s23 = ssub.s32 32, 32
      %24 = vsyncadd [#allocation3], %s23
      %s26 = sshll.u32 [#allocation2], 4
      %s27 = int_to_ptr.vmem [resolvable:$true] %s26
      %29 = dma.hbm_to_vmem [thread:$0]  %s0, 32, %s27, [#allocation3]
    $region5: #{generator_forward.6} parent=1 // pred_fallthru
      _
    // Predicated region
    $region6: #{generator_forward.6} parent=1 // pred_check
      _
    $region7: #{generator_forward.6} parent=1 // pred_check_branch
      %31 = sbr.rel (0) target = $region9
    $region8: #{generator_forward.6} parent=1 // pred_region
      %s33 = ssub.s32 512, 512
      %34 = vsyncadd [#allocation6], %s33
      %s35 = sshll.u32 [#allocation5], 4
      %s36 = int_to_ptr.vmem [resolvable:$true] %s35
      %41 = dma.hbm_to_vmem [thread:$0]  %s1, 512, %s36, [#allocation6], 128, 128, 8
    $region9: #{generator_forward.6} parent=1 // pred_fallthru
      _
    // Predicated region
    $region10: #{generator_forward.6} parent=1 // pred_check
      _
    $region11: #{generator_forward.6} parent=1 // pred_check_branch
      %43 = sbr.rel (0) target = $region13
    $region12: #{generator_forward.6} parent=1 // pred_region
      _
    $region13: #{generator_forward.6} parent=1 // pred_fallthru
      _
    // Predicated region
    $region14: #{generator_forward.6} parent=1 // pred_check
      _
    $region15: #{generator_forward.6} parent=1 // pred_check_branch
      %45 = sbr.rel (0) target = $region17
    $region16: #{generator_forward.6} parent=1 // pred_region
      %s47 = ssub.s32 512, 512
      %48 = vsyncadd [#allocation6], %s47
      %s49 = sshll.u32 [#allocation7], 4
      %s50 = int_to_ptr.vmem [resolvable:$true] %s49
      %55 = dma.hbm_to_vmem [thread:$0]  %s3, 512, %s50, [#allocation6], 128, 128, 8
    $region17: #{generator_forward.6} parent=1 // pred_fallthru
      _
    // Predicated region
    $region18: #{generator_forward.6} parent=1 // pred_check
      _
    $region19: #{generator_forward.6} parent=1 // pred_check_branch
      %57 = sbr.rel (0) target = $region21
    $region20: #{generator_forward.6} parent=1 // pred_region
      %s59 = ssub.s32 16, 16
      %60 = vsyncadd [#allocation9], %s59
      %s62 = sshll.u32 [#allocation8], 4
      %s63 = int_to_ptr.vmem [resolvable:$true] %s62
      %65 = dma.hbm_to_vmem [thread:$0]  %s4, 16, %s63, [#allocation9]
    $region21: #{generator_forward.6} parent=1 // pred_fallthru
      _
    // Predicated region
    $region22: #{generator_forward.6} parent=1 // pred_check
      _
    $region23: #{generator_forward.6} parent=1 // pred_check_branch
      %67 = sbr.rel (0) target = $region25
    $region24: #{generator_forward.6} parent=1 // pred_region
      %s69 = ssub.s32 1024, 1024
      %70 = vsyncadd [#allocation9], %s69
      %s71 = sshll.u32 [#allocation10], 4
      %s72 = int_to_ptr.vmem [resolvable:$true] %s71
      %77 = dma.hbm_to_vmem [thread:$0]  %s5, 1024, %s72, [#allocation9], 128, 128, 8
    $region25: #{generator_forward.6} parent=1 // pred_fallthru
      _
    // Predicated region
    $region26: #{generator_forward.6} parent=1 // pred_check
      _
    $region27: #{generator_forward.6} parent=1 // pred_check_branch
      %79 = sbr.rel (0) target = $region29
    $region28: #{generator_forward.6} parent=1 // pred_region
      %s81 = ssub.s32 16, 16
      %82 = vsyncadd [#allocation12], %s81
      %s84 = sshll.u32 [#allocation11], 4
      %s85 = int_to_ptr.vmem [resolvable:$true] %s84
      %87 = dma.hbm_to_vmem [thread:$0]  %s6, 16, %s85, [#allocation12]
    $region29: #{generator_forward.6} parent=1 // pred_fallthru
      _
    // Predicated region
    $region30: #{generator_forward.6} parent=1 // pred_check
      _
    $region31: #{generator_forward.6} parent=1 // pred_check_branch
      %89 = sbr.rel (0) target = $region33
    $region32: #{generator_forward.6} parent=1 // pred_region
      %s91 = ssub.s32 16, 16
      %92 = vsyncadd [#allocation12], %s91
      %s94 = sshll.u32 [#allocation13], 4
      %s95 = int_to_ptr.vmem [resolvable:$true] %s94
      %97 = dma.hbm_to_vmem [thread:$0]  %s7, 16, %s95, [#allocation12]
    $region33: #{generator_forward.6} parent=1 // pred_fallthru
      _
    // Predicated region
    $region34: #{generator_forward.6} parent=1 // pred_check
      _
    $region35: #{generator_forward.6} parent=1 // pred_check_branch
      %99 = sbr.rel (0) target = $region37
    $region36: #{generator_forward.6} parent=1 // pred_region
      %100 = dma.done [#allocation3], 32
    $region37: #{generator_forward.6} parent=1 // pred_fallthru
      _
    // Predicated region
    $region38: #{generator_forward.6} parent=1 // pred_check
      _
    $region39: #{generator_forward.6} parent=1 // pred_check_branch
      %102 = sbr.rel (0) target = $region41
    $region40: #{generator_forward.6} parent=1 // pred_region
      %103 = dma.done [#allocation6], 512
    $region41: #{generator_forward.6} parent=1 // pred_fallthru
      _
    // Predicated region
    $region42: #{generator_forward.6} parent=1 // pred_check
      _
    $region43: #{generator_forward.6} parent=1 // pred_check_branch
      %105 = sbr.rel (0) target = $region45
    $region44: #{generator_forward.6} parent=1 // pred_region
      %106 = dma.done [#allocation6], 512
    $region45: #{generator_forward.6} parent=1 // pred_fallthru
      _
    // Predicated region
    $region46: #{generator_forward.6} parent=1 // pred_check
      _
    $region47: #{generator_forward.6} parent=1 // pred_check_branch
      %108 = sbr.rel (0) target = $region49
    $region48: #{generator_forward.6} parent=1 // pred_region
      %109 = dma.done [#allocation9], 16
    $region49: #{generator_forward.6} parent=1 // pred_fallthru
      _
    // Predicated region
    $region50: #{generator_forward.6} parent=1 // pred_check
      _
    $region51: #{generator_forward.6} parent=1 // pred_check_branch
      %111 = sbr.rel (0) target = $region53
    $region52: #{generator_forward.6} parent=1 // pred_region
      %112 = dma.done [#allocation9], 1024
    $region53: #{generator_forward.6} parent=1 // pred_fallthru
      _
    // Predicated region
    $region54: #{generator_forward.6} parent=1 // pred_check
      _
    $region55: #{generator_forward.6} parent=1 // pred_check_branch
      %114 = sbr.rel (0) target = $region57
    $region56: #{generator_forward.6} parent=1 // pred_region
      %115 = dma.done [#allocation12], 16
    $region57: #{generator_forward.6} parent=1 // pred_fallthru
      _
    // Predicated region
    $region58: #{generator_forward.6} parent=1 // pred_check
      _
    $region59: #{generator_forward.6} parent=1 // pred_check_branch
      %117 = sbr.rel (0) target = $region61
    $region60: #{generator_forward.6} parent=1 // pred_region
      %118 = dma.done [#allocation12], 16
    $region61: #{generator_forward.6} parent=1 // pred_fallthru
      _
    %v119 = vld [vmem:[#allocation2] sm:$0x3]
    %v120 = vld [vmem:[#allocation5] sm:$0xff]
    %v121 = vld [vmem:[#allocation5 + $0x8] sm:$0xff]
    %v122 = vld [vmem:[#allocation5 + $0x10] sm:$0xff]
    %v123 = vld [vmem:[#allocation5 + $0x18] sm:$0xff]
    %v124 = vld [vmem:[%s2] sm:$0x1]
    %v126 = vlaneseq
    %v127 = vshrl.u32 %v126, 7
    %v128 = vsub.s32 0, %v127
    %v129 = vrot.slane %v124, %v128
    %vm131 = vcmask 261120
    %v133 = vsel %vm131, %v119, 0
    %135 = vmatprep.subr.mxu0 0.0
    %136 = vmatpush1.msra.mxu0 %v120
    %137 = vmatprep.subr.mxu0 0.0
    %138 = vmatpush1.msra.mxu0 %v121
    %139 = vmatprep.subr.mxu0 0.0
    %140 = vmatpush1.msra.mxu0 %v122
    %141 = vmatprep.subr.mxu0 0.0
    %142 = vmatpush1.msra.mxu0 %v123
    %143 = vmatprep.subr.mxu0 0.0
    %144 = vmatpush1.msra.mxu0 0.0
    %145 = vmatprep.subr.mxu0 0.0
    %146 = vmatpush1.msra.mxu0 0.0
    %147 = vmatprep.subr.mxu0 0.0
    %148 = vmatpush1.msra.mxu0 0.0
    %149 = vmatprep.subr.mxu0 0.0
    %150 = vmatpush1.msra.mxu0 0.0
    %151 = vmatprep.subr.mxu0 0.0
    %152 = vmatpush1.msra.mxu0 0.0
    %153 = vmatprep.subr.mxu0 0.0
    %154 = vmatpush1.msra.mxu0 0.0
    %155 = vmatprep.subr.mxu0 0.0
    %156 = vmatpush1.msra.mxu0 0.0
    %157 = vmatprep.subr.mxu0 0.0
    %158 = vmatpush1.msra.mxu0 0.0
    %159 = vmatprep.subr.mxu0 0.0
    %160 = vmatpush1.msra.mxu0 0.0
    %161 = vmatprep.subr.mxu0 0.0
    %162 = vmatpush1.msra.mxu0 0.0
    %163 = vmatprep.subr.mxu0 0.0
    %164 = vmatpush1.msra.mxu0 0.0
    %165 = vmatprep.subr.mxu0 0.0
    %166 = vmatpush1.msra.mxu0 0.0
    %167 = vmatprep.subr.mxu0 0.0
    %168 = vmatpush1.msra.mxu0 0.0
    %169 = vmatprep.subr.mxu0 0.0
    %170 = vmatpush1.msra.mxu0 0.0
    %171 = vmatprep.subr.mxu0 0.0
    %172 = vmatpush1.msra.mxu0 0.0
    %173 = vmatprep.subr.mxu0 0.0
    %174 = vmatpush1.msra.mxu0 0.0
    %175 = vmatprep.subr.mxu0 0.0
    %176 = vmatpush1.msra.mxu0 0.0
    %177 = vmatprep.subr.mxu0 0.0
    %178 = vmatpush1.msra.mxu0 0.0
    %179 = vmatprep.subr.mxu0 0.0
    %180 = vmatpush1.msra.mxu0 0.0
    %181 = vmatprep.subr.mxu0 0.0
    %182 = vmatpush1.msra.mxu0 0.0
    %183 = vmatprep.subr.mxu0 0.0
    %184 = vmatpush1.msra.mxu0 0.0
    %185 = vmatprep.subr.mxu0 0.0
    %186 = vmatpush1.msra.mxu0 0.0
    %187 = vmatprep.subr.mxu0 0.0
    %188 = vmatpush1.msra.mxu0 0.0
    %189 = vmatprep.subr.mxu0 0.0
    %190 = vmatpush1.msra.mxu0 0.0
    %191 = vmatprep.subr.mxu0 0.0
    %192 = vmatpush1.msra.mxu0 0.0
    %193 = vmatprep.subr.mxu0 0.0
    %194 = vmatpush1.msra.mxu0 0.0
    %195 = vmatprep.subr.mxu0 0.0
    %196 = vmatpush1.msra.mxu0 0.0
    %197 = vmatprep.subr.mxu0 0.0
    %198 = vmatpush1.msra.mxu0 0.0
    %199 = vmatprep.mubr.f32.mxu0 0.0
    %200 = vmatmul.mubr.f32.gmra.mrb[0].mxu0 %v133
    %v201 = vpop.f32.mrb[0].mxu0
    %v202 = vadd.f32 %v129, %v201
    %v203 = vpop.f32.mrb[0].mxu0
    %204 = vdwg.mxu0
    %vm205 = vcmask 254976
    %206 = vst.msk [vmem:[#allocation14] sm:$0x3] %vm205, %v202
    %v207 = vld [vmem:[#allocation7] sm:$0xff]
    %v208 = vld [vmem:[#allocation7 + $0x8] sm:$0xff]
    %v209 = vld [vmem:[#allocation7 + $0x10] sm:$0xff]
    %v210 = vld [vmem:[#allocation7 + $0x18] sm:$0xff]
    %v211 = vld [vmem:[#allocation8] sm:$0x1]
    %v213 = vlaneseq
    %v214 = vshrl.u32 %v213, 7
    %v215 = vsub.s32 0, %v214
    %v216 = vrot.slane %v211, %v215
    %v219 = vsel %vm131, %v202, 0
    %221 = vmatprep.subr.mxu0 0.0
    %222 = vmatpush1.msra.mxu0 %v207
    %223 = vmatprep.subr.mxu0 0.0
    %224 = vmatpush1.msra.mxu0 %v208
    %225 = vmatprep.subr.mxu0 0.0
    %226 = vmatpush1.msra.mxu0 %v209
    %227 = vmatprep.subr.mxu0 0.0
    %228 = vmatpush1.msra.mxu0 %v210
    %229 = vmatprep.subr.mxu0 0.0
    %230 = vmatpush1.msra.mxu0 0.0
    %231 = vmatprep.subr.mxu0 0.0
    %232 = vmatpush1.msra.mxu0 0.0
    %233 = vmatprep.subr.mxu0 0.0
    %234 = vmatpush1.msra.mxu0 0.0
    %235 = vmatprep.subr.mxu0 0.0
    %236 = vmatpush1.msra.mxu0 0.0
    %237 = vmatprep.subr.mxu0 0.0
    %238 = vmatpush1.msra.mxu0 0.0
    %239 = vmatprep.subr.mxu0 0.0
    %240 = vmatpush1.msra.mxu0 0.0
    %241 = vmatprep.subr.mxu0 0.0
    %242 = vmatpush1.msra.mxu0 0.0
    %243 = vmatprep.subr.mxu0 0.0
    %244 = vmatpush1.msra.mxu0 0.0
    %245 = vmatprep.subr.mxu0 0.0
    %246 = vmatpush1.msra.mxu0 0.0
    %247 = vmatprep.subr.mxu0 0.0
    %248 = vmatpush1.msra.mxu0 0.0
    %249 = vmatprep.subr.mxu0 0.0
    %250 = vmatpush1.msra.mxu0 0.0
    %251 = vmatprep.subr.mxu0 0.0
    %252 = vmatpush1.msra.mxu0 0.0
    %253 = vmatprep.subr.mxu0 0.0
    %254 = vmatpush1.msra.mxu0 0.0
    %255 = vmatprep.subr.mxu0 0.0
    %256 = vmatpush1.msra.mxu0 0.0
    %257 = vmatprep.subr.mxu0 0.0
    %258 = vmatpush1.msra.mxu0 0.0
    %259 = vmatprep.subr.mxu0 0.0
    %260 = vmatpush1.msra.mxu0 0.0
    %261 = vmatprep.subr.mxu0 0.0
    %262 = vmatpush1.msra.mxu0 0.0
    %263 = vmatprep.subr.mxu0 0.0
    %264 = vmatpush1.msra.mxu0 0.0
    %265 = vmatprep.subr.mxu0 0.0
    %266 = vmatpush1.msra.mxu0 0.0
    %267 = vmatprep.subr.mxu0 0.0
    %268 = vmatpush1.msra.mxu0 0.0
    %269 = vmatprep.subr.mxu0 0.0
    %270 = vmatpush1.msra.mxu0 0.0
    %271 = vmatprep.subr.mxu0 0.0
    %272 = vmatpush1.msra.mxu0 0.0
    %273 = vmatprep.subr.mxu0 0.0
    %274 = vmatpush1.msra.mxu0 0.0
    %275 = vmatprep.subr.mxu0 0.0
    %276 = vmatpush1.msra.mxu0 0.0
    %277 = vmatprep.subr.mxu0 0.0
    %278 = vmatpush1.msra.mxu0 0.0
    %279 = vmatprep.subr.mxu0 0.0
    %280 = vmatpush1.msra.mxu0 0.0
    %281 = vmatprep.subr.mxu0 0.0
    %282 = vmatpush1.msra.mxu0 0.0
    %283 = vmatprep.subr.mxu0 0.0
    %284 = vmatpush1.msra.mxu0 0.0
    %285 = vmatprep.mubr.f32.mxu0 0.0
    %286 = vmatmul.mubr.f32.gmra.mrb[0].mxu0 %v219
    %v287 = vpop.f32.mrb[0].mxu0
    %v288 = vadd.f32 %v216, %v287
    %v289 = vpop.f32.mrb[0].mxu0
    %290 = vdwg.mxu0
    %vm291 = vcmask 517120
    %v292 = vsel %vm291, %v288, 0.0
    %v293 = vrot.slane %v292, 4
    %v294 = vadd.f32 %v292, %v293
    %v295 = vrot.slane %v294, 2
    %v296 = vadd.f32 %v294, %v295
    %v297 = vrot.slane %v296, 1
    %v298 = vadd.f32 %v296, %v297
    %v299 = vrcp.pop 2.0
    %v300 = vmul.f32 %v298, %v299
    %v301 = vld [vmem:[#allocation10] sm:$0xff]
    %v302 = vld [vmem:[#allocation10 + $0x8] sm:$0xff]
    %v303 = vld [vmem:[#allocation10 + $0x10] sm:$0xff]
    %v304 = vld [vmem:[#allocation10 + $0x18] sm:$0xff]
    %v305 = vld [vmem:[#allocation10 + $0x20] sm:$0xff]
    %v306 = vld [vmem:[#allocation10 + $0x28] sm:$0xff]
    %v307 = vld [vmem:[#allocation10 + $0x30] sm:$0xff]
    %v308 = vld [vmem:[#allocation10 + $0x38] sm:$0xff]
    %vm309 = vcmask 523264
    %v311 = vsel %vm309, %v300, 0
    %313 = vmatprep.subr.mxu0 0.0
    %314 = vmatpush1.msra.mxu0 %v301
    %315 = vmatprep.subr.mxu0 0.0
    %316 = vmatpush1.msra.mxu0 %v302
    %317 = vmatprep.subr.mxu0 0.0
    %318 = vmatpush1.msra.mxu0 %v303
    %319 = vmatprep.subr.mxu0 0.0
    %320 = vmatpush1.msra.mxu0 %v304
    %321 = vmatprep.subr.mxu0 0.0
    %322 = vmatpush1.msra.mxu0 %v305
    %323 = vmatprep.subr.mxu0 0.0
    %324 = vmatpush1.msra.mxu0 %v306
    %325 = vmatprep.subr.mxu0 0.0
    %326 = vmatpush1.msra.mxu0 %v307
    %327 = vmatprep.subr.mxu0 0.0
    %328 = vmatpush1.msra.mxu0 %v308
    %329 = vmatprep.subr.mxu0 0.0
    %330 = vmatpush1.msra.mxu0 0.0
    %331 = vmatprep.subr.mxu0 0.0
    %332 = vmatpush1.msra.mxu0 0.0
    %333 = vmatprep.subr.mxu0 0.0
    %334 = vmatpush1.msra.mxu0 0.0
    %335 = vmatprep.subr.mxu0 0.0
    %336 = vmatpush1.msra.mxu0 0.0
    %337 = vmatprep.subr.mxu0 0.0
    %338 = vmatpush1.msra.mxu0 0.0
    %339 = vmatprep.subr.mxu0 0.0
    %340 = vmatpush1.msra.mxu0 0.0
    %341 = vmatprep.subr.mxu0 0.0
    %342 = vmatpush1.msra.mxu0 0.0
    %343 = vmatprep.subr.mxu0 0.0
    %344 = vmatpush1.msra.mxu0 0.0
    %345 = vmatprep.subr.mxu0 0.0
    %346 = vmatpush1.msra.mxu0 0.0
    %347 = vmatprep.subr.mxu0 0.0
    %348 = vmatpush1.msra.mxu0 0.0
    %349 = vmatprep.subr.mxu0 0.0
    %350 = vmatpush1.msra.mxu0 0.0
    %351 = vmatprep.subr.mxu0 0.0
    %352 = vmatpush1.msra.mxu0 0.0
    %353 = vmatprep.subr.mxu0 0.0
    %354 = vmatpush1.msra.mxu0 0.0
    %355 = vmatprep.subr.mxu0 0.0
    %356 = vmatpush1.msra.mxu0 0.0
    %357 = vmatprep.subr.mxu0 0.0
    %358 = vmatpush1.msra.mxu0 0.0
    %359 = vmatprep.subr.mxu0 0.0
    %360 = vmatpush1.msra.mxu0 0.0
    %361 = vmatprep.subr.mxu0 0.0
    %362 = vmatpush1.msra.mxu0 0.0
    %363 = vmatprep.subr.mxu0 0.0
    %364 = vmatpush1.msra.mxu0 0.0
    %365 = vmatprep.subr.mxu0 0.0
    %366 = vmatpush1.msra.mxu0 0.0
    %367 = vmatprep.subr.mxu0 0.0
    %368 = vmatpush1.msra.mxu0 0.0
    %369 = vmatprep.subr.mxu0 0.0
    %370 = vmatpush1.msra.mxu0 0.0
    %371 = vmatprep.subr.mxu0 0.0
    %372 = vmatpush1.msra.mxu0 0.0
    %373 = vmatprep.subr.mxu0 0.0
    %374 = vmatpush1.msra.mxu0 0.0
    %375 = vmatprep.subr.mxu0 0.0
    %376 = vmatpush1.msra.mxu0 0.0
    %377 = vmatprep.mubr.f32.mxu0 0.0
    %378 = vmatmul.mubr.f32.gmra.mrb[0].mxu0 %v311
    %v379 = vpop.f32.mrb[0].mxu0
    %v380 = vadd.f32 0.0, %v379
    %v381 = vpop.f32.mrb[0].mxu0
    %382 = vdwg.mxu0
    %v383 = vlaneseq
    %v384 = vshrl.u32 %v383, 7
    %v385 = vsub.s32 0, %v384
    %v386 = vrot.slane %v380, %v385
    %v387 = vsub.f32 %v288, %v386
    %v388 = vmul.f32 %v387, %v387
    %v389 = vsel %vm291, %v388, 0.0
    %v390 = vrot.slane %v389, 4
    %v391 = vadd.f32 %v389, %v390
    %v392 = vrot.slane %v391, 2
    %v393 = vadd.f32 %v391, %v392
    %v394 = vrot.slane %v393, 1
    %v395 = vadd.f32 %v393, %v394
    %v396 = vmul.f32 %v395, %v299
    %v398 = vsel %vm309, %v396, 0
    %400 = vmatprep.subr.mxu0 0.0
    %401 = vmatpush1.msra.mxu0 %v301
    %402 = vmatprep.subr.mxu0 0.0
    %403 = vmatpush1.msra.mxu0 %v302
    %404 = vmatprep.subr.mxu0 0.0
    %405 = vmatpush1.msra.mxu0 %v303
    %406 = vmatprep.subr.mxu0 0.0
    %407 = vmatpush1.msra.mxu0 %v304
    %408 = vmatprep.subr.mxu0 0.0
    %409 = vmatpush1.msra.mxu0 %v305
    %410 = vmatprep.subr.mxu0 0.0
    %411 = vmatpush1.msra.mxu0 %v306
    %412 = vmatprep.subr.mxu0 0.0
    %413 = vmatpush1.msra.mxu0 %v307
    %414 = vmatprep.subr.mxu0 0.0
    %415 = vmatpush1.msra.mxu0 %v308
    %416 = vmatprep.subr.mxu0 0.0
    %417 = vmatpush1.msra.mxu0 0.0
    %418 = vmatprep.subr.mxu0 0.0
    %419 = vmatpush1.msra.mxu0 0.0
    %420 = vmatprep.subr.mxu0 0.0
    %421 = vmatpush1.msra.mxu0 0.0
    %422 = vmatprep.subr.mxu0 0.0
    %423 = vmatpush1.msra.mxu0 0.0
    %424 = vmatprep.subr.mxu0 0.0
    %425 = vmatpush1.msra.mxu0 0.0
    %426 = vmatprep.subr.mxu0 0.0
    %427 = vmatpush1.msra.mxu0 0.0
    %428 = vmatprep.subr.mxu0 0.0
    %429 = vmatpush1.msra.mxu0 0.0
    %430 = vmatprep.subr.mxu0 0.0
    %431 = vmatpush1.msra.mxu0 0.0
    %432 = vmatprep.subr.mxu0 0.0
    %433 = vmatpush1.msra.mxu0 0.0
    %434 = vmatprep.subr.mxu0 0.0
    %435 = vmatpush1.msra.mxu0 0.0
    %436 = vmatprep.subr.mxu0 0.0
    %437 = vmatpush1.msra.mxu0 0.0
    %438 = vmatprep.subr.mxu0 0.0
    %439 = vmatpush1.msra.mxu0 0.0
    %440 = vmatprep.subr.mxu0 0.0
    %441 = vmatpush1.msra.mxu0 0.0
    %442 = vmatprep.subr.mxu0 0.0
    %443 = vmatpush1.msra.mxu0 0.0
    %444 = vmatprep.subr.mxu0 0.0
    %445 = vmatpush1.msra.mxu0 0.0
    %446 = vmatprep.subr.mxu0 0.0
    %447 = vmatpush1.msra.mxu0 0.0
    %448 = vmatprep.subr.mxu0 0.0
    %449 = vmatpush1.msra.mxu0 0.0
    %450 = vmatprep.subr.mxu0 0.0
    %451 = vmatpush1.msra.mxu0 0.0
    %452 = vmatprep.subr.mxu0 0.0
    %453 = vmatpush1.msra.mxu0 0.0
    %454 = vmatprep.subr.mxu0 0.0
    %455 = vmatpush1.msra.mxu0 0.0
    %456 = vmatprep.subr.mxu0 0.0
    %457 = vmatpush1.msra.mxu0 0.0
    %458 = vmatprep.subr.mxu0 0.0
    %459 = vmatpush1.msra.mxu0 0.0
    %460 = vmatprep.subr.mxu0 0.0
    %461 = vmatpush1.msra.mxu0 0.0
    %462 = vmatprep.subr.mxu0 0.0
    %463 = vmatpush1.msra.mxu0 0.0
    %464 = vmatprep.mubr.f32.mxu0 0.0
    %465 = vmatmul.mubr.f32.gmra.mrb[0].mxu0 %v398
    %v466 = vpop.f32.mrb[0].mxu0
    %v467 = vadd.f32 1e-05, %v466
    %v468 = vpop.f32.mrb[0].mxu0
    %469 = vdwg.mxu0
    %v470 = vrsqrt.pop %v467
    %v471 = vlaneseq
    %v472 = vshrl.u32 %v471, 7
    %v473 = vsub.s32 0, %v472
    %v474 = vrot.slane %v470, %v473
    %v475 = vmul.f32 %v387, %v474
    %v476 = vld [vmem:[#allocation11] sm:$0x1]
    %v478 = vlaneseq
    %v479 = vshrl.u32 %v478, 7
    %v480 = vsub.s32 0, %v479
    %v481 = vrot.slane %v476, %v480
    %v483 = vmul.f32 %v475, %v481
    %v484 = vld [vmem:[#allocation13] sm:$0x1]
    %v486 = vlaneseq
    %v487 = vshrl.u32 %v486, 7
    %v488 = vsub.s32 0, %v487
    %v489 = vrot.slane %v484, %v488
    %v491 = vadd.f32 %v483, %v489
    %v492 = vpack.c.bf16 %v491, %v491
    %vm493 = vcmask 516096
    %494 = vst.msk [vmem:[%s9] sm:$0x1] %vm493, %v492
    // Predicated region
    $region62: #{generator_forward.6} parent=1 // pred_check
      _
    $region63: #{generator_forward.6} parent=1 // pred_check_branch
      %496 = sbr.rel (0) target = $region65
    $region64: #{generator_forward.6} parent=1 // pred_region
      %s498 = ssub.s32 32, 32
      %499 = vsyncadd [#allocation4], %s498
      %s501 = sshll.u32 [#allocation14], 4
      %s502 = int_to_ptr.vmem [resolvable:$true] %s501
      %504 = dma.vmem_to_hbm [thread:$0]  %s502, 32, %s8, [#allocation4]
    $region65: #{generator_forward.6} parent=1 // pred_fallthru
      _
    // Predicated region
    $region66: #{generator_forward.6} parent=1 // pred_check
      _
    $region67: #{generator_forward.6} parent=1 // pred_check_branch
      %506 = sbr.rel (0) target = $region69
    $region68: #{generator_forward.6} parent=1 // pred_region
      _
    $region69: #{generator_forward.6} parent=1 // pred_fallthru
      _
    // Predicated region
    $region70: #{generator_forward.6} parent=1 // pred_check
      _
    $region71: #{generator_forward.6} parent=1 // pred_check_branch
      %508 = sbr.rel (0) target = $region73
    $region72: #{generator_forward.6} parent=1 // pred_region
      %509 = dma.done [#allocation4], 32
    $region73: #{generator_forward.6} parent=1 // pred_fallthru
      _
    // Predicated region
    $region74: #{generator_forward.6} parent=1 // pred_check
      _
    $region75: #{generator_forward.6} parent=1 // pred_check_branch
      %511 = sbr.rel (0) target = $region77
    $region76: #{generator_forward.6} parent=1 // pred_region
      _
    $region77: #{generator_forward.6} parent=1 // pred_fallthru
      _
    %512 = vsyncpa [#allocation3], 1
    %513 = vsyncpa [#allocation6], 1
    %514 = vsyncpa [#allocation9], 1
    %515 = vsyncpa [#allocation12], 1
    %516 = vsyncpa [#allocation4], 1

// kernel: generator_forward.7
$region0: #{generator_forward.7}
  #allocation0 [shape = 'u32[]', space=smem, size = 0x4, offset = 0x4, fixed_abs, tag = 'smem constant byte address 0x4 - core index']
  #allocation1 [shape = 'u32[144,128]{1,0:T(1,128)}', space=vmem, size = 0x12000, scoped, tag = 'internal scratch']
  %s0 = inlined_call_operand.vmem [shape: bf16[8,144], index: 0, kind: input, shape index: {}]
  %s1 = inlined_call_operand.hbm [shape: bf16[144,256], index: 1, kind: input, shape index: {}]
  %s2 = inlined_call_operand.hbm [shape: f32[256,256], index: 2, kind: input, shape index: {}]
  %s3 = inlined_call_operand.hbm [shape: f32[1,256], index: 3, kind: input, shape index: {}]
  %s4 = inlined_call_operand.hbm [shape: f32[1,256], index: 4, kind: input, shape index: {}]
  %s5 = inlined_call_operand.vmem [shape: bf16[8,256], index: 5, kind: output, shape index: {}]
  %s6 = sld [smem:[#allocation0]]
  $region46: #{generator_forward.7} parent=0
    _
  %s8 = ssub.s32 1, %s6
  %s9 = scalar_select 0, %s8, %s6
  $region1: #{generator_forward.7} parent=0
    #allocation2 [shape = 'u8[73728]{0}', space=vmem, size = 0x12000, scoped, tag = 'input window, operand 1, single buffered']
    #allocation3 [shape = 's32[1]{0}', space=sflag, size = 0x4, scoped, tag = 'scoped memory for generator_forward.7']
    #allocation4 [shape = 'u8[262144]{0}', space=vmem, size = 0x40000, scoped, tag = 'input window, operand 2, single buffered']
    #allocation5 [shape = 's32[1]{0}', space=sflag, size = 0x4, scoped, tag = 'scoped memory for generator_forward.7']
    #allocation6 [shape = 'u8[1024]{0}', space=vmem, size = 0x400, scoped, tag = 'input window, operand 3, single buffered']
    #allocation7 [shape = 'u8[1024]{0}', space=vmem, size = 0x400, scoped, tag = 'input window, operand 4, single buffered']
    #allocation8 [shape = 's32[1]{0}', space=sflag, size = 0x4, scoped, tag = 'scoped memory for generator_forward.7']
    %10 = vsyncpa [#allocation3], 0
    %11 = vsyncpa [#allocation5], 0
    %12 = vsyncpa [#allocation8], 0
    // Predicated region
    $region2: #{generator_forward.7} parent=1 // pred_check
      _
    $region3: #{generator_forward.7} parent=1 // pred_check_branch
      %14 = sbr.rel (0) target = $region5
    $region4: #{generator_forward.7} parent=1 // pred_region
      _
    $region5: #{generator_forward.7} parent=1 // pred_fallthru
      _
    // Predicated region
    $region6: #{generator_forward.7} parent=1 // pred_check
      _
    $region7: #{generator_forward.7} parent=1 // pred_check_branch
      %16 = sbr.rel (0) target = $region9
    $region8: #{generator_forward.7} parent=1 // pred_region
      %s18 = ssub.s32 2304, 2304
      %19 = vsyncadd [#allocation3], %s18
      %s20 = sshll.u32 [#allocation2], 4
      %s21 = int_to_ptr.vmem [resolvable:$true] %s20
      %26 = dma.hbm_to_vmem [thread:$0]  %s1, 2304, %s21, [#allocation3], 128, 128, 8
    $region9: #{generator_forward.7} parent=1 // pred_fallthru
      _
    // Predicated region
    $region10: #{generator_forward.7} parent=1 // pred_check
      _
    $region11: #{generator_forward.7} parent=1 // pred_check_branch
      %28 = sbr.rel (0) target = $region13
    $region12: #{generator_forward.7} parent=1 // pred_region
      %s30 = ssub.s32 8192, 8192
      %31 = vsyncadd [#allocation5], %s30
      %s32 = sshll.u32 [#allocation4], 4
      %s33 = int_to_ptr.vmem [resolvable:$true] %s32
      %38 = dma.hbm_to_vmem [thread:$0]  %s2, 8192, %s33, [#allocation5], 256, 256, 16
    $region13: #{generator_forward.7} parent=1 // pred_fallthru
      _
    // Predicated region
    $region14: #{generator_forward.7} parent=1 // pred_check
      _
    $region15: #{generator_forward.7} parent=1 // pred_check_branch
      %40 = sbr.rel (0) target = $region17
    $region16: #{generator_forward.7} parent=1 // pred_region
      %s42 = ssub.s32 32, 32
      %43 = vsyncadd [#allocation5], %s42
      %s45 = sshll.u32 [#allocation6], 4
      %s46 = int_to_ptr.vmem [resolvable:$true] %s45
      %48 = dma.hbm_to_vmem [thread:$0]  %s3, 32, %s46, [#allocation5]
    $region17: #{generator_forward.7} parent=1 // pred_fallthru
      _
    // Predicated region
    $region18: #{generator_forward.7} parent=1 // pred_check
      _
    $region19: #{generator_forward.7} parent=1 // pred_check_branch
      %50 = sbr.rel (0) target = $region21
    $region20: #{generator_forward.7} parent=1 // pred_region
      %s52 = ssub.s32 32, 32
      %53 = vsyncadd [#allocation8], %s52
      %s55 = sshll.u32 [#allocation7], 4
      %s56 = int_to_ptr.vmem [resolvable:$true] %s55
      %58 = dma.hbm_to_vmem [thread:$0]  %s4, 32, %s56, [#allocation8]
    $region21: #{generator_forward.7} parent=1 // pred_fallthru
      _
    // Predicated region
    $region22: #{generator_forward.7} parent=1 // pred_check
      _
    $region23: #{generator_forward.7} parent=1 // pred_check_branch
      %60 = sbr.rel (0) target = $region25
    $region24: #{generator_forward.7} parent=1 // pred_region
      %61 = dma.done [#allocation3], 2304
    $region25: #{generator_forward.7} parent=1 // pred_fallthru
      _
    // Predicated region
    $region26: #{generator_forward.7} parent=1 // pred_check
      _
    $region27: #{generator_forward.7} parent=1 // pred_check_branch
      %63 = sbr.rel (0) target = $region29
    $region28: #{generator_forward.7} parent=1 // pred_region
      %64 = dma.done [#allocation5], 8192
    $region29: #{generator_forward.7} parent=1 // pred_fallthru
      _
    // Predicated region
    $region30: #{generator_forward.7} parent=1 // pred_check
      _
    $region31: #{generator_forward.7} parent=1 // pred_check_branch
      %66 = sbr.rel (0) target = $region33
    $region32: #{generator_forward.7} parent=1 // pred_region
      %67 = dma.done [#allocation5], 32
    $region33: #{generator_forward.7} parent=1 // pred_fallthru
      _
    // Predicated region
    $region34: #{generator_forward.7} parent=1 // pred_check
      _
    $region35: #{generator_forward.7} parent=1 // pred_check_branch
      %69 = sbr.rel (0) target = $region37
    $region36: #{generator_forward.7} parent=1 // pred_region
      %70 = dma.done [#allocation8], 32
    $region37: #{generator_forward.7} parent=1 // pred_fallthru
      _
    %v72 = vld [vmem:[%s0] sm:$0xff]
    %v73 = vld [vmem:[#allocation2] sm:$0xff]
    %v74 = vld [vmem:[#allocation2 + $0x8] sm:$0xff]
    %v75 = vld [vmem:[#allocation2 + $0x10] sm:$0xff]
    %v76 = vld [vmem:[#allocation2 + $0x18] sm:$0xff]
    %v77 = vld [vmem:[#allocation2 + $0x20] sm:$0xff]
    %v78 = vld [vmem:[#allocation2 + $0x28] sm:$0xff]
    %v79 = vld [vmem:[#allocation2 + $0x30] sm:$0xff]
    %v80 = vld [vmem:[#allocation2 + $0x38] sm:$0xff]
    %v81 = vld [vmem:[#allocation2 + $0x40] sm:$0xff]
    %v82 = vld [vmem:[#allocation2 + $0x48] sm:$0xff]
    %v83 = vld [vmem:[#allocation2 + $0x50] sm:$0xff]
    %v84 = vld [vmem:[#allocation2 + $0x58] sm:$0xff]
    %v85 = vld [vmem:[#allocation2 + $0x60] sm:$0xff]
    %v86 = vld [vmem:[#allocation2 + $0x68] sm:$0xff]
    %v87 = vld [vmem:[#allocation2 + $0x70] sm:$0xff]
    %v88 = vld [vmem:[#allocation2 + $0x78] sm:$0xff]
    %v89 = vld [vmem:[#allocation2 + $0x80] sm:$0xff]
    %v90 = vld [vmem:[#allocation2 + $0x88] sm:$0xff]
    %v92 = vunpack.c.l.b16 %v72
    %v93 = vunpack.c.h.b16 %v72
    %v94 = vpack.c.b16 %v92, %v92
    %v95 = vpack.c.b16 %v93, %v93
    %v115 = vunpack.c.l.b16 %v73
    %v116 = vunpack.c.h.b16 %v73
    %v117 = vunpack.c.l.b16 %v74
    %v118 = vunpack.c.h.b16 %v74
    %v119 = vunpack.c.l.b16 %v75
    %v120 = vunpack.c.h.b16 %v75
    %v121 = vunpack.c.l.b16 %v76
    %v122 = vunpack.c.h.b16 %v76
    %v123 = vunpack.c.l.b16 %v77
    %v124 = vunpack.c.h.b16 %v77
    %v125 = vunpack.c.l.b16 %v78
    %v126 = vunpack.c.h.b16 %v78
    %v127 = vunpack.c.l.b16 %v79
    %v128 = vunpack.c.h.b16 %v79
    %v129 = vunpack.c.l.b16 %v80
    %v130 = vunpack.c.h.b16 %v80
    %v131 = vunpack.c.l.b16 %v81
    %v132 = vunpack.c.h.b16 %v81
    %v133 = vunpack.c.l.b16 %v82
    %v134 = vunpack.c.h.b16 %v82
    %v135 = vunpack.c.l.b16 %v83
    %v136 = vunpack.c.h.b16 %v83
    %v137 = vunpack.c.l.b16 %v84
    %v138 = vunpack.c.h.b16 %v84
    %v139 = vunpack.c.l.b16 %v85
    %v140 = vunpack.c.h.b16 %v85
    %v141 = vunpack.c.l.b16 %v86
    %v142 = vunpack.c.h.b16 %v86
    %v143 = vunpack.c.l.b16 %v87
    %v144 = vunpack.c.h.b16 %v87
    %v145 = vunpack.c.l.b16 %v88
    %v146 = vunpack.c.h.b16 %v88
    %v147 = vunpack.c.l.b16 %v89
    %v148 = vunpack.c.h.b16 %v89
    %v149 = vunpack.c.l.b16 %v90
    %v150 = vunpack.c.h.b16 %v90
    %v151 = vpack.c.b16 %v117, %v115
    %v152 = vpack.c.b16 %v118, %v116
    %v153 = vpack.c.b16 %v121, %v119
    %v154 = vpack.c.b16 %v122, %v120
    %v155 = vpack.c.b16 %v125, %v123
    %v156 = vpack.c.b16 %v126, %v124
    %v157 = vpack.c.b16 %v129, %v127
    %v158 = vpack.c.b16 %v130, %v128
    %v159 = vpack.c.b16 %v133, %v131
    %v160 = vpack.c.b16 %v134, %v132
    %v161 = vpack.c.b16 %v137, %v135
    %v162 = vpack.c.b16 %v138, %v136
    %v163 = vpack.c.b16 %v141, %v139
    %v164 = vpack.c.b16 %v142, %v140
    %v165 = vpack.c.b16 %v145, %v143
    %v166 = vpack.c.b16 %v146, %v144
    %v167 = vpack.c.b16 %v149, %v147
    %v168 = vpack.c.b16 %v150, %v148
    %vm187 = vcmask 130048
    %v189 = vsel %vm187, %v95, 0
    %191 = vmatprep.subr.bf16.mxu0 %v152
    %192 = vmatpush1.bf16.msra.mxu0 %v151
    %193 = vmatprep.subr.bf16.mxu0 %v154
    %194 = vmatpush1.bf16.msra.mxu0 %v153
    %195 = vmatprep.subr.bf16.mxu0 %v156
    %196 = vmatpush1.bf16.msra.mxu0 %v155
    %197 = vmatprep.subr.bf16.mxu0 %v158
    %198 = vmatpush1.bf16.msra.mxu0 %v157
    %199 = vmatprep.subr.bf16.mxu0 %v160
    %200 = vmatpush1.bf16.msra.mxu0 %v159
    %201 = vmatprep.subr.bf16.mxu0 %v162
    %202 = vmatpush1.bf16.msra.mxu0 %v161
    %203 = vmatprep.subr.bf16.mxu0 %v164
    %204 = vmatpush1.bf16.msra.mxu0 %v163
    %205 = vmatprep.subr.bf16.mxu0 %v166
    %206 = vmatpush1.bf16.msra.mxu0 %v165
    %207 = vmatprep.subr.bf16.mxu0 %v168
    %208 = vmatpush1.bf16.msra.mxu0 %v167
    %209 = vmatprep.subr.bf16.mxu0 0
    %210 = vmatpush1.bf16.msra.mxu0 0
    %211 = vmatprep.subr.bf16.mxu0 0
    %212 = vmatpush1.bf16.msra.mxu0 0
    %213 = vmatprep.subr.bf16.mxu0 0
    %214 = vmatpush1.bf16.msra.mxu0 0
    %215 = vmatprep.subr.bf16.mxu0 0
    %216 = vmatpush1.bf16.msra.mxu0 0
    %217 = vmatprep.subr.bf16.mxu0 0
    %218 = vmatpush1.bf16.msra.mxu0 0
    %219 = vmatprep.subr.bf16.mxu0 0
    %220 = vmatpush1.bf16.msra.mxu0 0
    %221 = vmatprep.subr.bf16.mxu0 0
    %222 = vmatpush1.bf16.msra.mxu0 0
    %223 = vmatprep.mubr.bf16.mxu0 %v189
    %224 = vmatmul.mubr.bf16.gmra.mrb[0].mxu0 %v94
    %v225 = vpop.f32.mrb[0].mxu0
    %v226 = vadd.f32 0.0, %v225
    %v227 = vpop.f32.mrb[0].mxu0
    %v228 = vadd.f32 0.0, %v227
    %v229 = vpop.f32.mrb[0].mxu0
    %v230 = vpop.f32.mrb[0].mxu0
    %231 = vdwg.mxu0
    %v232 = vrot.slane %v226, 4
    %v233 = vadd.f32 %v226, %v232
    %v234 = vrot.slane %v233, 2
    %v235 = vadd.f32 %v233, %v234
    %v236 = vrot.slane %v235, 1
    %v237 = vadd.f32 %v235, %v236
    %v238 = vrot.slane %v228, 4
    %v239 = vadd.f32 %v228, %v238
    %v240 = vrot.slane %v239, 2
    %v241 = vadd.f32 %v239, %v240
    %v242 = vrot.slane %v241, 1
    %v243 = vadd.f32 %v241, %v242
    %v244 = vrcp.pop 8.0
    %v245 = vmul.f32 %v237, %v244
    %v246 = vmul.f32 %v243, %v244
    %v247 = vld [vmem:[#allocation4] sm:$0xff]
    %v248 = vld [vmem:[#allocation4 + $0x8] sm:$0xff]
    %v249 = vld [vmem:[#allocation4 + $0x10] sm:$0xff]
    %v250 = vld [vmem:[#allocation4 + $0x18] sm:$0xff]
    %v251 = vld [vmem:[#allocation4 + $0x20] sm:$0xff]
    %v252 = vld [vmem:[#allocation4 + $0x28] sm:$0xff]
    %v253 = vld [vmem:[#allocation4 + $0x30] sm:$0xff]
    %v254 = vld [vmem:[#allocation4 + $0x38] sm:$0xff]
    %v255 = vld [vmem:[#allocation4 + $0x40] sm:$0xff]
    %v256 = vld [vmem:[#allocation4 + $0x48] sm:$0xff]
    %v257 = vld [vmem:[#allocation4 + $0x50] sm:$0xff]
    %v258 = vld [vmem:[#allocation4 + $0x58] sm:$0xff]
    %v259 = vld [vmem:[#allocation4 + $0x60] sm:$0xff]
    %v260 = vld [vmem:[#allocation4 + $0x68] sm:$0xff]
    %v261 = vld [vmem:[#allocation4 + $0x70] sm:$0xff]
    %v262 = vld [vmem:[#allocation4 + $0x78] sm:$0xff]
    %v263 = vld [vmem:[#allocation4 + $0x80] sm:$0xff]
    %v264 = vld [vmem:[#allocation4 + $0x88] sm:$0xff]
    %v265 = vld [vmem:[#allocation4 + $0x90] sm:$0xff]
    %v266 = vld [vmem:[#allocation4 + $0x98] sm:$0xff]
    %v267 = vld [vmem:[#allocation4 + $0xa0] sm:$0xff]
    %v268 = vld [vmem:[#allocation4 + $0xa8] sm:$0xff]
    %v269 = vld [vmem:[#allocation4 + $0xb0] sm:$0xff]
    %v270 = vld [vmem:[#allocation4 + $0xb8] sm:$0xff]
    %v271 = vld [vmem:[#allocation4 + $0xc0] sm:$0xff]
    %v272 = vld [vmem:[#allocation4 + $0xc8] sm:$0xff]
    %v273 = vld [vmem:[#allocation4 + $0xd0] sm:$0xff]
    %v274 = vld [vmem:[#allocation4 + $0xd8] sm:$0xff]
    %v275 = vld [vmem:[#allocation4 + $0xe0] sm:$0xff]
    %v276 = vld [vmem:[#allocation4 + $0xe8] sm:$0xff]
    %v277 = vld [vmem:[#allocation4 + $0xf0] sm:$0xff]
    %v278 = vld [vmem:[#allocation4 + $0xf8] sm:$0xff]
    %v279 = vld [vmem:[#allocation4 + $0x100] sm:$0xff]
    %v280 = vld [vmem:[#allocation4 + $0x108] sm:$0xff]
    %v281 = vld [vmem:[#allocation4 + $0x110] sm:$0xff]
    %v282 = vld [vmem:[#allocation4 + $0x118] sm:$0xff]
    %v283 = vld [vmem:[#allocation4 + $0x120] sm:$0xff]
    %v284 = vld [vmem:[#allocation4 + $0x128] sm:$0xff]
    %v285 = vld [vmem:[#allocation4 + $0x130] sm:$0xff]
    %v286 = vld [vmem:[#allocation4 + $0x138] sm:$0xff]
    %v287 = vld [vmem:[#allocation4 + $0x140] sm:$0xff]
    %v288 = vld [vmem:[#allocation4 + $0x148] sm:$0xff]
    %v289 = vld [vmem:[#allocation4 + $0x150] sm:$0xff]
    %v290 = vld [vmem:[#allocation4 + $0x158] sm:$0xff]
    %v291 = vld [vmem:[#allocation4 + $0x160] sm:$0xff]
    %v292 = vld [vmem:[#allocation4 + $0x168] sm:$0xff]
    %v293 = vld [vmem:[#allocation4 + $0x170] sm:$0xff]
    %v294 = vld [vmem:[#allocation4 + $0x178] sm:$0xff]
    %v295 = vld [vmem:[#allocation4 + $0x180] sm:$0xff]
    %v296 = vld [vmem:[#allocation4 + $0x188] sm:$0xff]
    %v297 = vld [vmem:[#allocation4 + $0x190] sm:$0xff]
    %v298 = vld [vmem:[#allocation4 + $0x198] sm:$0xff]
    %v299 = vld [vmem:[#allocation4 + $0x1a0] sm:$0xff]
    %v300 = vld [vmem:[#allocation4 + $0x1a8] sm:$0xff]
    %v301 = vld [vmem:[#allocation4 + $0x1b0] sm:$0xff]
    %v302 = vld [vmem:[#allocation4 + $0x1b8] sm:$0xff]
    %v303 = vld [vmem:[#allocation4 + $0x1c0] sm:$0xff]
    %v304 = vld [vmem:[#allocation4 + $0x1c8] sm:$0xff]
    %v305 = vld [vmem:[#allocation4 + $0x1d0] sm:$0xff]
    %v306 = vld [vmem:[#allocation4 + $0x1d8] sm:$0xff]
    %v307 = vld [vmem:[#allocation4 + $0x1e0] sm:$0xff]
    %v308 = vld [vmem:[#allocation4 + $0x1e8] sm:$0xff]
    %v309 = vld [vmem:[#allocation4 + $0x1f0] sm:$0xff]
    %v310 = vld [vmem:[#allocation4 + $0x1f8] sm:$0xff]
    %311 = vmatprep.subr.mxu0 %v248
    %312 = vmatpush1.msra.mxu0 %v247
    %313 = vmatprep.subr.mxu0 %v250
    %314 = vmatpush1.msra.mxu0 %v249
    %315 = vmatprep.subr.mxu0 %v252
    %316 = vmatpush1.msra.mxu0 %v251
    %317 = vmatprep.subr.mxu0 %v254
    %318 = vmatpush1.msra.mxu0 %v253
    %319 = vmatprep.subr.mxu0 %v256
    %320 = vmatpush1.msra.mxu0 %v255
    %321 = vmatprep.subr.mxu0 %v258
    %322 = vmatpush1.msra.mxu0 %v257
    %323 = vmatprep.subr.mxu0 %v260
    %324 = vmatpush1.msra.mxu0 %v259
    %325 = vmatprep.subr.mxu0 %v262
    %326 = vmatpush1.msra.mxu0 %v261
    %327 = vmatprep.subr.mxu0 %v264
    %328 = vmatpush1.msra.mxu0 %v263
    %329 = vmatprep.subr.mxu0 %v266
    %330 = vmatpush1.msra.mxu0 %v265
    %331 = vmatprep.subr.mxu0 %v268
    %332 = vmatpush1.msra.mxu0 %v267
    %333 = vmatprep.subr.mxu0 %v270
    %334 = vmatpush1.msra.mxu0 %v269
    %335 = vmatprep.subr.mxu0 %v272
    %336 = vmatpush1.msra.mxu0 %v271
    %337 = vmatprep.subr.mxu0 %v274
    %338 = vmatpush1.msra.mxu0 %v273
    %339 = vmatprep.subr.mxu0 %v276
    %340 = vmatpush1.msra.mxu0 %v275
    %341 = vmatprep.subr.mxu0 %v278
    %342 = vmatpush1.msra.mxu0 %v277
    %343 = vmatprep.subr.mxu0 %v280
    %344 = vmatpush1.msra.mxu0 %v279
    %345 = vmatprep.subr.mxu0 %v282
    %346 = vmatpush1.msra.mxu0 %v281
    %347 = vmatprep.subr.mxu0 %v284
    %348 = vmatpush1.msra.mxu0 %v283
    %349 = vmatprep.subr.mxu0 %v286
    %350 = vmatpush1.msra.mxu0 %v285
    %351 = vmatprep.subr.mxu0 %v288
    %352 = vmatpush1.msra.mxu0 %v287
    %353 = vmatprep.subr.mxu0 %v290
    %354 = vmatpush1.msra.mxu0 %v289
    %355 = vmatprep.subr.mxu0 %v292
    %356 = vmatpush1.msra.mxu0 %v291
    %357 = vmatprep.subr.mxu0 %v294
    %358 = vmatpush1.msra.mxu0 %v293
    %359 = vmatprep.subr.mxu0 %v296
    %360 = vmatpush1.msra.mxu0 %v295
    %361 = vmatprep.subr.mxu0 %v298
    %362 = vmatpush1.msra.mxu0 %v297
    %363 = vmatprep.subr.mxu0 %v300
    %364 = vmatpush1.msra.mxu0 %v299
    %365 = vmatprep.subr.mxu0 %v302
    %366 = vmatpush1.msra.mxu0 %v301
    %367 = vmatprep.subr.mxu0 %v304
    %368 = vmatpush1.msra.mxu0 %v303
    %369 = vmatprep.subr.mxu0 %v306
    %370 = vmatpush1.msra.mxu0 %v305
    %371 = vmatprep.subr.mxu0 %v308
    %372 = vmatpush1.msra.mxu0 %v307
    %373 = vmatprep.subr.mxu0 %v310
    %374 = vmatpush1.msra.mxu0 %v309
    %375 = vmatprep.mubr.f32.mxu0 %v246
    %376 = vmatmul.mubr.f32.gmra.mrb[0].mxu0 %v245
    %v377 = vpop.f32.mrb[0].mxu0
    %v378 = vadd.f32 0.0, %v377
    %v379 = vpop.f32.mrb[0].mxu0
    %v380 = vadd.f32 0.0, %v379
    %381 = vdwg.mxu0
    %v382 = vlaneseq
    %v383 = vshrl.u32 %v382, 7
    %v384 = vsub.s32 0, %v383
    %v385 = vrot.slane %v378, %v384
    %v386 = vlaneseq
    %v387 = vshrl.u32 %v386, 7
    %v388 = vsub.s32 0, %v387
    %v389 = vrot.slane %v380, %v388
    %v390 = vsub.f32 %v226, %v385
    %v391 = vsub.f32 %v228, %v389
    %v392 = vmul.f32 %v390, %v390
    %v393 = vmul.f32 %v391, %v391
    %v394 = vrot.slane %v392, 4
    %v395 = vadd.f32 %v392, %v394
    %v396 = vrot.slane %v395, 2
    %v397 = vadd.f32 %v395, %v396
    %v398 = vrot.slane %v397, 1
    %v399 = vadd.f32 %v397, %v398
    %v400 = vrot.slane %v393, 4
    %v401 = vadd.f32 %v393, %v400
    %v402 = vrot.slane %v401, 2
    %v403 = vadd.f32 %v401, %v402
    %v404 = vrot.slane %v403, 1
    %v405 = vadd.f32 %v403, %v404
    %v406 = vmul.f32 %v399, %v244
    %v407 = vmul.f32 %v405, %v244
    %408 = vmatprep.subr.mxu0 %v248
    %409 = vmatpush1.msra.mxu0 %v247
    %410 = vmatprep.subr.mxu0 %v250
    %411 = vmatpush1.msra.mxu0 %v249
    %412 = vmatprep.subr.mxu0 %v252
    %413 = vmatpush1.msra.mxu0 %v251
    %414 = vmatprep.subr.mxu0 %v254
    %415 = vmatpush1.msra.mxu0 %v253
    %416 = vmatprep.subr.mxu0 %v256
    %417 = vmatpush1.msra.mxu0 %v255
    %418 = vmatprep.subr.mxu0 %v258
    %419 = vmatpush1.msra.mxu0 %v257
    %420 = vmatprep.subr.mxu0 %v260
    %421 = vmatpush1.msra.mxu0 %v259
    %422 = vmatprep.subr.mxu0 %v262
    %423 = vmatpush1.msra.mxu0 %v261
    %424 = vmatprep.subr.mxu0 %v264
    %425 = vmatpush1.msra.mxu0 %v263
    %426 = vmatprep.subr.mxu0 %v266
    %427 = vmatpush1.msra.mxu0 %v265
    %428 = vmatprep.subr.mxu0 %v268
    %429 = vmatpush1.msra.mxu0 %v267
    %430 = vmatprep.subr.mxu0 %v270
    %431 = vmatpush1.msra.mxu0 %v269
    %432 = vmatprep.subr.mxu0 %v272
    %433 = vmatpush1.msra.mxu0 %v271
    %434 = vmatprep.subr.mxu0 %v274
    %435 = vmatpush1.msra.mxu0 %v273
    %436 = vmatprep.subr.mxu0 %v276
    %437 = vmatpush1.msra.mxu0 %v275
    %438 = vmatprep.subr.mxu0 %v278
    %439 = vmatpush1.msra.mxu0 %v277
    %440 = vmatprep.subr.mxu0 %v280
    %441 = vmatpush1.msra.mxu0 %v279
    %442 = vmatprep.subr.mxu0 %v282
    %443 = vmatpush1.msra.mxu0 %v281
    %444 = vmatprep.subr.mxu0 %v284
    %445 = vmatpush1.msra.mxu0 %v283
    %446 = vmatprep.subr.mxu0 %v286
    %447 = vmatpush1.msra.mxu0 %v285
    %448 = vmatprep.subr.mxu0 %v288
    %449 = vmatpush1.msra.mxu0 %v287
    %450 = vmatprep.subr.mxu0 %v290
    %451 = vmatpush1.msra.mxu0 %v289
    %452 = vmatprep.subr.mxu0 %v292
    %453 = vmatpush1.msra.mxu0 %v291
    %454 = vmatprep.subr.mxu0 %v294
    %455 = vmatpush1.msra.mxu0 %v293
    %456 = vmatprep.subr.mxu0 %v296
    %457 = vmatpush1.msra.mxu0 %v295
    %458 = vmatprep.subr.mxu0 %v298
    %459 = vmatpush1.msra.mxu0 %v297
    %460 = vmatprep.subr.mxu0 %v300
    %461 = vmatpush1.msra.mxu0 %v299
    %462 = vmatprep.subr.mxu0 %v302
    %463 = vmatpush1.msra.mxu0 %v301
    %464 = vmatprep.subr.mxu0 %v304
    %465 = vmatpush1.msra.mxu0 %v303
    %466 = vmatprep.subr.mxu0 %v306
    %467 = vmatpush1.msra.mxu0 %v305
    %468 = vmatprep.subr.mxu0 %v308
    %469 = vmatpush1.msra.mxu0 %v307
    %470 = vmatprep.subr.mxu0 %v310
    %471 = vmatpush1.msra.mxu0 %v309
    %472 = vmatprep.mubr.f32.mxu0 %v407
    %473 = vmatmul.mubr.f32.gmra.mrb[0].mxu0 %v406
    %v474 = vpop.f32.mrb[0].mxu0
    %v475 = vadd.f32 1e-05, %v474
    %v476 = vpop.f32.mrb[0].mxu0
    %v477 = vadd.f32 1e-05, %v476
    %478 = vdwg.mxu0
    %v479 = vrsqrt.pop %v475
    %v480 = vrsqrt.pop %v477
    %v481 = vlaneseq
    %v482 = vshrl.u32 %v481, 7
    %v483 = vsub.s32 0, %v482
    %v484 = vrot.slane %v479, %v483
    %v485 = vlaneseq
    %v486 = vshrl.u32 %v485, 7
    %v487 = vsub.s32 0, %v486
    %v488 = vrot.slane %v480, %v487
    %v489 = vmul.f32 %v390, %v484
    %v490 = vmul.f32 %v391, %v488
    %v491 = vld [vmem:[#allocation6] sm:$0x3]
    %v493 = vlaneseq
    %v494 = vshrl.u32 %v493, 7
    %v495 = vsub.s32 0, %v494
    %v496 = vrot.slane %v491, %v495
    %v497 = vlaneseq
    %v498 = vshrl.u32 %v497, 7
    %v499 = vsub.s32 1, %v498
    %v500 = vrot.slane %v491, %v499
    %v503 = vmul.f32 %v489, %v496
    %v504 = vmul.f32 %v490, %v500
    %v505 = vld [vmem:[#allocation7] sm:$0x3]
    %v507 = vlaneseq
    %v508 = vshrl.u32 %v507, 7
    %v509 = vsub.s32 0, %v508
    %v510 = vrot.slane %v505, %v509
    %v511 = vlaneseq
    %v512 = vshrl.u32 %v511, 7
    %v513 = vsub.s32 1, %v512
    %v514 = vrot.slane %v505, %v513
    %v517 = vadd.f32 %v503, %v510
    %v518 = vadd.f32 %v504, %v514
    %v519 = vmax.f32 %v517, 0.0
    %v520 = vmax.f32 %v518, 0.0
    %v521 = vpack.c.bf16 %v519, %v519
    %v522 = vpack.c.bf16 %v520, %v520
    %v525 = vunpack.c.l.b16 %v521
    %v526 = vunpack.c.l.b16 %v522
    %v527 = vpack.c.b16 %v526, %v525
    %529 = vst [vmem:[%s5] sm:$0xff] %v527
    // Predicated region
    $region38: #{generator_forward.7} parent=1 // pred_check
      _
    $region39: #{generator_forward.7} parent=1 // pred_check_branch
      %531 = sbr.rel (0) target = $region41
    $region40: #{generator_forward.7} parent=1 // pred_region
      _
    $region41: #{generator_forward.7} parent=1 // pred_fallthru
      _
    // Predicated region
    $region42: #{generator_forward.7} parent=1 // pred_check
      _
    $region43: #{generator_forward.7} parent=1 // pred_check_branch
      %533 = sbr.rel (0) target = $region45
    $region44: #{generator_forward.7} parent=1 // pred_region
      _
    $region45: #{generator_forward.7} parent=1 // pred_fallthru
      _
    %534 = vsyncpa [#allocation3], 1
    %535 = vsyncpa [#allocation5], 1
    %536 = vsyncpa [#allocation8], 1

// kernel: generator_forward.8
$region0: #{generator_forward.8}
  #allocation0 [shape = 'u32[]', space=smem, size = 0x4, offset = 0x4, fixed_abs, tag = 'smem constant byte address 0x4 - core index']
  #allocation1 [shape = 'u32[144,128]{1,0:T(1,128)}', space=vmem, size = 0x12000, scoped, tag = 'internal scratch']
  %s0 = inlined_call_operand.vmem [shape: bf16[32,576], index: 0, kind: input, shape index: {}]
  %s1 = inlined_call_operand.hbm [shape: bf16[576,128], index: 1, kind: input, shape index: {}]
  %s2 = inlined_call_operand.hbm [shape: f32[128,128], index: 2, kind: input, shape index: {}]
  %s3 = inlined_call_operand.hbm [shape: f32[1,128], index: 3, kind: input, shape index: {}]
  %s4 = inlined_call_operand.hbm [shape: f32[1,128], index: 4, kind: input, shape index: {}]
  %s5 = inlined_call_operand.vmem [shape: bf16[32,128], index: 5, kind: output, shape index: {}]
  %s6 = sld [smem:[#allocation0]]
  $region46: #{generator_forward.8} parent=0
    _
  %s8 = ssub.s32 1, %s6
  %s9 = scalar_select 0, %s8, %s6
  $region1: #{generator_forward.8} parent=0
    #allocation2 [shape = 'u8[147456]{0}', space=vmem, size = 0x24000, scoped, tag = 'input window, operand 1, single buffered']
    #allocation3 [shape = 's32[1]{0}', space=sflag, size = 0x4, scoped, tag = 'scoped memory for generator_forward.8']
    #allocation4 [shape = 'u8[65536]{0}', space=vmem, size = 0x10000, scoped, tag = 'input window, operand 2, single buffered']
    #allocation5 [shape = 's32[1]{0}', space=sflag, size = 0x4, scoped, tag = 'scoped memory for generator_forward.8']
    #allocation6 [shape = 'u8[512]{0}', space=vmem, size = 0x400, scoped, tag = 'input window, operand 3, single buffered']
    #allocation7 [shape = 'u8[512]{0}', space=vmem, size = 0x400, scoped, tag = 'input window, operand 4, single buffered']
    #allocation8 [shape = 's32[1]{0}', space=sflag, size = 0x4, scoped, tag = 'scoped memory for generator_forward.8']
    %10 = vsyncpa [#allocation3], 0
    %11 = vsyncpa [#allocation5], 0
    %12 = vsyncpa [#allocation8], 0
    // Predicated region
    $region2: #{generator_forward.8} parent=1 // pred_check
      _
    $region3: #{generator_forward.8} parent=1 // pred_check_branch
      %14 = sbr.rel (0) target = $region5
    $region4: #{generator_forward.8} parent=1 // pred_region
      _
    $region5: #{generator_forward.8} parent=1 // pred_fallthru
      _
    // Predicated region
    $region6: #{generator_forward.8} parent=1 // pred_check
      _
    $region7: #{generator_forward.8} parent=1 // pred_check_branch
      %16 = sbr.rel (0) target = $region9
    $region8: #{generator_forward.8} parent=1 // pred_region
      %s18 = ssub.s32 4608, 4608
      %19 = vsyncadd [#allocation3], %s18
      %s20 = sshll.u32 [#allocation2], 4
      %s21 = int_to_ptr.vmem [resolvable:$true] %s20
      %26 = dma.hbm_to_vmem [thread:$0]  %s1, 4608, %s21, [#allocation3], 64, 64, 4
    $region9: #{generator_forward.8} parent=1 // pred_fallthru
      _
    // Predicated region
    $region10: #{generator_forward.8} parent=1 // pred_check
      _
    $region11: #{generator_forward.8} parent=1 // pred_check_branch
      %28 = sbr.rel (0) target = $region13
    $region12: #{generator_forward.8} parent=1 // pred_region
      %s30 = ssub.s32 2048, 2048
      %31 = vsyncadd [#allocation5], %s30
      %s32 = sshll.u32 [#allocation4], 4
      %s33 = int_to_ptr.vmem [resolvable:$true] %s32
      %38 = dma.hbm_to_vmem [thread:$0]  %s2, 2048, %s33, [#allocation5], 128, 128, 8
    $region13: #{generator_forward.8} parent=1 // pred_fallthru
      _
    // Predicated region
    $region14: #{generator_forward.8} parent=1 // pred_check
      _
    $region15: #{generator_forward.8} parent=1 // pred_check_branch
      %40 = sbr.rel (0) target = $region17
    $region16: #{generator_forward.8} parent=1 // pred_region
      %s42 = ssub.s32 16, 16
      %43 = vsyncadd [#allocation5], %s42
      %s45 = sshll.u32 [#allocation6], 4
      %s46 = int_to_ptr.vmem [resolvable:$true] %s45
      %48 = dma.hbm_to_vmem [thread:$0]  %s3, 16, %s46, [#allocation5]
    $region17: #{generator_forward.8} parent=1 // pred_fallthru
      _
    // Predicated region
    $region18: #{generator_forward.8} parent=1 // pred_check
      _
    $region19: #{generator_forward.8} parent=1 // pred_check_branch
      %50 = sbr.rel (0) target = $region21
    $region20: #{generator_forward.8} parent=1 // pred_region
      %s52 = ssub.s32 16, 16
      %53 = vsyncadd [#allocation8], %s52
      %s55 = sshll.u32 [#allocation7], 4
      %s56 = int_to_ptr.vmem [resolvable:$true] %s55
      %58 = dma.hbm_to_vmem [thread:$0]  %s4, 16, %s56, [#allocation8]
    $region21: #{generator_forward.8} parent=1 // pred_fallthru
      _
    // Predicated region
    $region22: #{generator_forward.8} parent=1 // pred_check
      _
    $region23: #{generator_forward.8} parent=1 // pred_check_branch
      %60 = sbr.rel (0) target = $region25
    $region24: #{generator_forward.8} parent=1 // pred_region
      %61 = dma.done [#allocation3], 4608
    $region25: #{generator_forward.8} parent=1 // pred_fallthru
      _
    // Predicated region
    $region26: #{generator_forward.8} parent=1 // pred_check
      _
    $region27: #{generator_forward.8} parent=1 // pred_check_branch
      %63 = sbr.rel (0) target = $region29
    $region28: #{generator_forward.8} parent=1 // pred_region
      %64 = dma.done [#allocation5], 2048
    $region29: #{generator_forward.8} parent=1 // pred_fallthru
      _
    // Predicated region
    $region30: #{generator_forward.8} parent=1 // pred_check
      _
    $region31: #{generator_forward.8} parent=1 // pred_check_branch
      %66 = sbr.rel (0) target = $region33
    $region32: #{generator_forward.8} parent=1 // pred_region
      %67 = dma.done [#allocation5], 16
    $region33: #{generator_forward.8} parent=1 // pred_fallthru
      _
    // Predicated region
    $region34: #{generator_forward.8} parent=1 // pred_check
      _
    $region35: #{generator_forward.8} parent=1 // pred_check_branch
      %69 = sbr.rel (0) target = $region37
    $region36: #{generator_forward.8} parent=1 // pred_region
      %70 = dma.done [#allocation8], 16
    $region37: #{generator_forward.8} parent=1 // pred_fallthru
      _
    %v72 = vld [vmem:[%s0] sm:$0xff]
    %v73 = vld [vmem:[%s0 + $0x8] sm:$0xff]
    %v74 = vld [vmem:[%s0 + $0x10] sm:$0xf]
    %v75 = vld [vmem:[%s0 + $0x14] sm:$0xff]
    %v76 = vld [vmem:[%s0 + $0x1c] sm:$0xff]
    %v77 = vld [vmem:[%s0 + $0x24] sm:$0xf]
    %v78 = vld [vmem:[%s0 + $0x28] sm:$0xff]
    %v79 = vld [vmem:[%s0 + $0x30] sm:$0xff]
    %v80 = vld [vmem:[%s0 + $0x38] sm:$0xf]
    %v81 = vld [vmem:[%s0 + $0x3c] sm:$0xff]
    %v82 = vld [vmem:[%s0 + $0x44] sm:$0xff]
    %v83 = vld [vmem:[%s0 + $0x4c] sm:$0xf]
    %v84 = vld [vmem:[#allocation2] sm:$0xf]
    %v85 = vld [vmem:[#allocation2 + $0x4] sm:$0xf]
    %v86 = vld [vmem:[#allocation2 + $0x8] sm:$0xf]
    %v87 = vld [vmem:[#allocation2 + $0xc] sm:$0xf]
    %v88 = vld [vmem:[#allocation2 + $0x10] sm:$0xf]
    %v89 = vld [vmem:[#allocation2 + $0x14] sm:$0xf]
    %v90 = vld [vmem:[#allocation2 + $0x18] sm:$0xf]
    %v91 = vld [vmem:[#allocation2 + $0x1c] sm:$0xf]
    %v92 = vld [vmem:[#allocation2 + $0x20] sm:$0xf]
    %v93 = vld [vmem:[#allocation2 + $0x24] sm:$0xf]
    %v94 = vld [vmem:[#allocation2 + $0x28] sm:$0xf]
    %v95 = vld [vmem:[#allocation2 + $0x2c] sm:$0xf]
    %v96 = vld [vmem:[#allocation2 + $0x30] sm:$0xf]
    %v97 = vld [vmem:[#allocation2 + $0x34] sm:$0xf]
    %v98 = vld [vmem:[#allocation2 + $0x38] sm:$0xf]
    %v99 = vld [vmem:[#allocation2 + $0x3c] sm:$0xf]
    %v100 = vld [vmem:[#allocation2 + $0x40] sm:$0xf]
    %v101 = vld [vmem:[#allocation2 + $0x44] sm:$0xf]
    %v102 = vld [vmem:[#allocation2 + $0x48] sm:$0xf]
    %v103 = vld [vmem:[#allocation2 + $0x4c] sm:$0xf]
    %v104 = vld [vmem:[#allocation2 + $0x50] sm:$0xf]
    %v105 = vld [vmem:[#allocation2 + $0x54] sm:$0xf]
    %v106 = vld [vmem:[#allocation2 + $0x58] sm:$0xf]
    %v107 = vld [vmem:[#allocation2 + $0x5c] sm:$0xf]
    %v108 = vld [vmem:[#allocation2 + $0x60] sm:$0xf]
    %v109 = vld [vmem:[#allocation2 + $0x64] sm:$0xf]
    %v110 = vld [vmem:[#allocation2 + $0x68] sm:$0xf]
    %v111 = vld [vmem:[#allocation2 + $0x6c] sm:$0xf]
    %v112 = vld [vmem:[#allocation2 + $0x70] sm:$0xf]
    %v113 = vld [vmem:[#allocation2 + $0x74] sm:$0xf]
    %v114 = vld [vmem:[#allocation2 + $0x78] sm:$0xf]
    %v115 = vld [vmem:[#allocation2 + $0x7c] sm:$0xf]
    %v116 = vld [vmem:[#allocation2 + $0x80] sm:$0xf]
    %v117 = vld [vmem:[#allocation2 + $0x84] sm:$0xf]
    %v118 = vld [vmem:[#allocation2 + $0x88] sm:$0xf]
    %v119 = vld [vmem:[#allocation2 + $0x8c] sm:$0xf]
    %v120 = vld [vmem:[#allocation2 + $0x90] sm:$0xf]
    %v121 = vld [vmem:[#allocation2 + $0x94] sm:$0xf]
    %v122 = vld [vmem:[#allocation2 + $0x98] sm:$0xf]
    %v123 = vld [vmem:[#allocation2 + $0x9c] sm:$0xf]
    %v124 = vld [vmem:[#allocation2 + $0xa0] sm:$0xf]
    %v125 = vld [vmem:[#allocation2 + $0xa4] sm:$0xf]
    %v126 = vld [vmem:[#allocation2 + $0xa8] sm:$0xf]
    %v127 = vld [vmem:[#allocation2 + $0xac] sm:$0xf]
    %v128 = vld [vmem:[#allocation2 + $0xb0] sm:$0xf]
    %v129 = vld [vmem:[#allocation2 + $0xb4] sm:$0xf]
    %v130 = vld [vmem:[#allocation2 + $0xb8] sm:$0xf]
    %v131 = vld [vmem:[#allocation2 + $0xbc] sm:$0xf]
    %v132 = vld [vmem:[#allocation2 + $0xc0] sm:$0xf]
    %v133 = vld [vmem:[#allocation2 + $0xc4] sm:$0xf]
    %v134 = vld [vmem:[#allocation2 + $0xc8] sm:$0xf]
    %v135 = vld [vmem:[#allocation2 + $0xcc] sm:$0xf]
    %v136 = vld [vmem:[#allocation2 + $0xd0] sm:$0xf]
    %v137 = vld [vmem:[#allocation2 + $0xd4] sm:$0xf]
    %v138 = vld [vmem:[#allocation2 + $0xd8] sm:$0xf]
    %v139 = vld [vmem:[#allocation2 + $0xdc] sm:$0xf]
    %v140 = vld [vmem:[#allocation2 + $0xe0] sm:$0xf]
    %v141 = vld [vmem:[#allocation2 + $0xe4] sm:$0xf]
    %v142 = vld [vmem:[#allocation2 + $0xe8] sm:$0xf]
    %v143 = vld [vmem:[#allocation2 + $0xec] sm:$0xf]
    %v144 = vld [vmem:[#allocation2 + $0xf0] sm:$0xf]
    %v145 = vld [vmem:[#allocation2 + $0xf4] sm:$0xf]
    %v146 = vld [vmem:[#allocation2 + $0xf8] sm:$0xf]
    %v147 = vld [vmem:[#allocation2 + $0xfc] sm:$0xf]
    %v148 = vld [vmem:[#allocation2 + $0x100] sm:$0xf]
    %v149 = vld [vmem:[#allocation2 + $0x104] sm:$0xf]
    %v150 = vld [vmem:[#allocation2 + $0x108] sm:$0xf]
    %v151 = vld [vmem:[#allocation2 + $0x10c] sm:$0xf]
    %v152 = vld [vmem:[#allocation2 + $0x110] sm:$0xf]
    %v153 = vld [vmem:[#allocation2 + $0x114] sm:$0xf]
    %v154 = vld [vmem:[#allocation2 + $0x118] sm:$0xf]
    %v155 = vld [vmem:[#allocation2 + $0x11c] sm:$0xf]
    %v168 = vunpack.c.l.b16 %v72
    %v169 = vunpack.c.h.b16 %v72
    %v170 = vunpack.c.l.b16 %v73
    %v171 = vunpack.c.h.b16 %v73
    %v172 = vunpack.c.l.b16 %v74
    %v173 = vunpack.c.l.b16 %v75
    %v174 = vunpack.c.h.b16 %v75
    %v175 = vunpack.c.l.b16 %v76
    %v176 = vunpack.c.h.b16 %v76
    %v177 = vunpack.c.l.b16 %v77
    %v178 = vunpack.c.l.b16 %v78
    %v179 = vunpack.c.h.b16 %v78
    %v180 = vunpack.c.l.b16 %v79
    %v181 = vunpack.c.h.b16 %v79
    %v182 = vunpack.c.l.b16 %v80
    %v183 = vunpack.c.l.b16 %v81
    %v184 = vunpack.c.h.b16 %v81
    %v185 = vunpack.c.l.b16 %v82
    %v186 = vunpack.c.h.b16 %v82
    %v187 = vunpack.c.l.b16 %v83
    %v188 = vpack.c.b16 %v173, %v168
    %v189 = vpack.c.b16 %v174, %v169
    %v190 = vpack.c.b16 %v175, %v170
    %v191 = vpack.c.b16 %v176, %v171
    %v192 = vpack.c.b16 %v177, %v172
    %v193 = vpack.c.b16 %v183, %v178
    %v194 = vpack.c.b16 %v184, %v179
    %v195 = vpack.c.b16 %v185, %v180
    %v196 = vpack.c.b16 %v186, %v181
    %v197 = vpack.c.b16 %v187, %v182
    %v278 = vunpack.c.l.b16 %v84
    %v279 = vunpack.c.l.b16 %v85
    %v280 = vunpack.c.l.b16 %v86
    %v281 = vunpack.c.l.b16 %v87
    %v282 = vunpack.c.l.b16 %v88
    %v283 = vunpack.c.l.b16 %v89
    %v284 = vunpack.c.l.b16 %v90
    %v285 = vunpack.c.l.b16 %v91
    %v286 = vunpack.c.l.b16 %v92
    %v287 = vunpack.c.l.b16 %v93
    %v288 = vunpack.c.l.b16 %v94
    %v289 = vunpack.c.l.b16 %v95
    %v290 = vunpack.c.l.b16 %v96
    %v291 = vunpack.c.l.b16 %v97
    %v292 = vunpack.c.l.b16 %v98
    %v293 = vunpack.c.l.b16 %v99
    %v294 = vunpack.c.l.b16 %v100
    %v295 = vunpack.c.l.b16 %v101
    %v296 = vunpack.c.l.b16 %v102
    %v297 = vunpack.c.l.b16 %v103
    %v298 = vunpack.c.l.b16 %v104
    %v299 = vunpack.c.l.b16 %v105
    %v300 = vunpack.c.l.b16 %v106
    %v301 = vunpack.c.l.b16 %v107
    %v302 = vunpack.c.l.b16 %v108
    %v303 = vunpack.c.l.b16 %v109
    %v304 = vunpack.c.l.b16 %v110
    %v305 = vunpack.c.l.b16 %v111
    %v306 = vunpack.c.l.b16 %v112
    %v307 = vunpack.c.l.b16 %v113
    %v308 = vunpack.c.l.b16 %v114
    %v309 = vunpack.c.l.b16 %v115
    %v310 = vunpack.c.l.b16 %v116
    %v311 = vunpack.c.l.b16 %v117
    %v312 = vunpack.c.l.b16 %v118
    %v313 = vunpack.c.l.b16 %v119
    %v314 = vunpack.c.l.b16 %v120
    %v315 = vunpack.c.l.b16 %v121
    %v316 = vunpack.c.l.b16 %v122
    %v317 = vunpack.c.l.b16 %v123
    %v318 = vunpack.c.l.b16 %v124
    %v319 = vunpack.c.l.b16 %v125
    %v320 = vunpack.c.l.b16 %v126
    %v321 = vunpack.c.l.b16 %v127
    %v322 = vunpack.c.l.b16 %v128
    %v323 = vunpack.c.l.b16 %v129
    %v324 = vunpack.c.l.b16 %v130
    %v325 = vunpack.c.l.b16 %v131
    %v326 = vunpack.c.l.b16 %v132
    %v327 = vunpack.c.l.b16 %v133
    %v328 = vunpack.c.l.b16 %v134
    %v329 = vunpack.c.l.b16 %v135
    %v330 = vunpack.c.l.b16 %v136
    %v331 = vunpack.c.l.b16 %v137
    %v332 = vunpack.c.l.b16 %v138
    %v333 = vunpack.c.l.b16 %v139
    %v334 = vunpack.c.l.b16 %v140
    %v335 = vunpack.c.l.b16 %v141
    %v336 = vunpack.c.l.b16 %v142
    %v337 = vunpack.c.l.b16 %v143
    %v338 = vunpack.c.l.b16 %v144
    %v339 = vunpack.c.l.b16 %v145
    %v340 = vunpack.c.l.b16 %v146
    %v341 = vunpack.c.l.b16 %v147
    %v342 = vunpack.c.l.b16 %v148
    %v343 = vunpack.c.l.b16 %v149
    %v344 = vunpack.c.l.b16 %v150
    %v345 = vunpack.c.l.b16 %v151
    %v346 = vunpack.c.l.b16 %v152
    %v347 = vunpack.c.l.b16 %v153
    %v348 = vunpack.c.l.b16 %v154
    %v349 = vunpack.c.l.b16 %v155
    %v350 = vpack.c.b16 %v279, %v278
    %v351 = vpack.c.b16 %v281, %v280
    %v352 = vpack.c.b16 %v283, %v282
    %v353 = vpack.c.b16 %v285, %v284
    %v354 = vpack.c.b16 %v287, %v286
    %v355 = vpack.c.b16 %v289, %v288
    %v356 = vpack.c.b16 %v291, %v290
    %v357 = vpack.c.b16 %v293, %v292
    %v358 = vpack.c.b16 %v295, %v294
    %v359 = vpack.c.b16 %v297, %v296
    %v360 = vpack.c.b16 %v299, %v298
    %v361 = vpack.c.b16 %v301, %v300
    %v362 = vpack.c.b16 %v303, %v302
    %v363 = vpack.c.b16 %v305, %v304
    %v364 = vpack.c.b16 %v307, %v306
    %v365 = vpack.c.b16 %v309, %v308
    %v366 = vpack.c.b16 %v311, %v310
    %v367 = vpack.c.b16 %v313, %v312
    %v368 = vpack.c.b16 %v315, %v314
    %v369 = vpack.c.b16 %v317, %v316
    %v370 = vpack.c.b16 %v319, %v318
    %v371 = vpack.c.b16 %v321, %v320
    %v372 = vpack.c.b16 %v323, %v322
    %v373 = vpack.c.b16 %v325, %v324
    %v374 = vpack.c.b16 %v327, %v326
    %v375 = vpack.c.b16 %v329, %v328
    %v376 = vpack.c.b16 %v331, %v330
    %v377 = vpack.c.b16 %v333, %v332
    %v378 = vpack.c.b16 %v335, %v334
    %v379 = vpack.c.b16 %v337, %v336
    %v380 = vpack.c.b16 %v339, %v338
    %v381 = vpack.c.b16 %v341, %v340
    %v382 = vpack.c.b16 %v343, %v342
    %v383 = vpack.c.b16 %v345, %v344
    %v384 = vpack.c.b16 %v347, %v346
    %v385 = vpack.c.b16 %v349, %v348
    %vm422 = vcmask 523264
    %v424 = vsel %vm422, %v192, 0
    %v427 = vsel %vm422, %v197, 0
    %429 = vmatprep.subr.bf16.mxu0 0
    %430 = vmatpush1.bf16.msra.mxu0 %v350
    %431 = vmatprep.subr.bf16.mxu0 0
    %432 = vmatpush1.bf16.msra.mxu0 %v351
    %433 = vmatprep.subr.bf16.mxu0 0
    %434 = vmatpush1.bf16.msra.mxu0 %v352
    %435 = vmatprep.subr.bf16.mxu0 0
    %436 = vmatpush1.bf16.msra.mxu0 %v353
    %437 = vmatprep.subr.bf16.mxu0 0
    %438 = vmatpush1.bf16.msra.mxu0 %v354
    %439 = vmatprep.subr.bf16.mxu0 0
    %440 = vmatpush1.bf16.msra.mxu0 %v355
    %441 = vmatprep.subr.bf16.mxu0 0
    %442 = vmatpush1.bf16.msra.mxu0 %v356
    %443 = vmatprep.subr.bf16.mxu0 0
    %444 = vmatpush1.bf16.msra.mxu0 %v357
    %445 = vmatprep.subr.bf16.mxu0 0
    %446 = vmatpush1.bf16.msra.mxu0 %v358
    %447 = vmatprep.subr.bf16.mxu0 0
    %448 = vmatpush1.bf16.msra.mxu0 %v359
    %449 = vmatprep.subr.bf16.mxu0 0
    %450 = vmatpush1.bf16.msra.mxu0 %v360
    %451 = vmatprep.subr.bf16.mxu0 0
    %452 = vmatpush1.bf16.msra.mxu0 %v361
    %453 = vmatprep.subr.bf16.mxu0 0
    %454 = vmatpush1.bf16.msra.mxu0 %v362
    %455 = vmatprep.subr.bf16.mxu0 0
    %456 = vmatpush1.bf16.msra.mxu0 %v363
    %457 = vmatprep.subr.bf16.mxu0 0
    %458 = vmatpush1.bf16.msra.mxu0 %v364
    %459 = vmatprep.subr.bf16.mxu0 0
    %460 = vmatpush1.bf16.msra.mxu0 %v365
    %461 = vmatprep.mubr.bf16.mxu0 %v189
    %462 = vmatmul.mubr.bf16.gmra.mrb[0].mxu0 %v188
    %v463 = vpop.f32.mrb[0].mxu0
    %v464 = vadd.f32 0.0, %v463
    %v465 = vpop.f32.mrb[0].mxu0
    %v466 = vpop.f32.mrb[0].mxu0
    %v467 = vadd.f32 0.0, %v466
    %v468 = vpop.f32.mrb[0].mxu0
    %469 = vmatprep.mubr.bf16.mxu0 %v194
    %470 = vmatmul.mubr.bf16.gmra.mrb[0].mxu0 %v193
    %v471 = vpop.f32.mrb[0].mxu0
    %v472 = vadd.f32 0.0, %v471
    %v473 = vpop.f32.mrb[0].mxu0
    %v474 = vpop.f32.mrb[0].mxu0
    %v475 = vadd.f32 0.0, %v474
    %v476 = vpop.f32.mrb[0].mxu0
    %477 = vdwg.mxu0
    %478 = vmatprep.subr.bf16.mxu0 0
    %479 = vmatpush1.bf16.msra.mxu0 %v366
    %480 = vmatprep.subr.bf16.mxu0 0
    %481 = vmatpush1.bf16.msra.mxu0 %v367
    %482 = vmatprep.subr.bf16.mxu0 0
    %483 = vmatpush1.bf16.msra.mxu0 %v368
    %484 = vmatprep.subr.bf16.mxu0 0
    %485 = vmatpush1.bf16.msra.mxu0 %v369
    %486 = vmatprep.subr.bf16.mxu0 0
    %487 = vmatpush1.bf16.msra.mxu0 %v370
    %488 = vmatprep.subr.bf16.mxu0 0
    %489 = vmatpush1.bf16.msra.mxu0 %v371
    %490 = vmatprep.subr.bf16.mxu0 0
    %491 = vmatpush1.bf16.msra.mxu0 %v372
    %492 = vmatprep.subr.bf16.mxu0 0
    %493 = vmatpush1.bf16.msra.mxu0 %v373
    %494 = vmatprep.subr.bf16.mxu0 0
    %495 = vmatpush1.bf16.msra.mxu0 %v374
    %496 = vmatprep.subr.bf16.mxu0 0
    %497 = vmatpush1.bf16.msra.mxu0 %v375
    %498 = vmatprep.subr.bf16.mxu0 0
    %499 = vmatpush1.bf16.msra.mxu0 %v376
    %500 = vmatprep.subr.bf16.mxu0 0
    %501 = vmatpush1.bf16.msra.mxu0 %v377
    %502 = vmatprep.subr.bf16.mxu0 0
    %503 = vmatpush1.bf16.msra.mxu0 %v378
    %504 = vmatprep.subr.bf16.mxu0 0
    %505 = vmatpush1.bf16.msra.mxu0 %v379
    %506 = vmatprep.subr.bf16.mxu0 0
    %507 = vmatpush1.bf16.msra.mxu0 %v380
    %508 = vmatprep.subr.bf16.mxu0 0
    %509 = vmatpush1.bf16.msra.mxu0 %v381
    %510 = vmatprep.mubr.bf16.mxu0 %v191
    %511 = vmatmul.mubr.bf16.gmra.mrb[0].mxu0 %v190
    %v512 = vpop.f32.mrb[0].mxu0
    %v513 = vadd.f32 %v464, %v512
    %v514 = vpop.f32.mrb[0].mxu0
    %v515 = vpop.f32.mrb[0].mxu0
    %v516 = vadd.f32 %v467, %v515
    %v517 = vpop.f32.mrb[0].mxu0
    %518 = vmatprep.mubr.bf16.mxu0 %v196
    %519 = vmatmul.mubr.bf16.gmra.mrb[0].mxu0 %v195
    %v520 = vpop.f32.mrb[0].mxu0
    %v521 = vadd.f32 %v472, %v520
    %v522 = vpop.f32.mrb[0].mxu0
    %v523 = vpop.f32.mrb[0].mxu0
    %v524 = vadd.f32 %v475, %v523
    %v525 = vpop.f32.mrb[0].mxu0
    %526 = vdwg.mxu0
    %527 = vmatprep.subr.bf16.mxu0 0
    %528 = vmatpush1.bf16.msra.mxu0 %v382
    %529 = vmatprep.subr.bf16.mxu0 0
    %530 = vmatpush1.bf16.msra.mxu0 %v383
    %531 = vmatprep.subr.bf16.mxu0 0
    %532 = vmatpush1.bf16.msra.mxu0 %v384
    %533 = vmatprep.subr.bf16.mxu0 0
    %534 = vmatpush1.bf16.msra.mxu0 %v385
    %535 = vmatprep.subr.bf16.mxu0 0
    %536 = vmatpush1.bf16.msra.mxu0 0
    %537 = vmatprep.subr.bf16.mxu0 0
    %538 = vmatpush1.bf16.msra.mxu0 0
    %539 = vmatprep.subr.bf16.mxu0 0
    %540 = vmatpush1.bf16.msra.mxu0 0
    %541 = vmatprep.subr.bf16.mxu0 0
    %542 = vmatpush1.bf16.msra.mxu0 0
    %543 = vmatprep.subr.bf16.mxu0 0
    %544 = vmatpush1.bf16.msra.mxu0 0
    %545 = vmatprep.subr.bf16.mxu0 0
    %546 = vmatpush1.bf16.msra.mxu0 0
    %547 = vmatprep.subr.bf16.mxu0 0
    %548 = vmatpush1.bf16.msra.mxu0 0
    %549 = vmatprep.subr.bf16.mxu0 0
    %550 = vmatpush1.bf16.msra.mxu0 0
    %551 = vmatprep.subr.bf16.mxu0 0
    %552 = vmatpush1.bf16.msra.mxu0 0
    %553 = vmatprep.subr.bf16.mxu0 0
    %554 = vmatpush1.bf16.msra.mxu0 0
    %555 = vmatprep.subr.bf16.mxu0 0
    %556 = vmatpush1.bf16.msra.mxu0 0
    %557 = vmatprep.subr.bf16.mxu0 0
    %558 = vmatpush1.bf16.msra.mxu0 0
    %559 = vmatprep.mubr.bf16.mxu0 0
    %560 = vmatmul.mubr.bf16.gmra.mrb[0].mxu0 %v424
    %v561 = vpop.f32.mrb[0].mxu0
    %v562 = vadd.f32 %v513, %v561
    %v563 = vpop.f32.mrb[0].mxu0
    %v564 = vpop.f32.mrb[0].mxu0
    %v565 = vadd.f32 %v516, %v564
    %v566 = vpop.f32.mrb[0].mxu0
    %567 = vmatprep.mubr.bf16.mxu0 0
    %568 = vmatmul.mubr.bf16.gmra.mrb[0].mxu0 %v427
    %v569 = vpop.f32.mrb[0].mxu0
    %v570 = vadd.f32 %v521, %v569
    %v571 = vpop.f32.mrb[0].mxu0
    %v572 = vpop.f32.mrb[0].mxu0
    %v573 = vadd.f32 %v524, %v572
    %v574 = vpop.f32.mrb[0].mxu0
    %575 = vdwg.mxu0
    %v576 = vadd.f32 %v562, %v565
    %v577 = vadd.f32 %v576, %v570
    %v578 = vadd.f32 %v577, %v573
    %v579 = vrot.slane %v578, 4
    %v580 = vadd.f32 %v578, %v579
    %v581 = vrot.slane %v580, 2
    %v582 = vadd.f32 %v580, %v581
    %v583 = vrot.slane %v582, 1
    %v584 = vadd.f32 %v582, %v583
    %v585 = vrcp.pop 32.0
    %v586 = vmul.f32 %v584, %v585
    %v587 = vld [vmem:[#allocation4] sm:$0xff]
    %v588 = vld [vmem:[#allocation4 + $0x8] sm:$0xff]
    %v589 = vld [vmem:[#allocation4 + $0x10] sm:$0xff]
    %v590 = vld [vmem:[#allocation4 + $0x18] sm:$0xff]
    %v591 = vld [vmem:[#allocation4 + $0x20] sm:$0xff]
    %v592 = vld [vmem:[#allocation4 + $0x28] sm:$0xff]
    %v593 = vld [vmem:[#allocation4 + $0x30] sm:$0xff]
    %v594 = vld [vmem:[#allocation4 + $0x38] sm:$0xff]
    %v595 = vld [vmem:[#allocation4 + $0x40] sm:$0xff]
    %v596 = vld [vmem:[#allocation4 + $0x48] sm:$0xff]
    %v597 = vld [vmem:[#allocation4 + $0x50] sm:$0xff]
    %v598 = vld [vmem:[#allocation4 + $0x58] sm:$0xff]
    %v599 = vld [vmem:[#allocation4 + $0x60] sm:$0xff]
    %v600 = vld [vmem:[#allocation4 + $0x68] sm:$0xff]
    %v601 = vld [vmem:[#allocation4 + $0x70] sm:$0xff]
    %v602 = vld [vmem:[#allocation4 + $0x78] sm:$0xff]
    %603 = vmatprep.subr.mxu0 0.0
    %604 = vmatpush1.msra.mxu0 %v587
    %605 = vmatprep.subr.mxu0 0.0
    %606 = vmatpush1.msra.mxu0 %v588
    %607 = vmatprep.subr.mxu0 0.0
    %608 = vmatpush1.msra.mxu0 %v589
    %609 = vmatprep.subr.mxu0 0.0
    %610 = vmatpush1.msra.mxu0 %v590
    %611 = vmatprep.subr.mxu0 0.0
    %612 = vmatpush1.msra.mxu0 %v591
    %613 = vmatprep.subr.mxu0 0.0
    %614 = vmatpush1.msra.mxu0 %v592
    %615 = vmatprep.subr.mxu0 0.0
    %616 = vmatpush1.msra.mxu0 %v593
    %617 = vmatprep.subr.mxu0 0.0
    %618 = vmatpush1.msra.mxu0 %v594
    %619 = vmatprep.subr.mxu0 0.0
    %620 = vmatpush1.msra.mxu0 %v595
    %621 = vmatprep.subr.mxu0 0.0
    %622 = vmatpush1.msra.mxu0 %v596
    %623 = vmatprep.subr.mxu0 0.0
    %624 = vmatpush1.msra.mxu0 %v597
    %625 = vmatprep.subr.mxu0 0.0
    %626 = vmatpush1.msra.mxu0 %v598
    %627 = vmatprep.subr.mxu0 0.0
    %628 = vmatpush1.msra.mxu0 %v599
    %629 = vmatprep.subr.mxu0 0.0
    %630 = vmatpush1.msra.mxu0 %v600
    %631 = vmatprep.subr.mxu0 0.0
    %632 = vmatpush1.msra.mxu0 %v601
    %633 = vmatprep.subr.mxu0 0.0
    %634 = vmatpush1.msra.mxu0 %v602
    %635 = vmatprep.subr.mxu0 0.0
    %636 = vmatpush1.msra.mxu0 0.0
    %637 = vmatprep.subr.mxu0 0.0
    %638 = vmatpush1.msra.mxu0 0.0
    %639 = vmatprep.subr.mxu0 0.0
    %640 = vmatpush1.msra.mxu0 0.0
    %641 = vmatprep.subr.mxu0 0.0
    %642 = vmatpush1.msra.mxu0 0.0
    %643 = vmatprep.subr.mxu0 0.0
    %644 = vmatpush1.msra.mxu0 0.0
    %645 = vmatprep.subr.mxu0 0.0
    %646 = vmatpush1.msra.mxu0 0.0
    %647 = vmatprep.subr.mxu0 0.0
    %648 = vmatpush1.msra.mxu0 0.0
    %649 = vmatprep.subr.mxu0 0.0
    %650 = vmatpush1.msra.mxu0 0.0
    %651 = vmatprep.subr.mxu0 0.0
    %652 = vmatpush1.msra.mxu0 0.0
    %653 = vmatprep.subr.mxu0 0.0
    %654 = vmatpush1.msra.mxu0 0.0
    %655 = vmatprep.subr.mxu0 0.0
    %656 = vmatpush1.msra.mxu0 0.0
    %657 = vmatprep.subr.mxu0 0.0
    %658 = vmatpush1.msra.mxu0 0.0
    %659 = vmatprep.subr.mxu0 0.0
    %660 = vmatpush1.msra.mxu0 0.0
    %661 = vmatprep.subr.mxu0 0.0
    %662 = vmatpush1.msra.mxu0 0.0
    %663 = vmatprep.subr.mxu0 0.0
    %664 = vmatpush1.msra.mxu0 0.0
    %665 = vmatprep.subr.mxu0 0.0
    %666 = vmatpush1.msra.mxu0 0.0
    %667 = vmatprep.mubr.f32.mxu0 0.0
    %668 = vmatmul.mubr.f32.gmra.mrb[0].mxu0 %v586
    %v669 = vpop.f32.mrb[0].mxu0
    %v670 = vadd.f32 0.0, %v669
    %v671 = vpop.f32.mrb[0].mxu0
    %672 = vdwg.mxu0
    %v673 = vlaneseq
    %v674 = vshrl.u32 %v673, 7
    %v675 = vsub.s32 0, %v674
    %v676 = vrot.slane %v670, %v675
    %v677 = vsub.f32 %v562, %v676
    %v678 = vsub.f32 %v565, %v676
    %v679 = vsub.f32 %v570, %v676
    %v680 = vsub.f32 %v573, %v676
    %v681 = vmul.f32 %v677, %v677
    %v682 = vmul.f32 %v678, %v678
    %v683 = vmul.f32 %v679, %v679
    %v684 = vmul.f32 %v680, %v680
    %v685 = vadd.f32 %v681, %v682
    %v686 = vadd.f32 %v685, %v683
    %v687 = vadd.f32 %v686, %v684
    %v688 = vrot.slane %v687, 4
    %v689 = vadd.f32 %v687, %v688
    %v690 = vrot.slane %v689, 2
    %v691 = vadd.f32 %v689, %v690
    %v692 = vrot.slane %v691, 1
    %v693 = vadd.f32 %v691, %v692
    %v694 = vmul.f32 %v693, %v585
    %695 = vmatprep.subr.mxu0 0.0
    %696 = vmatpush1.msra.mxu0 %v587
    %697 = vmatprep.subr.mxu0 0.0
    %698 = vmatpush1.msra.mxu0 %v588
    %699 = vmatprep.subr.mxu0 0.0
    %700 = vmatpush1.msra.mxu0 %v589
    %701 = vmatprep.subr.mxu0 0.0
    %702 = vmatpush1.msra.mxu0 %v590
    %703 = vmatprep.subr.mxu0 0.0
    %704 = vmatpush1.msra.mxu0 %v591
    %705 = vmatprep.subr.mxu0 0.0
    %706 = vmatpush1.msra.mxu0 %v592
    %707 = vmatprep.subr.mxu0 0.0
    %708 = vmatpush1.msra.mxu0 %v593
    %709 = vmatprep.subr.mxu0 0.0
    %710 = vmatpush1.msra.mxu0 %v594
    %711 = vmatprep.subr.mxu0 0.0
    %712 = vmatpush1.msra.mxu0 %v595
    %713 = vmatprep.subr.mxu0 0.0
    %714 = vmatpush1.msra.mxu0 %v596
    %715 = vmatprep.subr.mxu0 0.0
    %716 = vmatpush1.msra.mxu0 %v597
    %717 = vmatprep.subr.mxu0 0.0
    %718 = vmatpush1.msra.mxu0 %v598
    %719 = vmatprep.subr.mxu0 0.0
    %720 = vmatpush1.msra.mxu0 %v599
    %721 = vmatprep.subr.mxu0 0.0
    %722 = vmatpush1.msra.mxu0 %v600
    %723 = vmatprep.subr.mxu0 0.0
    %724 = vmatpush1.msra.mxu0 %v601
    %725 = vmatprep.subr.mxu0 0.0
    %726 = vmatpush1.msra.mxu0 %v602
    %727 = vmatprep.subr.mxu0 0.0
    %728 = vmatpush1.msra.mxu0 0.0
    %729 = vmatprep.subr.mxu0 0.0
    %730 = vmatpush1.msra.mxu0 0.0
    %731 = vmatprep.subr.mxu0 0.0
    %732 = vmatpush1.msra.mxu0 0.0
    %733 = vmatprep.subr.mxu0 0.0
    %734 = vmatpush1.msra.mxu0 0.0
    %735 = vmatprep.subr.mxu0 0.0
    %736 = vmatpush1.msra.mxu0 0.0
    %737 = vmatprep.subr.mxu0 0.0
    %738 = vmatpush1.msra.mxu0 0.0
    %739 = vmatprep.subr.mxu0 0.0
    %740 = vmatpush1.msra.mxu0 0.0
    %741 = vmatprep.subr.mxu0 0.0
    %742 = vmatpush1.msra.mxu0 0.0
    %743 = vmatprep.subr.mxu0 0.0
    %744 = vmatpush1.msra.mxu0 0.0
    %745 = vmatprep.subr.mxu0 0.0
    %746 = vmatpush1.msra.mxu0 0.0
    %747 = vmatprep.subr.mxu0 0.0
    %748 = vmatpush1.msra.mxu0 0.0
    %749 = vmatprep.subr.mxu0 0.0
    %750 = vmatpush1.msra.mxu0 0.0
    %751 = vmatprep.subr.mxu0 0.0
    %752 = vmatpush1.msra.mxu0 0.0
    %753 = vmatprep.subr.mxu0 0.0
    %754 = vmatpush1.msra.mxu0 0.0
    %755 = vmatprep.subr.mxu0 0.0
    %756 = vmatpush1.msra.mxu0 0.0
    %757 = vmatprep.subr.mxu0 0.0
    %758 = vmatpush1.msra.mxu0 0.0
    %759 = vmatprep.mubr.f32.mxu0 0.0
    %760 = vmatmul.mubr.f32.gmra.mrb[0].mxu0 %v694
    %v761 = vpop.f32.mrb[0].mxu0
    %v762 = vadd.f32 1e-05, %v761
    %v763 = vpop.f32.mrb[0].mxu0
    %764 = vdwg.mxu0
    %v765 = vrsqrt.pop %v762
    %v766 = vlaneseq
    %v767 = vshrl.u32 %v766, 7
    %v768 = vsub.s32 0, %v767
    %v769 = vrot.slane %v765, %v768
    %v770 = vmul.f32 %v677, %v769
    %v771 = vmul.f32 %v678, %v769
    %v772 = vmul.f32 %v679, %v769
    %v773 = vmul.f32 %v680, %v769
    %v774 = vld [vmem:[#allocation6] sm:$0x1]
    %v776 = vlaneseq
    %v777 = vshrl.u32 %v776, 7
    %v778 = vsub.s32 0, %v777
    %v779 = vrot.slane %v774, %v778
    %v781 = vmul.f32 %v770, %v779
    %v782 = vmul.f32 %v771, %v779
    %v783 = vmul.f32 %v772, %v779
    %v784 = vmul.f32 %v773, %v779
    %v785 = vld [vmem:[#allocation7] sm:$0x1]
    %v787 = vlaneseq
    %v788 = vshrl.u32 %v787, 7
    %v789 = vsub.s32 0, %v788
    %v790 = vrot.slane %v785, %v789
    %v792 = vadd.f32 %v781, %v790
    %v793 = vadd.f32 %v782, %v790
    %v794 = vadd.f32 %v783, %v790
    %v795 = vadd.f32 %v784, %v790
    %v796 = vmax.f32 %v792, 0.0
    %v797 = vmax.f32 %v793, 0.0
    %v798 = vmax.f32 %v794, 0.0
    %v799 = vmax.f32 %v795, 0.0
    %v800 = vpack.c.bf16 %v797, %v796
    %v801 = vpack.c.bf16 %v799, %v798
    %v804 = vunpack.c.l.b16 %v800
    %v805 = vunpack.c.h.b16 %v800
    %v806 = vunpack.c.l.b16 %v801
    %v807 = vunpack.c.h.b16 %v801
    %v808 = vpack.c.b16 %v804, %v804
    %v809 = vpack.c.b16 %v805, %v805
    %v810 = vpack.c.b16 %v806, %v806
    %v811 = vpack.c.b16 %v807, %v807
    %816 = vst [vmem:[%s5] sm:$0xf] %v808
    %817 = vst [vmem:[%s5 + $0x4] sm:$0xf] %v809
    %818 = vst [vmem:[%s5 + $0x8] sm:$0xf] %v810
    %819 = vst [vmem:[%s5 + $0xc] sm:$0xf] %v811
    // Predicated region
    $region38: #{generator_forward.8} parent=1 // pred_check
      _
    $region39: #{generator_forward.8} parent=1 // pred_check_branch
      %821 = sbr.rel (0) target = $region41
    $region40: #{generator_forward.8} parent=1 // pred_region
      _
    $region41: #{generator_forward.8} parent=1 // pred_fallthru
      _
    // Predicated region
    $region42: #{generator_forward.8} parent=1 // pred_check
      _
    $region43: #{generator_forward.8} parent=1 // pred_check_branch
      %823 = sbr.rel (0) target = $region45
    $region44: #{generator_forward.8} parent=1 // pred_region
      _
    $region45: #{generator_forward.8} parent=1 // pred_fallthru
      _
    %824 = vsyncpa [#allocation3], 1
    %825 = vsyncpa [#allocation5], 1
    %826 = vsyncpa [#allocation8], 1

// kernel: generator_forward.9
$region0: #{generator_forward.9}
  #allocation0 [shape = 'u32[]', space=smem, size = 0x4, offset = 0x4, fixed_abs, tag = 'smem constant byte address 0x4 - core index']
  #allocation1 [shape = 'u32[144,128]{1,0:T(1,128)}', space=vmem, size = 0x12000, scoped, tag = 'internal scratch']
  %s0 = inlined_call_operand.vmem [shape: bf16[128,288], index: 0, kind: input, shape index: {}]
  %s1 = inlined_call_operand.vmem [shape: bf16[288,64], index: 1, kind: input, shape index: {}]
  %s2 = inlined_call_operand.hbm [shape: f32[64,64], index: 2, kind: input, shape index: {}]
  %s3 = inlined_call_operand.hbm [shape: f32[1,64], index: 3, kind: input, shape index: {}]
  %s4 = inlined_call_operand.hbm [shape: f32[1,64], index: 4, kind: input, shape index: {}]
  %s5 = inlined_call_operand.vmem [shape: bf16[128,64], index: 5, kind: output, shape index: {}]
  %s6 = sld [smem:[#allocation0]]
  $region42: #{generator_forward.9} parent=0
    _
  %s8 = ssub.s32 1, %s6
  %s9 = scalar_select 0, %s8, %s6
  $region1: #{generator_forward.9} parent=0
    #allocation2 [shape = 'u8[32768]{0}', space=vmem, size = 0x8000, scoped, tag = 'input window, operand 2, single buffered']
    #allocation3 [shape = 's32[1]{0}', space=sflag, size = 0x4, scoped, tag = 'scoped memory for generator_forward.9']
    #allocation4 [shape = 'u8[512]{0}', space=vmem, size = 0x400, scoped, tag = 'input window, operand 3, single buffered']
    #allocation5 [shape = 's32[1]{0}', space=sflag, size = 0x4, scoped, tag = 'scoped memory for generator_forward.9']
    #allocation6 [shape = 'u8[512]{0}', space=vmem, size = 0x400, scoped, tag = 'input window, operand 4, single buffered']
    %10 = vsyncpa [#allocation3], 0
    %11 = vsyncpa [#allocation5], 0
    // Predicated region
    $region2: #{generator_forward.9} parent=1 // pred_check
      _
    $region3: #{generator_forward.9} parent=1 // pred_check_branch
      %13 = sbr.rel (0) target = $region5
    $region4: #{generator_forward.9} parent=1 // pred_region
      _
    $region5: #{generator_forward.9} parent=1 // pred_fallthru
      _
    // Predicated region
    $region6: #{generator_forward.9} parent=1 // pred_check
      _
    $region7: #{generator_forward.9} parent=1 // pred_check_branch
      %15 = sbr.rel (0) target = $region9
    $region8: #{generator_forward.9} parent=1 // pred_region
      _
    $region9: #{generator_forward.9} parent=1 // pred_fallthru
      _
    // Predicated region
    $region10: #{generator_forward.9} parent=1 // pred_check
      _
    $region11: #{generator_forward.9} parent=1 // pred_check_branch
      %17 = sbr.rel (0) target = $region13
    $region12: #{generator_forward.9} parent=1 // pred_region
      %s19 = ssub.s32 1024, 1024
      %20 = vsyncadd [#allocation3], %s19
      %s21 = sshll.u32 [#allocation2], 4
      %s22 = int_to_ptr.vmem [resolvable:$true] %s21
      %27 = dma.hbm_to_vmem [thread:$0]  %s2, 1024, %s22, [#allocation3], 128, 128, 8
    $region13: #{generator_forward.9} parent=1 // pred_fallthru
      _
    // Predicated region
    $region14: #{generator_forward.9} parent=1 // pred_check
      _
    $region15: #{generator_forward.9} parent=1 // pred_check_branch
      %29 = sbr.rel (0) target = $region17
    $region16: #{generator_forward.9} parent=1 // pred_region
      %s31 = ssub.s32 16, 16
      %32 = vsyncadd [#allocation5], %s31
      %s34 = sshll.u32 [#allocation4], 4
      %s35 = int_to_ptr.vmem [resolvable:$true] %s34
      %37 = dma.hbm_to_vmem [thread:$0]  %s3, 16, %s35, [#allocation5]
    $region17: #{generator_forward.9} parent=1 // pred_fallthru
      _
    // Predicated region
    $region18: #{generator_forward.9} parent=1 // pred_check
      _
    $region19: #{generator_forward.9} parent=1 // pred_check_branch
      %39 = sbr.rel (0) target = $region21
    $region20: #{generator_forward.9} parent=1 // pred_region
      %s41 = ssub.s32 16, 16
      %42 = vsyncadd [#allocation5], %s41
      %s44 = sshll.u32 [#allocation6], 4
      %s45 = int_to_ptr.vmem [resolvable:$true] %s44
      %47 = dma.hbm_to_vmem [thread:$0]  %s4, 16, %s45, [#allocation5]
    $region21: #{generator_forward.9} parent=1 // pred_fallthru
      _
    // Predicated region
    $region22: #{generator_forward.9} parent=1 // pred_check
      _
    $region23: #{generator_forward.9} parent=1 // pred_check_branch
      %49 = sbr.rel (0) target = $region25
    $region24: #{generator_forward.9} parent=1 // pred_region
      %50 = dma.done [#allocation3], 1024
    $region25: #{generator_forward.9} parent=1 // pred_fallthru
      _
    // Predicated region
    $region26: #{generator_forward.9} parent=1 // pred_check
      _
    $region27: #{generator_forward.9} parent=1 // pred_check_branch
      %52 = sbr.rel (0) target = $region29
    $region28: #{generator_forward.9} parent=1 // pred_region
      %53 = dma.done [#allocation5], 16
    $region29: #{generator_forward.9} parent=1 // pred_fallthru
      _
    // Predicated region
    $region30: #{generator_forward.9} parent=1 // pred_check
      _
    $region31: #{generator_forward.9} parent=1 // pred_check_branch
      %55 = sbr.rel (0) target = $region33
    $region32: #{generator_forward.9} parent=1 // pred_region
      %56 = dma.done [#allocation5], 16
    $region33: #{generator_forward.9} parent=1 // pred_fallthru
      _
    %v58 = vld [vmem:[%s0] sm:$0xff]
    %v59 = vld [vmem:[%s0 + $0x8] sm:$0xf]
    %v60 = vld [vmem:[%s0 + $0xc] sm:$0xff]
    %v61 = vld [vmem:[%s0 + $0x14] sm:$0xf]
    %v62 = vld [vmem:[%s0 + $0x18] sm:$0xff]
    %v63 = vld [vmem:[%s0 + $0x20] sm:$0xf]
    %v64 = vld [vmem:[%s0 + $0x24] sm:$0xff]
    %v65 = vld [vmem:[%s0 + $0x2c] sm:$0xf]
    %v66 = vld [vmem:[%s0 + $0x30] sm:$0xff]
    %v67 = vld [vmem:[%s0 + $0x38] sm:$0xf]
    %v68 = vld [vmem:[%s0 + $0x3c] sm:$0xff]
    %v69 = vld [vmem:[%s0 + $0x44] sm:$0xf]
    %v70 = vld [vmem:[%s0 + $0x48] sm:$0xff]
    %v71 = vld [vmem:[%s0 + $0x50] sm:$0xf]
    %v72 = vld [vmem:[%s0 + $0x54] sm:$0xff]
    %v73 = vld [vmem:[%s0 + $0x5c] sm:$0xf]
    %v74 = vld [vmem:[%s0 + $0x60] sm:$0xff]
    %v75 = vld [vmem:[%s0 + $0x68] sm:$0xf]
    %v76 = vld [vmem:[%s0 + $0x6c] sm:$0xff]
    %v77 = vld [vmem:[%s0 + $0x74] sm:$0xf]
    %v78 = vld [vmem:[%s0 + $0x78] sm:$0xff]
    %v79 = vld [vmem:[%s0 + $0x80] sm:$0xf]
    %v80 = vld [vmem:[%s0 + $0x84] sm:$0xff]
    %v81 = vld [vmem:[%s0 + $0x8c] sm:$0xf]
    %v82 = vld [vmem:[%s0 + $0x90] sm:$0xff]
    %v83 = vld [vmem:[%s0 + $0x98] sm:$0xf]
    %v84 = vld [vmem:[%s0 + $0x9c] sm:$0xff]
    %v85 = vld [vmem:[%s0 + $0xa4] sm:$0xf]
    %v86 = vld [vmem:[%s0 + $0xa8] sm:$0xff]
    %v87 = vld [vmem:[%s0 + $0xb0] sm:$0xf]
    %v88 = vld [vmem:[%s0 + $0xb4] sm:$0xff]
    %v89 = vld [vmem:[%s0 + $0xbc] sm:$0xf]
    %v90 = vld [vmem:[%s1] sm:$0xf]
    %v91 = vld [vmem:[%s1 + $0x4] sm:$0xf]
    %v92 = vld [vmem:[%s1 + $0x8] sm:$0xf]
    %v93 = vld [vmem:[%s1 + $0xc] sm:$0xf]
    %v94 = vld [vmem:[%s1 + $0x10] sm:$0xf]
    %v95 = vld [vmem:[%s1 + $0x14] sm:$0xf]
    %v96 = vld [vmem:[%s1 + $0x18] sm:$0xf]
    %v97 = vld [vmem:[%s1 + $0x1c] sm:$0xf]
    %v98 = vld [vmem:[%s1 + $0x20] sm:$0xf]
    %v99 = vld [vmem:[%s1 + $0x24] sm:$0xf]
    %v100 = vld [vmem:[%s1 + $0x28] sm:$0xf]
    %v101 = vld [vmem:[%s1 + $0x2c] sm:$0xf]
    %v102 = vld [vmem:[%s1 + $0x30] sm:$0xf]
    %v103 = vld [vmem:[%s1 + $0x34] sm:$0xf]
    %v104 = vld [vmem:[%s1 + $0x38] sm:$0xf]
    %v105 = vld [vmem:[%s1 + $0x3c] sm:$0xf]
    %v106 = vld [vmem:[%s1 + $0x40] sm:$0xf]
    %v107 = vld [vmem:[%s1 + $0x44] sm:$0xf]
    %v108 = vld [vmem:[%s1 + $0x48] sm:$0xf]
    %v109 = vld [vmem:[%s1 + $0x4c] sm:$0xf]
    %v110 = vld [vmem:[%s1 + $0x50] sm:$0xf]
    %v111 = vld [vmem:[%s1 + $0x54] sm:$0xf]
    %v112 = vld [vmem:[%s1 + $0x58] sm:$0xf]
    %v113 = vld [vmem:[%s1 + $0x5c] sm:$0xf]
    %v114 = vld [vmem:[%s1 + $0x60] sm:$0xf]
    %v115 = vld [vmem:[%s1 + $0x64] sm:$0xf]
    %v116 = vld [vmem:[%s1 + $0x68] sm:$0xf]
    %v117 = vld [vmem:[%s1 + $0x6c] sm:$0xf]
    %v118 = vld [vmem:[%s1 + $0x70] sm:$0xf]
    %v119 = vld [vmem:[%s1 + $0x74] sm:$0xf]
    %v120 = vld [vmem:[%s1 + $0x78] sm:$0xf]
    %v121 = vld [vmem:[%s1 + $0x7c] sm:$0xf]
    %v122 = vld [vmem:[%s1 + $0x80] sm:$0xf]
    %v123 = vld [vmem:[%s1 + $0x84] sm:$0xf]
    %v124 = vld [vmem:[%s1 + $0x88] sm:$0xf]
    %v125 = vld [vmem:[%s1 + $0x8c] sm:$0xf]
    %v158 = vunpack.c.l.b16 %v58
    %v159 = vunpack.c.h.b16 %v58
    %v160 = vunpack.c.l.b16 %v59
    %v161 = vunpack.c.l.b16 %v60
    %v162 = vunpack.c.h.b16 %v60
    %v163 = vunpack.c.l.b16 %v61
    %v164 = vunpack.c.l.b16 %v62
    %v165 = vunpack.c.h.b16 %v62
    %v166 = vunpack.c.l.b16 %v63
    %v167 = vunpack.c.l.b16 %v64
    %v168 = vunpack.c.h.b16 %v64
    %v169 = vunpack.c.l.b16 %v65
    %v170 = vunpack.c.l.b16 %v66
    %v171 = vunpack.c.h.b16 %v66
    %v172 = vunpack.c.l.b16 %v67
    %v173 = vunpack.c.l.b16 %v68
    %v174 = vunpack.c.h.b16 %v68
    %v175 = vunpack.c.l.b16 %v69
    %v176 = vunpack.c.l.b16 %v70
    %v177 = vunpack.c.h.b16 %v70
    %v178 = vunpack.c.l.b16 %v71
    %v179 = vunpack.c.l.b16 %v72
    %v180 = vunpack.c.h.b16 %v72
    %v181 = vunpack.c.l.b16 %v73
    %v182 = vunpack.c.l.b16 %v74
    %v183 = vunpack.c.h.b16 %v74
    %v184 = vunpack.c.l.b16 %v75
    %v185 = vunpack.c.l.b16 %v76
    %v186 = vunpack.c.h.b16 %v76
    %v187 = vunpack.c.l.b16 %v77
    %v188 = vunpack.c.l.b16 %v78
    %v189 = vunpack.c.h.b16 %v78
    %v190 = vunpack.c.l.b16 %v79
    %v191 = vunpack.c.l.b16 %v80
    %v192 = vunpack.c.h.b16 %v80
    %v193 = vunpack.c.l.b16 %v81
    %v194 = vunpack.c.l.b16 %v82
    %v195 = vunpack.c.h.b16 %v82
    %v196 = vunpack.c.l.b16 %v83
    %v197 = vunpack.c.l.b16 %v84
    %v198 = vunpack.c.h.b16 %v84
    %v199 = vunpack.c.l.b16 %v85
    %v200 = vunpack.c.l.b16 %v86
    %v201 = vunpack.c.h.b16 %v86
    %v202 = vunpack.c.l.b16 %v87
    %v203 = vunpack.c.l.b16 %v88
    %v204 = vunpack.c.h.b16 %v88
    %v205 = vunpack.c.l.b16 %v89
    %v206 = vpack.c.b16 %v161, %v158
    %v207 = vpack.c.b16 %v162, %v159
    %v208 = vpack.c.b16 %v163, %v160
    %v209 = vpack.c.b16 %v167, %v164
    %v210 = vpack.c.b16 %v168, %v165
    %v211 = vpack.c.b16 %v169, %v166
    %v212 = vpack.c.b16 %v173, %v170
    %v213 = vpack.c.b16 %v174, %v171
    %v214 = vpack.c.b16 %v175, %v172
    %v215 = vpack.c.b16 %v179, %v176
    %v216 = vpack.c.b16 %v180, %v177
    %v217 = vpack.c.b16 %v181, %v178
    %v218 = vpack.c.b16 %v185, %v182
    %v219 = vpack.c.b16 %v186, %v183
    %v220 = vpack.c.b16 %v187, %v184
    %v221 = vpack.c.b16 %v191, %v188
    %v222 = vpack.c.b16 %v192, %v189
    %v223 = vpack.c.b16 %v193, %v190
    %v224 = vpack.c.b16 %v197, %v194
    %v225 = vpack.c.b16 %v198, %v195
    %v226 = vpack.c.b16 %v199, %v196
    %v227 = vpack.c.b16 %v203, %v200
    %v228 = vpack.c.b16 %v204, %v201
    %v229 = vpack.c.b16 %v205, %v202
    %v282 = vunpack.c.l.b16 %v90
    %v283 = vunpack.c.l.b16 %v91
    %v284 = vunpack.c.l.b16 %v92
    %v285 = vunpack.c.l.b16 %v93
    %v286 = vunpack.c.l.b16 %v94
    %v287 = vunpack.c.l.b16 %v95
    %v288 = vunpack.c.l.b16 %v96
    %v289 = vunpack.c.l.b16 %v97
    %v290 = vunpack.c.l.b16 %v98
    %v291 = vunpack.c.l.b16 %v99
    %v292 = vunpack.c.l.b16 %v100
    %v293 = vunpack.c.l.b16 %v101
    %v294 = vunpack.c.l.b16 %v102
    %v295 = vunpack.c.l.b16 %v103
    %v296 = vunpack.c.l.b16 %v104
    %v297 = vunpack.c.l.b16 %v105
    %v298 = vunpack.c.l.b16 %v106
    %v299 = vunpack.c.l.b16 %v107
    %v300 = vunpack.c.l.b16 %v108
    %v301 = vunpack.c.l.b16 %v109
    %v302 = vunpack.c.l.b16 %v110
    %v303 = vunpack.c.l.b16 %v111
    %v304 = vunpack.c.l.b16 %v112
    %v305 = vunpack.c.l.b16 %v113
    %v306 = vunpack.c.l.b16 %v114
    %v307 = vunpack.c.l.b16 %v115
    %v308 = vunpack.c.l.b16 %v116
    %v309 = vunpack.c.l.b16 %v117
    %v310 = vunpack.c.l.b16 %v118
    %v311 = vunpack.c.l.b16 %v119
    %v312 = vunpack.c.l.b16 %v120
    %v313 = vunpack.c.l.b16 %v121
    %v314 = vunpack.c.l.b16 %v122
    %v315 = vunpack.c.l.b16 %v123
    %v316 = vunpack.c.l.b16 %v124
    %v317 = vunpack.c.l.b16 %v125
    %v318 = vpack.c.b16 %v283, %v282
    %v319 = vpack.c.b16 %v285, %v284
    %v320 = vpack.c.b16 %v287, %v286
    %v321 = vpack.c.b16 %v289, %v288
    %v322 = vpack.c.b16 %v291, %v290
    %v323 = vpack.c.b16 %v293, %v292
    %v324 = vpack.c.b16 %v295, %v294
    %v325 = vpack.c.b16 %v297, %v296
    %v326 = vpack.c.b16 %v299, %v298
    %v327 = vpack.c.b16 %v301, %v300
    %v328 = vpack.c.b16 %v303, %v302
    %v329 = vpack.c.b16 %v305, %v304
    %v330 = vpack.c.b16 %v307, %v306
    %v331 = vpack.c.b16 %v309, %v308
    %v332 = vpack.c.b16 %v311, %v310
    %v333 = vpack.c.b16 %v313, %v312
    %v334 = vpack.c.b16 %v315, %v314
    %v335 = vpack.c.b16 %v317, %v316
    %vm354 = vcmask 261120
    %v356 = vsel %vm354, %v208, 0
    %v359 = vsel %vm354, %v211, 0
    %v362 = vsel %vm354, %v214, 0
    %v365 = vsel %vm354, %v217, 0
    %v368 = vsel %vm354, %v220, 0
    %v371 = vsel %vm354, %v223, 0
    %v374 = vsel %vm354, %v226, 0
    %v377 = vsel %vm354, %v229, 0
    %379 = vmatprep.subr.bf16.mxu0 0
    %380 = vmatpush1.bf16.msra.mxu0 %v318
    %381 = vmatprep.subr.bf16.mxu0 0
    %382 = vmatpush1.bf16.msra.mxu0 %v319
    %383 = vmatprep.subr.bf16.mxu0 0
    %384 = vmatpush1.bf16.msra.mxu0 %v320
    %385 = vmatprep.subr.bf16.mxu0 0
    %386 = vmatpush1.bf16.msra.mxu0 %v321
    %387 = vmatprep.subr.bf16.mxu0 0
    %388 = vmatpush1.bf16.msra.mxu0 %v322
    %389 = vmatprep.subr.bf16.mxu0 0
    %390 = vmatpush1.bf16.msra.mxu0 %v323
    %391 = vmatprep.subr.bf16.mxu0 0
    %392 = vmatpush1.bf16.msra.mxu0 %v324
    %393 = vmatprep.subr.bf16.mxu0 0
    %394 = vmatpush1.bf16.msra.mxu0 %v325
    %395 = vmatprep.subr.bf16.mxu0 0
    %396 = vmatpush1.bf16.msra.mxu0 %v326
    %397 = vmatprep.subr.bf16.mxu0 0
    %398 = vmatpush1.bf16.msra.mxu0 %v327
    %399 = vmatprep.subr.bf16.mxu0 0
    %400 = vmatpush1.bf16.msra.mxu0 %v328
    %401 = vmatprep.subr.bf16.mxu0 0
    %402 = vmatpush1.bf16.msra.mxu0 %v329
    %403 = vmatprep.subr.bf16.mxu0 0
    %404 = vmatpush1.bf16.msra.mxu0 %v330
    %405 = vmatprep.subr.bf16.mxu0 0
    %406 = vmatpush1.bf16.msra.mxu0 %v331
    %407 = vmatprep.subr.bf16.mxu0 0
    %408 = vmatpush1.bf16.msra.mxu0 %v332
    %409 = vmatprep.subr.bf16.mxu0 0
    %410 = vmatpush1.bf16.msra.mxu0 %v333
    %411 = vmatprep.mubr.bf16.mxu0 %v207
    %412 = vmatmul.mubr.bf16.gmra.mrb[0].mxu0 %v206
    %v413 = vpop.f32.mrb[0].mxu0
    %v414 = vadd.f32 0.0, %v413
    %v415 = vpop.f32.mrb[0].mxu0
    %v416 = vpop.f32.mrb[0].mxu0
    %v417 = vadd.f32 0.0, %v416
    %v418 = vpop.f32.mrb[0].mxu0
    %419 = vmatprep.mubr.bf16.mxu0 %v210
    %420 = vmatmul.mubr.bf16.gmra.mrb[0].mxu0 %v209
    %v421 = vpop.f32.mrb[0].mxu0
    %v422 = vadd.f32 0.0, %v421
    %v423 = vpop.f32.mrb[0].mxu0
    %v424 = vpop.f32.mrb[0].mxu0
    %v425 = vadd.f32 0.0, %v424
    %v426 = vpop.f32.mrb[0].mxu0
    %427 = vmatprep.mubr.bf16.mxu0 %v213
    %428 = vmatmul.mubr.bf16.gmra.mrb[0].mxu0 %v212
    %v429 = vpop.f32.mrb[0].mxu0
    %v430 = vadd.f32 0.0, %v429
    %v431 = vpop.f32.mrb[0].mxu0
    %v432 = vpop.f32.mrb[0].mxu0
    %v433 = vadd.f32 0.0, %v432
    %v434 = vpop.f32.mrb[0].mxu0
    %435 = vmatprep.mubr.bf16.mxu0 %v216
    %436 = vmatmul.mubr.bf16.gmra.mrb[0].mxu0 %v215
    %v437 = vpop.f32.mrb[0].mxu0
    %v438 = vadd.f32 0.0, %v437
    %v439 = vpop.f32.mrb[0].mxu0
    %v440 = vpop.f32.mrb[0].mxu0
    %v441 = vadd.f32 0.0, %v440
    %v442 = vpop.f32.mrb[0].mxu0
    %443 = vmatprep.mubr.bf16.mxu0 %v219
    %444 = vmatmul.mubr.bf16.gmra.mrb[0].mxu0 %v218
    %v445 = vpop.f32.mrb[0].mxu0
    %v446 = vadd.f32 0.0, %v445
    %v447 = vpop.f32.mrb[0].mxu0
    %v448 = vpop.f32.mrb[0].mxu0
    %v449 = vadd.f32 0.0, %v448
    %v450 = vpop.f32.mrb[0].mxu0
    %451 = vmatprep.mubr.bf16.mxu0 %v222
    %452 = vmatmul.mubr.bf16.gmra.mrb[0].mxu0 %v221
    %v453 = vpop.f32.mrb[0].mxu0
    %v454 = vadd.f32 0.0, %v453
    %v455 = vpop.f32.mrb[0].mxu0
    %v456 = vpop.f32.mrb[0].mxu0
    %v457 = vadd.f32 0.0, %v456
    %v458 = vpop.f32.mrb[0].mxu0
    %459 = vmatprep.mubr.bf16.mxu0 %v225
    %460 = vmatmul.mubr.bf16.gmra.mrb[0].mxu0 %v224
    %v461 = vpop.f32.mrb[0].mxu0
    %v462 = vadd.f32 0.0, %v461
    %v463 = vpop.f32.mrb[0].mxu0
    %v464 = vpop.f32.mrb[0].mxu0
    %v465 = vadd.f32 0.0, %v464
    %v466 = vpop.f32.mrb[0].mxu0
    %467 = vmatprep.mubr.bf16.mxu0 %v228
    %468 = vmatmul.mubr.bf16.gmra.mrb[0].mxu0 %v227
    %v469 = vpop.f32.mrb[0].mxu0
    %v470 = vadd.f32 0.0, %v469
    %v471 = vpop.f32.mrb[0].mxu0
    %v472 = vpop.f32.mrb[0].mxu0
    %v473 = vadd.f32 0.0, %v472
    %v474 = vpop.f32.mrb[0].mxu0
    %475 = vdwg.mxu0
    %476 = vmatprep.subr.bf16.mxu0 0
    %477 = vmatpush1.bf16.msra.mxu0 %v334
    %478 = vmatprep.subr.bf16.mxu0 0
    %479 = vmatpush1.bf16.msra.mxu0 %v335
    %480 = vmatprep.subr.bf16.mxu0 0
    %481 = vmatpush1.bf16.msra.mxu0 0
    %482 = vmatprep.subr.bf16.mxu0 0
    %483 = vmatpush1.bf16.msra.mxu0 0
    %484 = vmatprep.subr.bf16.mxu0 0
    %485 = vmatpush1.bf16.msra.mxu0 0
    %486 = vmatprep.subr.bf16.mxu0 0
    %487 = vmatpush1.bf16.msra.mxu0 0
    %488 = vmatprep.subr.bf16.mxu0 0
    %489 = vmatpush1.bf16.msra.mxu0 0
    %490 = vmatprep.subr.bf16.mxu0 0
    %491 = vmatpush1.bf16.msra.mxu0 0
    %492 = vmatprep.subr.bf16.mxu0 0
    %493 = vmatpush1.bf16.msra.mxu0 0
    %494 = vmatprep.subr.bf16.mxu0 0
    %495 = vmatpush1.bf16.msra.mxu0 0
    %496 = vmatprep.subr.bf16.mxu0 0
    %497 = vmatpush1.bf16.msra.mxu0 0
    %498 = vmatprep.subr.bf16.mxu0 0
    %499 = vmatpush1.bf16.msra.mxu0 0
    %500 = vmatprep.subr.bf16.mxu0 0
    %501 = vmatpush1.bf16.msra.mxu0 0
    %502 = vmatprep.subr.bf16.mxu0 0
    %503 = vmatpush1.bf16.msra.mxu0 0
    %504 = vmatprep.subr.bf16.mxu0 0
    %505 = vmatpush1.bf16.msra.mxu0 0
    %506 = vmatprep.subr.bf16.mxu0 0
    %507 = vmatpush1.bf16.msra.mxu0 0
    %508 = vmatprep.mubr.bf16.mxu0 0
    %509 = vmatmul.mubr.bf16.gmra.mrb[0].mxu0 %v356
    %v510 = vpop.f32.mrb[0].mxu0
    %v511 = vadd.f32 %v414, %v510
    %v512 = vpop.f32.mrb[0].mxu0
    %v513 = vpop.f32.mrb[0].mxu0
    %v514 = vadd.f32 %v417, %v513
    %v515 = vpop.f32.mrb[0].mxu0
    %516 = vmatprep.mubr.bf16.mxu0 0
    %517 = vmatmul.mubr.bf16.gmra.mrb[0].mxu0 %v359
    %v518 = vpop.f32.mrb[0].mxu0
    %v519 = vadd.f32 %v422, %v518
    %v520 = vpop.f32.mrb[0].mxu0
    %v521 = vpop.f32.mrb[0].mxu0
    %v522 = vadd.f32 %v425, %v521
    %v523 = vpop.f32.mrb[0].mxu0
    %524 = vmatprep.mubr.bf16.mxu0 0
    %525 = vmatmul.mubr.bf16.gmra.mrb[0].mxu0 %v362
    %v526 = vpop.f32.mrb[0].mxu0
    %v527 = vadd.f32 %v430, %v526
    %v528 = vpop.f32.mrb[0].mxu0
    %v529 = vpop.f32.mrb[0].mxu0
    %v530 = vadd.f32 %v433, %v529
    %v531 = vpop.f32.mrb[0].mxu0
    %532 = vmatprep.mubr.bf16.mxu0 0
    %533 = vmatmul.mubr.bf16.gmra.mrb[0].mxu0 %v365
    %v534 = vpop.f32.mrb[0].mxu0
    %v535 = vadd.f32 %v438, %v534
    %v536 = vpop.f32.mrb[0].mxu0
    %v537 = vpop.f32.mrb[0].mxu0
    %v538 = vadd.f32 %v441, %v537
    %v539 = vpop.f32.mrb[0].mxu0
    %540 = vmatprep.mubr.bf16.mxu0 0
    %541 = vmatmul.mubr.bf16.gmra.mrb[0].mxu0 %v368
    %v542 = vpop.f32.mrb[0].mxu0
    %v543 = vadd.f32 %v446, %v542
    %v544 = vpop.f32.mrb[0].mxu0
    %v545 = vpop.f32.mrb[0].mxu0
    %v546 = vadd.f32 %v449, %v545
    %v547 = vpop.f32.mrb[0].mxu0
    %548 = vmatprep.mubr.bf16.mxu0 0
    %549 = vmatmul.mubr.bf16.gmra.mrb[0].mxu0 %v371
    %v550 = vpop.f32.mrb[0].mxu0
    %v551 = vadd.f32 %v454, %v550
    %v552 = vpop.f32.mrb[0].mxu0
    %v553 = vpop.f32.mrb[0].mxu0
    %v554 = vadd.f32 %v457, %v553
    %v555 = vpop.f32.mrb[0].mxu0
    %556 = vmatprep.mubr.bf16.mxu0 0
    %557 = vmatmul.mubr.bf16.gmra.mrb[0].mxu0 %v374
    %v558 = vpop.f32.mrb[0].mxu0
    %v559 = vadd.f32 %v462, %v558
    %v560 = vpop.f32.mrb[0].mxu0
    %v561 = vpop.f32.mrb[0].mxu0
    %v562 = vadd.f32 %v465, %v561
    %v563 = vpop.f32.mrb[0].mxu0
    %564 = vmatprep.mubr.bf16.mxu0 0
    %565 = vmatmul.mubr.bf16.gmra.mrb[0].mxu0 %v377
    %v566 = vpop.f32.mrb[0].mxu0
    %v567 = vadd.f32 %v470, %v566
    %v568 = vpop.f32.mrb[0].mxu0
    %v569 = vpop.f32.mrb[0].mxu0
    %v570 = vadd.f32 %v473, %v569
    %v571 = vpop.f32.mrb[0].mxu0
    %572 = vdwg.mxu0
    %vm573 = vcmask 523264
    %v574 = vsel %vm573, %v511, 0.0
    %v575 = vsel %vm573, %v514, 0.0
    %v576 = vadd.f32 %v574, %v575
    %v577 = vsel %vm573, %v519, 0.0
    %v578 = vadd.f32 %v576, %v577
    %v579 = vsel %vm573, %v522, 0.0
    %v580 = vadd.f32 %v578, %v579
    %v581 = vsel %vm573, %v527, 0.0
    %v582 = vadd.f32 %v580, %v581
    %v583 = vsel %vm573, %v530, 0.0
    %v584 = vadd.f32 %v582, %v583
    %v585 = vsel %vm573, %v535, 0.0
    %v586 = vadd.f32 %v584, %v585
    %v587 = vsel %vm573, %v538, 0.0
    %v588 = vadd.f32 %v586, %v587
    %v589 = vsel %vm573, %v543, 0.0
    %v590 = vadd.f32 %v588, %v589
    %v591 = vsel %vm573, %v546, 0.0
    %v592 = vadd.f32 %v590, %v591
    %v593 = vsel %vm573, %v551, 0.0
    %v594 = vadd.f32 %v592, %v593
    %v595 = vsel %vm573, %v554, 0.0
    %v596 = vadd.f32 %v594, %v595
    %v597 = vsel %vm573, %v559, 0.0
    %v598 = vadd.f32 %v596, %v597
    %v599 = vsel %vm573, %v562, 0.0
    %v600 = vadd.f32 %v598, %v599
    %v601 = vsel %vm573, %v567, 0.0
    %v602 = vadd.f32 %v600, %v601
    %v603 = vsel %vm573, %v570, 0.0
    %v604 = vadd.f32 %v602, %v603
    %v605 = vrot.slane %v604, 4
    %v606 = vadd.f32 %v604, %v605
    %v607 = vrot.slane %v606, 2
    %v608 = vadd.f32 %v606, %v607
    %v609 = vrot.slane %v608, 1
    %v610 = vadd.f32 %v608, %v609
    %v611 = vrcp.pop 128.0
    %v612 = vmul.f32 %v610, %v611
    %v613 = vld [vmem:[#allocation2] sm:$0xff]
    %v614 = vld [vmem:[#allocation2 + $0x8] sm:$0xff]
    %v615 = vld [vmem:[#allocation2 + $0x10] sm:$0xff]
    %v616 = vld [vmem:[#allocation2 + $0x18] sm:$0xff]
    %v617 = vld [vmem:[#allocation2 + $0x20] sm:$0xff]
    %v618 = vld [vmem:[#allocation2 + $0x28] sm:$0xff]
    %v619 = vld [vmem:[#allocation2 + $0x30] sm:$0xff]
    %v620 = vld [vmem:[#allocation2 + $0x38] sm:$0xff]
    %v622 = vsel %vm573, %v612, 0
    %624 = vmatprep.subr.mxu0 0.0
    %625 = vmatpush1.msra.mxu0 %v613
    %626 = vmatprep.subr.mxu0 0.0
    %627 = vmatpush1.msra.mxu0 %v614
    %628 = vmatprep.subr.mxu0 0.0
    %629 = vmatpush1.msra.mxu0 %v615
    %630 = vmatprep.subr.mxu0 0.0
    %631 = vmatpush1.msra.mxu0 %v616
    %632 = vmatprep.subr.mxu0 0.0
    %633 = vmatpush1.msra.mxu0 %v617
    %634 = vmatprep.subr.mxu0 0.0
    %635 = vmatpush1.msra.mxu0 %v618
    %636 = vmatprep.subr.mxu0 0.0
    %637 = vmatpush1.msra.mxu0 %v619
    %638 = vmatprep.subr.mxu0 0.0
    %639 = vmatpush1.msra.mxu0 %v620
    %640 = vmatprep.subr.mxu0 0.0
    %641 = vmatpush1.msra.mxu0 0.0
    %642 = vmatprep.subr.mxu0 0.0
    %643 = vmatpush1.msra.mxu0 0.0
    %644 = vmatprep.subr.mxu0 0.0
    %645 = vmatpush1.msra.mxu0 0.0
    %646 = vmatprep.subr.mxu0 0.0
    %647 = vmatpush1.msra.mxu0 0.0
    %648 = vmatprep.subr.mxu0 0.0
    %649 = vmatpush1.msra.mxu0 0.0
    %650 = vmatprep.subr.mxu0 0.0
    %651 = vmatpush1.msra.mxu0 0.0
    %652 = vmatprep.subr.mxu0 0.0
    %653 = vmatpush1.msra.mxu0 0.0
    %654 = vmatprep.subr.mxu0 0.0
    %655 = vmatpush1.msra.mxu0 0.0
    %656 = vmatprep.subr.mxu0 0.0
    %657 = vmatpush1.msra.mxu0 0.0
    %658 = vmatprep.subr.mxu0 0.0
    %659 = vmatpush1.msra.mxu0 0.0
    %660 = vmatprep.subr.mxu0 0.0
    %661 = vmatpush1.msra.mxu0 0.0
    %662 = vmatprep.subr.mxu0 0.0
    %663 = vmatpush1.msra.mxu0 0.0
    %664 = vmatprep.subr.mxu0 0.0
    %665 = vmatpush1.msra.mxu0 0.0
    %666 = vmatprep.subr.mxu0 0.0
    %667 = vmatpush1.msra.mxu0 0.0
    %668 = vmatprep.subr.mxu0 0.0
    %669 = vmatpush1.msra.mxu0 0.0
    %670 = vmatprep.subr.mxu0 0.0
    %671 = vmatpush1.msra.mxu0 0.0
    %672 = vmatprep.subr.mxu0 0.0
    %673 = vmatpush1.msra.mxu0 0.0
    %674 = vmatprep.subr.mxu0 0.0
    %675 = vmatpush1.msra.mxu0 0.0
    %676 = vmatprep.subr.mxu0 0.0
    %677 = vmatpush1.msra.mxu0 0.0
    %678 = vmatprep.subr.mxu0 0.0
    %679 = vmatpush1.msra.mxu0 0.0
    %680 = vmatprep.subr.mxu0 0.0
    %681 = vmatpush1.msra.mxu0 0.0
    %682 = vmatprep.subr.mxu0 0.0
    %683 = vmatpush1.msra.mxu0 0.0
    %684 = vmatprep.subr.mxu0 0.0
    %685 = vmatpush1.msra.mxu0 0.0
    %686 = vmatprep.subr.mxu0 0.0
    %687 = vmatpush1.msra.mxu0 0.0
    %688 = vmatprep.mubr.f32.mxu0 0.0
    %689 = vmatmul.mubr.f32.gmra.mrb[0].mxu0 %v622
    %v690 = vpop.f32.mrb[0].mxu0
    %v691 = vadd.f32 0.0, %v690
    %v692 = vpop.f32.mrb[0].mxu0
    %693 = vdwg.mxu0
    %v694 = vlaneseq
    %v695 = vshrl.u32 %v694, 7
    %v696 = vsub.s32 0, %v695
    %v697 = vrot.slane %v691, %v696
    %v698 = vsub.f32 %v511, %v697
    %v699 = vsub.f32 %v514, %v697
    %v700 = vsub.f32 %v519, %v697
    %v701 = vsub.f32 %v522, %v697
    %v702 = vsub.f32 %v527, %v697
    %v703 = vsub.f32 %v530, %v697
    %v704 = vsub.f32 %v535, %v697
    %v705 = vsub.f32 %v538, %v697
    %v706 = vsub.f32 %v543, %v697
    %v707 = vsub.f32 %v546, %v697
    %v708 = vsub.f32 %v551, %v697
    %v709 = vsub.f32 %v554, %v697
    %v710 = vsub.f32 %v559, %v697
    %v711 = vsub.f32 %v562, %v697
    %v712 = vsub.f32 %v567, %v697
    %v713 = vsub.f32 %v570, %v697
    %v714 = vmul.f32 %v698, %v698
    %v715 = vmul.f32 %v699, %v699
    %v716 = vmul.f32 %v700, %v700
    %v717 = vmul.f32 %v701, %v701
    %v718 = vmul.f32 %v702, %v702
    %v719 = vmul.f32 %v703, %v703
    %v720 = vmul.f32 %v704, %v704
    %v721 = vmul.f32 %v705, %v705
    %v722 = vmul.f32 %v706, %v706
    %v723 = vmul.f32 %v707, %v707
    %v724 = vmul.f32 %v708, %v708
    %v725 = vmul.f32 %v709, %v709
    %v726 = vmul.f32 %v710, %v710
    %v727 = vmul.f32 %v711, %v711
    %v728 = vmul.f32 %v712, %v712
    %v729 = vmul.f32 %v713, %v713
    %v730 = vsel %vm573, %v714, 0.0
    %v731 = vsel %vm573, %v715, 0.0
    %v732 = vadd.f32 %v730, %v731
    %v733 = vsel %vm573, %v716, 0.0
    %v734 = vadd.f32 %v732, %v733
    %v735 = vsel %vm573, %v717, 0.0
    %v736 = vadd.f32 %v734, %v735
    %v737 = vsel %vm573, %v718, 0.0
    %v738 = vadd.f32 %v736, %v737
    %v739 = vsel %vm573, %v719, 0.0
    %v740 = vadd.f32 %v738, %v739
    %v741 = vsel %vm573, %v720, 0.0
    %v742 = vadd.f32 %v740, %v741
    %v743 = vsel %vm573, %v721, 0.0
    %v744 = vadd.f32 %v742, %v743
    %v745 = vsel %vm573, %v722, 0.0
    %v746 = vadd.f32 %v744, %v745
    %v747 = vsel %vm573, %v723, 0.0
    %v748 = vadd.f32 %v746, %v747
    %v749 = vsel %vm573, %v724, 0.0
    %v750 = vadd.f32 %v748, %v749
    %v751 = vsel %vm573, %v725, 0.0
    %v752 = vadd.f32 %v750, %v751
    %v753 = vsel %vm573, %v726, 0.0
    %v754 = vadd.f32 %v752, %v753
    %v755 = vsel %vm573, %v727, 0.0
    %v756 = vadd.f32 %v754, %v755
    %v757 = vsel %vm573, %v728, 0.0
    %v758 = vadd.f32 %v756, %v757
    %v759 = vsel %vm573, %v729, 0.0
    %v760 = vadd.f32 %v758, %v759
    %v761 = vrot.slane %v760, 4
    %v762 = vadd.f32 %v760, %v761
    %v763 = vrot.slane %v762, 2
    %v764 = vadd.f32 %v762, %v763
    %v765 = vrot.slane %v764, 1
    %v766 = vadd.f32 %v764, %v765
    %v767 = vmul.f32 %v766, %v611
    %v769 = vsel %vm573, %v767, 0
    %771 = vmatprep.subr.mxu0 0.0
    %772 = vmatpush1.msra.mxu0 %v613
    %773 = vmatprep.subr.mxu0 0.0
    %774 = vmatpush1.msra.mxu0 %v614
    %775 = vmatprep.subr.mxu0 0.0
    %776 = vmatpush1.msra.mxu0 %v615
    %777 = vmatprep.subr.mxu0 0.0
    %778 = vmatpush1.msra.mxu0 %v616
    %779 = vmatprep.subr.mxu0 0.0
    %780 = vmatpush1.msra.mxu0 %v617
    %781 = vmatprep.subr.mxu0 0.0
    %782 = vmatpush1.msra.mxu0 %v618
    %783 = vmatprep.subr.mxu0 0.0
    %784 = vmatpush1.msra.mxu0 %v619
    %785 = vmatprep.subr.mxu0 0.0
    %786 = vmatpush1.msra.mxu0 %v620
    %787 = vmatprep.subr.mxu0 0.0
    %788 = vmatpush1.msra.mxu0 0.0
    %789 = vmatprep.subr.mxu0 0.0
    %790 = vmatpush1.msra.mxu0 0.0
    %791 = vmatprep.subr.mxu0 0.0
    %792 = vmatpush1.msra.mxu0 0.0
    %793 = vmatprep.subr.mxu0 0.0
    %794 = vmatpush1.msra.mxu0 0.0
    %795 = vmatprep.subr.mxu0 0.0
    %796 = vmatpush1.msra.mxu0 0.0
    %797 = vmatprep.subr.mxu0 0.0
    %798 = vmatpush1.msra.mxu0 0.0
    %799 = vmatprep.subr.mxu0 0.0
    %800 = vmatpush1.msra.mxu0 0.0
    %801 = vmatprep.subr.mxu0 0.0
    %802 = vmatpush1.msra.mxu0 0.0
    %803 = vmatprep.subr.mxu0 0.0
    %804 = vmatpush1.msra.mxu0 0.0
    %805 = vmatprep.subr.mxu0 0.0
    %806 = vmatpush1.msra.mxu0 0.0
    %807 = vmatprep.subr.mxu0 0.0
    %808 = vmatpush1.msra.mxu0 0.0
    %809 = vmatprep.subr.mxu0 0.0
    %810 = vmatpush1.msra.mxu0 0.0
    %811 = vmatprep.subr.mxu0 0.0
    %812 = vmatpush1.msra.mxu0 0.0
    %813 = vmatprep.subr.mxu0 0.0
    %814 = vmatpush1.msra.mxu0 0.0
    %815 = vmatprep.subr.mxu0 0.0
    %816 = vmatpush1.msra.mxu0 0.0
    %817 = vmatprep.subr.mxu0 0.0
    %818 = vmatpush1.msra.mxu0 0.0
    %819 = vmatprep.subr.mxu0 0.0
    %820 = vmatpush1.msra.mxu0 0.0
    %821 = vmatprep.subr.mxu0 0.0
    %822 = vmatpush1.msra.mxu0 0.0
    %823 = vmatprep.subr.mxu0 0.0
    %824 = vmatpush1.msra.mxu0 0.0
    %825 = vmatprep.subr.mxu0 0.0
    %826 = vmatpush1.msra.mxu0 0.0
    %827 = vmatprep.subr.mxu0 0.0
    %828 = vmatpush1.msra.mxu0 0.0
    %829 = vmatprep.subr.mxu0 0.0
    %830 = vmatpush1.msra.mxu0 0.0
    %831 = vmatprep.subr.mxu0 0.0
    %832 = vmatpush1.msra.mxu0 0.0
    %833 = vmatprep.subr.mxu0 0.0
    %834 = vmatpush1.msra.mxu0 0.0
    %835 = vmatprep.mubr.f32.mxu0 0.0
    %836 = vmatmul.mubr.f32.gmra.mrb[0].mxu0 %v769
    %v837 = vpop.f32.mrb[0].mxu0
    %v838 = vadd.f32 1e-05, %v837
    %v839 = vpop.f32.mrb[0].mxu0
    %840 = vdwg.mxu0
    %v841 = vrsqrt.pop %v838
    %v842 = vlaneseq
    %v843 = vshrl.u32 %v842, 7
    %v844 = vsub.s32 0, %v843
    %v845 = vrot.slane %v841, %v844
    %v846 = vmul.f32 %v698, %v845
    %v847 = vmul.f32 %v699, %v845
    %v848 = vmul.f32 %v700, %v845
    %v849 = vmul.f32 %v701, %v845
    %v850 = vmul.f32 %v702, %v845
    %v851 = vmul.f32 %v703, %v845
    %v852 = vmul.f32 %v704, %v845
    %v853 = vmul.f32 %v705, %v845
    %v854 = vmul.f32 %v706, %v845
    %v855 = vmul.f32 %v707, %v845
    %v856 = vmul.f32 %v708, %v845
    %v857 = vmul.f32 %v709, %v845
    %v858 = vmul.f32 %v710, %v845
    %v859 = vmul.f32 %v711, %v845
    %v860 = vmul.f32 %v712, %v845
    %v861 = vmul.f32 %v713, %v845
    %v862 = vld [vmem:[#allocation4] sm:$0x1]
    %v864 = vlaneseq
    %v865 = vshrl.u32 %v864, 7
    %v866 = vsub.s32 0, %v865
    %v867 = vrot.slane %v862, %v866
    %v869 = vmul.f32 %v846, %v867
    %v870 = vmul.f32 %v847, %v867
    %v871 = vmul.f32 %v848, %v867
    %v872 = vmul.f32 %v849, %v867
    %v873 = vmul.f32 %v850, %v867
    %v874 = vmul.f32 %v851, %v867
    %v875 = vmul.f32 %v852, %v867
    %v876 = vmul.f32 %v853, %v867
    %v877 = vmul.f32 %v854, %v867
    %v878 = vmul.f32 %v855, %v867
    %v879 = vmul.f32 %v856, %v867
    %v880 = vmul.f32 %v857, %v867
    %v881 = vmul.f32 %v858, %v867
    %v882 = vmul.f32 %v859, %v867
    %v883 = vmul.f32 %v860, %v867
    %v884 = vmul.f32 %v861, %v867
    %v885 = vld [vmem:[#allocation6] sm:$0x1]
    %v887 = vlaneseq
    %v888 = vshrl.u32 %v887, 7
    %v889 = vsub.s32 0, %v888
    %v890 = vrot.slane %v885, %v889
    %v892 = vadd.f32 %v869, %v890
    %v893 = vadd.f32 %v870, %v890
    %v894 = vadd.f32 %v871, %v890
    %v895 = vadd.f32 %v872, %v890
    %v896 = vadd.f32 %v873, %v890
    %v897 = vadd.f32 %v874, %v890
    %v898 = vadd.f32 %v875, %v890
    %v899 = vadd.f32 %v876, %v890
    %v900 = vadd.f32 %v877, %v890
    %v901 = vadd.f32 %v878, %v890
    %v902 = vadd.f32 %v879, %v890
    %v903 = vadd.f32 %v880, %v890
    %v904 = vadd.f32 %v881, %v890
    %v905 = vadd.f32 %v882, %v890
    %v906 = vadd.f32 %v883, %v890
    %v907 = vadd.f32 %v884, %v890
    %v908 = vmax.f32 %v892, 0.0
    %v909 = vmax.f32 %v893, 0.0
    %v910 = vmax.f32 %v894, 0.0
    %v911 = vmax.f32 %v895, 0.0
    %v912 = vmax.f32 %v896, 0.0
    %v913 = vmax.f32 %v897, 0.0
    %v914 = vmax.f32 %v898, 0.0
    %v915 = vmax.f32 %v899, 0.0
    %v916 = vmax.f32 %v900, 0.0
    %v917 = vmax.f32 %v901, 0.0
    %v918 = vmax.f32 %v902, 0.0
    %v919 = vmax.f32 %v903, 0.0
    %v920 = vmax.f32 %v904, 0.0
    %v921 = vmax.f32 %v905, 0.0
    %v922 = vmax.f32 %v906, 0.0
    %v923 = vmax.f32 %v907, 0.0
    %v924 = vpack.c.bf16 %v909, %v908
    %v925 = vpack.c.bf16 %v911, %v910
    %v926 = vpack.c.bf16 %v913, %v912
    %v927 = vpack.c.bf16 %v915, %v914
    %v928 = vpack.c.bf16 %v917, %v916
    %v929 = vpack.c.bf16 %v919, %v918
    %v930 = vpack.c.bf16 %v921, %v920
    %v931 = vpack.c.bf16 %v923, %v922
    %v940 = vunpack.c.l.b16 %v924
    %v941 = vunpack.c.h.b16 %v924
    %v942 = vunpack.c.l.b16 %v925
    %v943 = vunpack.c.h.b16 %v925
    %v944 = vunpack.c.l.b16 %v926
    %v945 = vunpack.c.h.b16 %v926
    %v946 = vunpack.c.l.b16 %v927
    %v947 = vunpack.c.h.b16 %v927
    %v948 = vunpack.c.l.b16 %v928
    %v949 = vunpack.c.h.b16 %v928
    %v950 = vunpack.c.l.b16 %v929
    %v951 = vunpack.c.h.b16 %v929
    %v952 = vunpack.c.l.b16 %v930
    %v953 = vunpack.c.h.b16 %v930
    %v954 = vunpack.c.l.b16 %v931
    %v955 = vunpack.c.h.b16 %v931
    %v956 = vpack.c.b16 %v940, %v940
    %v957 = vpack.c.b16 %v941, %v941
    %v958 = vpack.c.b16 %v942, %v942
    %v959 = vpack.c.b16 %v943, %v943
    %v960 = vpack.c.b16 %v944, %v944
    %v961 = vpack.c.b16 %v945, %v945
    %v962 = vpack.c.b16 %v946, %v946
    %v963 = vpack.c.b16 %v947, %v947
    %v964 = vpack.c.b16 %v948, %v948
    %v965 = vpack.c.b16 %v949, %v949
    %v966 = vpack.c.b16 %v950, %v950
    %v967 = vpack.c.b16 %v951, %v951
    %v968 = vpack.c.b16 %v952, %v952
    %v969 = vpack.c.b16 %v953, %v953
    %v970 = vpack.c.b16 %v954, %v954
    %v971 = vpack.c.b16 %v955, %v955
    %vm988 = vcmask 519168
    %989 = vst.msk [vmem:[%s5] sm:$0xf] %vm988, %v956
    %990 = vst.msk [vmem:[%s5 + $0x4] sm:$0xf] %vm988, %v957
    %991 = vst.msk [vmem:[%s5 + $0x8] sm:$0xf] %vm988, %v958
    %992 = vst.msk [vmem:[%s5 + $0xc] sm:$0xf] %vm988, %v959
    %993 = vst.msk [vmem:[%s5 + $0x10] sm:$0xf] %vm988, %v960
    %994 = vst.msk [vmem:[%s5 + $0x14] sm:$0xf] %vm988, %v961
    %995 = vst.msk [vmem:[%s5 + $0x18] sm:$0xf] %vm988, %v962
    %996 = vst.msk [vmem:[%s5 + $0x1c] sm:$0xf] %vm988, %v963
    %997 = vst.msk [vmem:[%s5 + $0x20] sm:$0xf] %vm988, %v964
    %998 = vst.msk [vmem:[%s5 + $0x24] sm:$0xf] %vm988, %v965
    %999 = vst.msk [vmem:[%s5 + $0x28] sm:$0xf] %vm988, %v966
    %1000 = vst.msk [vmem:[%s5 + $0x2c] sm:$0xf] %vm988, %v967
    %1001 = vst.msk [vmem:[%s5 + $0x30] sm:$0xf] %vm988, %v968
    %1002 = vst.msk [vmem:[%s5 + $0x34] sm:$0xf] %vm988, %v969
    %1003 = vst.msk [vmem:[%s5 + $0x38] sm:$0xf] %vm988, %v970
    %1004 = vst.msk [vmem:[%s5 + $0x3c] sm:$0xf] %vm988, %v971
    // Predicated region
    $region34: #{generator_forward.9} parent=1 // pred_check
      _
    $region35: #{generator_forward.9} parent=1 // pred_check_branch
      %1006 = sbr.rel (0) target = $region37
    $region36: #{generator_forward.9} parent=1 // pred_region
      _
    $region37: #{generator_forward.9} parent=1 // pred_fallthru
      _
    // Predicated region
    $region38: #{generator_forward.9} parent=1 // pred_check
      _
    $region39: #{generator_forward.9} parent=1 // pred_check_branch
      %1008 = sbr.rel (0) target = $region41
    $region40: #{generator_forward.9} parent=1 // pred_region
      _
    $region41: #{generator_forward.9} parent=1 // pred_fallthru
      _
    %1009 = vsyncpa [#allocation3], 1
    %1010 = vsyncpa [#allocation5], 1

// kernel: generator_forward.10
$region0: #{generator_forward.10}
  #allocation0 [shape = 'u32[]', space=smem, size = 0x4, offset = 0x4, fixed_abs, tag = 'smem constant byte address 0x4 - core index']
  #allocation1 [shape = 'u32[144,128]{1,0:T(1,128)}', space=vmem, size = 0x12000, scoped, tag = 'internal scratch']
  %s0 = inlined_call_operand.vmem [shape: bf16[512,144], index: 0, kind: input, shape index: {}]
  %s1 = inlined_call_operand.vmem [shape: bf16[144,32], index: 1, kind: input, shape index: {}]
  %s2 = inlined_call_operand.vmem [shape: f32[32,32], index: 2, kind: input, shape index: {}]
  %s3 = inlined_call_operand.vmem [shape: f32[1,32], index: 3, kind: input, shape index: {}]
  %s4 = inlined_call_operand.vmem [shape: f32[1,32], index: 4, kind: input, shape index: {}]
  %s5 = inlined_call_operand.vmem [shape: bf16[512,32], index: 5, kind: output, shape index: {}]
  %s6 = sld [smem:[#allocation0]]
  $region30: #{generator_forward.10} parent=0
    _
  %s8 = ssub.s32 1, %s6
  %s9 = scalar_select 0, %s8, %s6
  // Predicated region
  $region2: #{generator_forward.10} parent=0 // pred_check
    _
  $region3: #{generator_forward.10} parent=0 // pred_check_branch
    %11 = sbr.rel (0) target = $region5
  $region4: #{generator_forward.10} parent=0 // pred_region
    _
  $region5: #{generator_forward.10} parent=0 // pred_fallthru
    _
  // Predicated region
  $region6: #{generator_forward.10} parent=0 // pred_check
    _
  $region7: #{generator_forward.10} parent=0 // pred_check_branch
    %13 = sbr.rel (0) target = $region9
  $region8: #{generator_forward.10} parent=0 // pred_region
    _
  $region9: #{generator_forward.10} parent=0 // pred_fallthru
    _
  // Predicated region
  $region10: #{generator_forward.10} parent=0 // pred_check
    _
  $region11: #{generator_forward.10} parent=0 // pred_check_branch
    %15 = sbr.rel (0) target = $region13
  $region12: #{generator_forward.10} parent=0 // pred_region
    _
  $region13: #{generator_forward.10} parent=0 // pred_fallthru
    _
  // Predicated region
  $region14: #{generator_forward.10} parent=0 // pred_check
    _
  $region15: #{generator_forward.10} parent=0 // pred_check_branch
    %17 = sbr.rel (0) target = $region17
  $region16: #{generator_forward.10} parent=0 // pred_region
    _
  $region17: #{generator_forward.10} parent=0 // pred_fallthru
    _
  // Predicated region
  $region18: #{generator_forward.10} parent=0 // pred_check
    _
  $region19: #{generator_forward.10} parent=0 // pred_check_branch
    %19 = sbr.rel (0) target = $region21
  $region20: #{generator_forward.10} parent=0 // pred_region
    _
  $region21: #{generator_forward.10} parent=0 // pred_fallthru
    _
  %v21 = vld [vmem:[%s0] sm:$0xff]
  %v22 = vld [vmem:[%s0 + $0x8] sm:$0xff]
  %v23 = vld [vmem:[%s0 + $0x10] sm:$0xff]
  %v24 = vld [vmem:[%s0 + $0x18] sm:$0xff]
  %v25 = vld [vmem:[%s0 + $0x20] sm:$0xff]
  %v26 = vld [vmem:[%s0 + $0x28] sm:$0xff]
  %v27 = vld [vmem:[%s0 + $0x30] sm:$0xff]
  %v28 = vld [vmem:[%s0 + $0x38] sm:$0xff]
  %v29 = vld [vmem:[%s0 + $0x40] sm:$0xff]
  %v30 = vld [vmem:[%s0 + $0x48] sm:$0xff]
  %v31 = vld [vmem:[%s0 + $0x50] sm:$0xff]
  %v32 = vld [vmem:[%s0 + $0x58] sm:$0xff]
  %v33 = vld [vmem:[%s0 + $0x60] sm:$0xff]
  %v34 = vld [vmem:[%s0 + $0x68] sm:$0xff]
  %v35 = vld [vmem:[%s0 + $0x70] sm:$0xff]
  %v36 = vld [vmem:[%s0 + $0x78] sm:$0xff]
  %v37 = vld [vmem:[%s0 + $0x80] sm:$0xff]
  %v38 = vld [vmem:[%s0 + $0x88] sm:$0xff]
  %v39 = vld [vmem:[%s0 + $0x90] sm:$0xff]
  %v40 = vld [vmem:[%s0 + $0x98] sm:$0xff]
  %v41 = vld [vmem:[%s0 + $0xa0] sm:$0xff]
  %v42 = vld [vmem:[%s0 + $0xa8] sm:$0xff]
  %v43 = vld [vmem:[%s0 + $0xb0] sm:$0xff]
  %v44 = vld [vmem:[%s0 + $0xb8] sm:$0xff]
  %v45 = vld [vmem:[%s0 + $0xc0] sm:$0xff]
  %v46 = vld [vmem:[%s0 + $0xc8] sm:$0xff]
  %v47 = vld [vmem:[%s0 + $0xd0] sm:$0xff]
  %v48 = vld [vmem:[%s0 + $0xd8] sm:$0xff]
  %v49 = vld [vmem:[%s0 + $0xe0] sm:$0xff]
  %v50 = vld [vmem:[%s0 + $0xe8] sm:$0xff]
  %v51 = vld [vmem:[%s0 + $0xf0] sm:$0xff]
  %v52 = vld [vmem:[%s0 + $0xf8] sm:$0xff]
  %v53 = vld [vmem:[%s0 + $0x100] sm:$0xff]
  %v54 = vld [vmem:[%s0 + $0x108] sm:$0xff]
  %v55 = vld [vmem:[%s0 + $0x110] sm:$0xff]
  %v56 = vld [vmem:[%s0 + $0x118] sm:$0xff]
  %v57 = vld [vmem:[%s0 + $0x120] sm:$0xff]
  %v58 = vld [vmem:[%s0 + $0x128] sm:$0xff]
  %v59 = vld [vmem:[%s0 + $0x130] sm:$0xff]
  %v60 = vld [vmem:[%s0 + $0x138] sm:$0xff]
  %v61 = vld [vmem:[%s0 + $0x140] sm:$0xff]
  %v62 = vld [vmem:[%s0 + $0x148] sm:$0xff]
  %v63 = vld [vmem:[%s0 + $0x150] sm:$0xff]
  %v64 = vld [vmem:[%s0 + $0x158] sm:$0xff]
  %v65 = vld [vmem:[%s0 + $0x160] sm:$0xff]
  %v66 = vld [vmem:[%s0 + $0x168] sm:$0xff]
  %v67 = vld [vmem:[%s0 + $0x170] sm:$0xff]
  %v68 = vld [vmem:[%s0 + $0x178] sm:$0xff]
  %v69 = vld [vmem:[%s0 + $0x180] sm:$0xff]
  %v70 = vld [vmem:[%s0 + $0x188] sm:$0xff]
  %v71 = vld [vmem:[%s0 + $0x190] sm:$0xff]
  %v72 = vld [vmem:[%s0 + $0x198] sm:$0xff]
  %v73 = vld [vmem:[%s0 + $0x1a0] sm:$0xff]
  %v74 = vld [vmem:[%s0 + $0x1a8] sm:$0xff]
  %v75 = vld [vmem:[%s0 + $0x1b0] sm:$0xff]
  %v76 = vld [vmem:[%s0 + $0x1b8] sm:$0xff]
  %v77 = vld [vmem:[%s0 + $0x1c0] sm:$0xff]
  %v78 = vld [vmem:[%s0 + $0x1c8] sm:$0xff]
  %v79 = vld [vmem:[%s0 + $0x1d0] sm:$0xff]
  %v80 = vld [vmem:[%s0 + $0x1d8] sm:$0xff]
  %v81 = vld [vmem:[%s0 + $0x1e0] sm:$0xff]
  %v82 = vld [vmem:[%s0 + $0x1e8] sm:$0xff]
  %v83 = vld [vmem:[%s0 + $0x1f0] sm:$0xff]
  %v84 = vld [vmem:[%s0 + $0x1f8] sm:$0xff]
  %v85 = vld [vmem:[%s1] sm:$0xf]
  %v86 = vld [vmem:[%s1 + $0x4] sm:$0xf]
  %v87 = vld [vmem:[%s1 + $0x8] sm:$0xf]
  %v88 = vld [vmem:[%s1 + $0xc] sm:$0xf]
  %v89 = vld [vmem:[%s1 + $0x10] sm:$0xf]
  %v90 = vld [vmem:[%s1 + $0x14] sm:$0xf]
  %v91 = vld [vmem:[%s1 + $0x18] sm:$0xf]
  %v92 = vld [vmem:[%s1 + $0x1c] sm:$0xf]
  %v93 = vld [vmem:[%s1 + $0x20] sm:$0xf]
  %v94 = vld [vmem:[%s1 + $0x24] sm:$0xf]
  %v95 = vld [vmem:[%s1 + $0x28] sm:$0xf]
  %v96 = vld [vmem:[%s1 + $0x2c] sm:$0xf]
  %v97 = vld [vmem:[%s1 + $0x30] sm:$0xf]
  %v98 = vld [vmem:[%s1 + $0x34] sm:$0xf]
  %v99 = vld [vmem:[%s1 + $0x38] sm:$0xf]
  %v100 = vld [vmem:[%s1 + $0x3c] sm:$0xf]
  %v101 = vld [vmem:[%s1 + $0x40] sm:$0xf]
  %v102 = vld [vmem:[%s1 + $0x44] sm:$0xf]
  %v167 = vunpack.c.l.b16 %v21
  %v168 = vunpack.c.h.b16 %v21
  %v169 = vunpack.c.l.b16 %v22
  %v170 = vunpack.c.h.b16 %v22
  %v171 = vunpack.c.l.b16 %v23
  %v172 = vunpack.c.h.b16 %v23
  %v173 = vunpack.c.l.b16 %v24
  %v174 = vunpack.c.h.b16 %v24
  %v175 = vunpack.c.l.b16 %v25
  %v176 = vunpack.c.h.b16 %v25
  %v177 = vunpack.c.l.b16 %v26
  %v178 = vunpack.c.h.b16 %v26
  %v179 = vunpack.c.l.b16 %v27
  %v180 = vunpack.c.h.b16 %v27
  %v181 = vunpack.c.l.b16 %v28
  %v182 = vunpack.c.h.b16 %v28
  %v183 = vunpack.c.l.b16 %v29
  %v184 = vunpack.c.h.b16 %v29
  %v185 = vunpack.c.l.b16 %v30
  %v186 = vunpack.c.h.b16 %v30
  %v187 = vunpack.c.l.b16 %v31
  %v188 = vunpack.c.h.b16 %v31
  %v189 = vunpack.c.l.b16 %v32
  %v190 = vunpack.c.h.b16 %v32
  %v191 = vunpack.c.l.b16 %v33
  %v192 = vunpack.c.h.b16 %v33
  %v193 = vunpack.c.l.b16 %v34
  %v194 = vunpack.c.h.b16 %v34
  %v195 = vunpack.c.l.b16 %v35
  %v196 = vunpack.c.h.b16 %v35
  %v197 = vunpack.c.l.b16 %v36
  %v198 = vunpack.c.h.b16 %v36
  %v199 = vunpack.c.l.b16 %v37
  %v200 = vunpack.c.h.b16 %v37
  %v201 = vunpack.c.l.b16 %v38
  %v202 = vunpack.c.h.b16 %v38
  %v203 = vunpack.c.l.b16 %v39
  %v204 = vunpack.c.h.b16 %v39
  %v205 = vunpack.c.l.b16 %v40
  %v206 = vunpack.c.h.b16 %v40
  %v207 = vunpack.c.l.b16 %v41
  %v208 = vunpack.c.h.b16 %v41
  %v209 = vunpack.c.l.b16 %v42
  %v210 = vunpack.c.h.b16 %v42
  %v211 = vunpack.c.l.b16 %v43
  %v212 = vunpack.c.h.b16 %v43
  %v213 = vunpack.c.l.b16 %v44
  %v214 = vunpack.c.h.b16 %v44
  %v215 = vunpack.c.l.b16 %v45
  %v216 = vunpack.c.h.b16 %v45
  %v217 = vunpack.c.l.b16 %v46
  %v218 = vunpack.c.h.b16 %v46
  %v219 = vunpack.c.l.b16 %v47
  %v220 = vunpack.c.h.b16 %v47
  %v221 = vunpack.c.l.b16 %v48
  %v222 = vunpack.c.h.b16 %v48
  %v223 = vunpack.c.l.b16 %v49
  %v224 = vunpack.c.h.b16 %v49
  %v225 = vunpack.c.l.b16 %v50
  %v226 = vunpack.c.h.b16 %v50
  %v227 = vunpack.c.l.b16 %v51
  %v228 = vunpack.c.h.b16 %v51
  %v229 = vunpack.c.l.b16 %v52
  %v230 = vunpack.c.h.b16 %v52
  %v231 = vunpack.c.l.b16 %v53
  %v232 = vunpack.c.h.b16 %v53
  %v233 = vunpack.c.l.b16 %v54
  %v234 = vunpack.c.h.b16 %v54
  %v235 = vunpack.c.l.b16 %v55
  %v236 = vunpack.c.h.b16 %v55
  %v237 = vunpack.c.l.b16 %v56
  %v238 = vunpack.c.h.b16 %v56
  %v239 = vunpack.c.l.b16 %v57
  %v240 = vunpack.c.h.b16 %v57
  %v241 = vunpack.c.l.b16 %v58
  %v242 = vunpack.c.h.b16 %v58
  %v243 = vunpack.c.l.b16 %v59
  %v244 = vunpack.c.h.b16 %v59
  %v245 = vunpack.c.l.b16 %v60
  %v246 = vunpack.c.h.b16 %v60
  %v247 = vunpack.c.l.b16 %v61
  %v248 = vunpack.c.h.b16 %v61
  %v249 = vunpack.c.l.b16 %v62
  %v250 = vunpack.c.h.b16 %v62
  %v251 = vunpack.c.l.b16 %v63
  %v252 = vunpack.c.h.b16 %v63
  %v253 = vunpack.c.l.b16 %v64
  %v254 = vunpack.c.h.b16 %v64
  %v255 = vunpack.c.l.b16 %v65
  %v256 = vunpack.c.h.b16 %v65
  %v257 = vunpack.c.l.b16 %v66
  %v258 = vunpack.c.h.b16 %v66
  %v259 = vunpack.c.l.b16 %v67
  %v260 = vunpack.c.h.b16 %v67
  %v261 = vunpack.c.l.b16 %v68
  %v262 = vunpack.c.h.b16 %v68
  %v263 = vunpack.c.l.b16 %v69
  %v264 = vunpack.c.h.b16 %v69
  %v265 = vunpack.c.l.b16 %v70
  %v266 = vunpack.c.h.b16 %v70
  %v267 = vunpack.c.l.b16 %v71
  %v268 = vunpack.c.h.b16 %v71
  %v269 = vunpack.c.l.b16 %v72
  %v270 = vunpack.c.h.b16 %v72
  %v271 = vunpack.c.l.b16 %v73
  %v272 = vunpack.c.h.b16 %v73
  %v273 = vunpack.c.l.b16 %v74
  %v274 = vunpack.c.h.b16 %v74
  %v275 = vunpack.c.l.b16 %v75
  %v276 = vunpack.c.h.b16 %v75
  %v277 = vunpack.c.l.b16 %v76
  %v278 = vunpack.c.h.b16 %v76
  %v279 = vunpack.c.l.b16 %v77
  %v280 = vunpack.c.h.b16 %v77
  %v281 = vunpack.c.l.b16 %v78
  %v282 = vunpack.c.h.b16 %v78
  %v283 = vunpack.c.l.b16 %v79
  %v284 = vunpack.c.h.b16 %v79
  %v285 = vunpack.c.l.b16 %v80
  %v286 = vunpack.c.h.b16 %v80
  %v287 = vunpack.c.l.b16 %v81
  %v288 = vunpack.c.h.b16 %v81
  %v289 = vunpack.c.l.b16 %v82
  %v290 = vunpack.c.h.b16 %v82
  %v291 = vunpack.c.l.b16 %v83
  %v292 = vunpack.c.h.b16 %v83
  %v293 = vunpack.c.l.b16 %v84
  %v294 = vunpack.c.h.b16 %v84
  %v295 = vpack.c.b16 %v169, %v167
  %v296 = vpack.c.b16 %v170, %v168
  %v297 = vpack.c.b16 %v173, %v171
  %v298 = vpack.c.b16 %v174, %v172
  %v299 = vpack.c.b16 %v177, %v175
  %v300 = vpack.c.b16 %v178, %v176
  %v301 = vpack.c.b16 %v181, %v179
  %v302 = vpack.c.b16 %v182, %v180
  %v303 = vpack.c.b16 %v185, %v183
  %v304 = vpack.c.b16 %v186, %v184
  %v305 = vpack.c.b16 %v189, %v187
  %v306 = vpack.c.b16 %v190, %v188
  %v307 = vpack.c.b16 %v193, %v191
  %v308 = vpack.c.b16 %v194, %v192
  %v309 = vpack.c.b16 %v197, %v195
  %v310 = vpack.c.b16 %v198, %v196
  %v311 = vpack.c.b16 %v201, %v199
  %v312 = vpack.c.b16 %v202, %v200
  %v313 = vpack.c.b16 %v205, %v203
  %v314 = vpack.c.b16 %v206, %v204
  %v315 = vpack.c.b16 %v209, %v207
  %v316 = vpack.c.b16 %v210, %v208
  %v317 = vpack.c.b16 %v213, %v211
  %v318 = vpack.c.b16 %v214, %v212
  %v319 = vpack.c.b16 %v217, %v215
  %v320 = vpack.c.b16 %v218, %v216
  %v321 = vpack.c.b16 %v221, %v219
  %v322 = vpack.c.b16 %v222, %v220
  %v323 = vpack.c.b16 %v225, %v223
  %v324 = vpack.c.b16 %v226, %v224
  %v325 = vpack.c.b16 %v229, %v227
  %v326 = vpack.c.b16 %v230, %v228
  %v327 = vpack.c.b16 %v233, %v231
  %v328 = vpack.c.b16 %v234, %v232
  %v329 = vpack.c.b16 %v237, %v235
  %v330 = vpack.c.b16 %v238, %v236
  %v331 = vpack.c.b16 %v241, %v239
  %v332 = vpack.c.b16 %v242, %v240
  %v333 = vpack.c.b16 %v245, %v243
  %v334 = vpack.c.b16 %v246, %v244
  %v335 = vpack.c.b16 %v249, %v247
  %v336 = vpack.c.b16 %v250, %v248
  %v337 = vpack.c.b16 %v253, %v251
  %v338 = vpack.c.b16 %v254, %v252
  %v339 = vpack.c.b16 %v257, %v255
  %v340 = vpack.c.b16 %v258, %v256
  %v341 = vpack.c.b16 %v261, %v259
  %v342 = vpack.c.b16 %v262, %v260
  %v343 = vpack.c.b16 %v265, %v263
  %v344 = vpack.c.b16 %v266, %v264
  %v345 = vpack.c.b16 %v269, %v267
  %v346 = vpack.c.b16 %v270, %v268
  %v347 = vpack.c.b16 %v273, %v271
  %v348 = vpack.c.b16 %v274, %v272
  %v349 = vpack.c.b16 %v277, %v275
  %v350 = vpack.c.b16 %v278, %v276
  %v351 = vpack.c.b16 %v281, %v279
  %v352 = vpack.c.b16 %v282, %v280
  %v353 = vpack.c.b16 %v285, %v283
  %v354 = vpack.c.b16 %v286, %v284
  %v355 = vpack.c.b16 %v289, %v287
  %v356 = vpack.c.b16 %v290, %v288
  %v357 = vpack.c.b16 %v293, %v291
  %v358 = vpack.c.b16 %v294, %v292
  %v409 = vunpack.c.l.b16 %v85
  %v410 = vunpack.c.l.b16 %v86
  %v411 = vunpack.c.l.b16 %v87
  %v412 = vunpack.c.l.b16 %v88
  %v413 = vunpack.c.l.b16 %v89
  %v414 = vunpack.c.l.b16 %v90
  %v415 = vunpack.c.l.b16 %v91
  %v416 = vunpack.c.l.b16 %v92
  %v417 = vunpack.c.l.b16 %v93
  %v418 = vunpack.c.l.b16 %v94
  %v419 = vunpack.c.l.b16 %v95
  %v420 = vunpack.c.l.b16 %v96
  %v421 = vunpack.c.l.b16 %v97
  %v422 = vunpack.c.l.b16 %v98
  %v423 = vunpack.c.l.b16 %v99
  %v424 = vunpack.c.l.b16 %v100
  %v425 = vunpack.c.l.b16 %v101
  %v426 = vunpack.c.l.b16 %v102
  %v427 = vpack.c.b16 %v410, %v409
  %v428 = vpack.c.b16 %v412, %v411
  %v429 = vpack.c.b16 %v414, %v413
  %v430 = vpack.c.b16 %v416, %v415
  %v431 = vpack.c.b16 %v418, %v417
  %v432 = vpack.c.b16 %v420, %v419
  %v433 = vpack.c.b16 %v422, %v421
  %v434 = vpack.c.b16 %v424, %v423
  %v435 = vpack.c.b16 %v426, %v425
  %vm445 = vcmask 130048
  %v447 = vsel %vm445, %v296, 0
  %v450 = vsel %vm445, %v298, 0
  %v453 = vsel %vm445, %v300, 0
  %v456 = vsel %vm445, %v302, 0
  %v459 = vsel %vm445, %v304, 0
  %v462 = vsel %vm445, %v306, 0
  %v465 = vsel %vm445, %v308, 0
  %v468 = vsel %vm445, %v310, 0
  %v471 = vsel %vm445, %v312, 0
  %v474 = vsel %vm445, %v314, 0
  %v477 = vsel %vm445, %v316, 0
  %v480 = vsel %vm445, %v318, 0
  %v483 = vsel %vm445, %v320, 0
  %v486 = vsel %vm445, %v322, 0
  %v489 = vsel %vm445, %v324, 0
  %v492 = vsel %vm445, %v326, 0
  %v495 = vsel %vm445, %v328, 0
  %v498 = vsel %vm445, %v330, 0
  %v501 = vsel %vm445, %v332, 0
  %v504 = vsel %vm445, %v334, 0
  %v507 = vsel %vm445, %v336, 0
  %v510 = vsel %vm445, %v338, 0
  %v513 = vsel %vm445, %v340, 0
  %v516 = vsel %vm445, %v342, 0
  %v519 = vsel %vm445, %v344, 0
  %v522 = vsel %vm445, %v346, 0
  %v525 = vsel %vm445, %v348, 0
  %v528 = vsel %vm445, %v350, 0
  %v531 = vsel %vm445, %v352, 0
  %v534 = vsel %vm445, %v354, 0
  %v537 = vsel %vm445, %v356, 0
  %v540 = vsel %vm445, %v358, 0
  %542 = vmatprep.subr.bf16.mxu0 0
  %543 = vmatpush1.bf16.msra.mxu0 %v427
  %544 = vmatprep.subr.bf16.mxu0 0
  %545 = vmatpush1.bf16.msra.mxu0 %v428
  %546 = vmatprep.subr.bf16.mxu0 0
  %547 = vmatpush1.bf16.msra.mxu0 %v429
  %548 = vmatprep.subr.bf16.mxu0 0
  %549 = vmatpush1.bf16.msra.mxu0 %v430
  %550 = vmatprep.subr.bf16.mxu0 0
  %551 = vmatpush1.bf16.msra.mxu0 %v431
  %552 = vmatprep.subr.bf16.mxu0 0
  %553 = vmatpush1.bf16.msra.mxu0 %v432
  %554 = vmatprep.subr.bf16.mxu0 0
  %555 = vmatpush1.bf16.msra.mxu0 %v433
  %556 = vmatprep.subr.bf16.mxu0 0
  %557 = vmatpush1.bf16.msra.mxu0 %v434
  %558 = vmatprep.subr.bf16.mxu0 0
  %559 = vmatpush1.bf16.msra.mxu0 %v435
  %560 = vmatprep.subr.bf16.mxu0 0
  %561 = vmatpush1.bf16.msra.mxu0 0
  %562 = vmatprep.subr.bf16.mxu0 0
  %563 = vmatpush1.bf16.msra.mxu0 0
  %564 = vmatprep.subr.bf16.mxu0 0
  %565 = vmatpush1.bf16.msra.mxu0 0
  %566 = vmatprep.subr.bf16.mxu0 0
  %567 = vmatpush1.bf16.msra.mxu0 0
  %568 = vmatprep.subr.bf16.mxu0 0
  %569 = vmatpush1.bf16.msra.mxu0 0
  %570 = vmatprep.subr.bf16.mxu0 0
  %571 = vmatpush1.bf16.msra.mxu0 0
  %572 = vmatprep.subr.bf16.mxu0 0
  %573 = vmatpush1.bf16.msra.mxu0 0
  %574 = vmatprep.mubr.bf16.mxu0 %v447
  %575 = vmatmul.mubr.bf16.gmra.mrb[0].mxu0 %v295
  %v576 = vpop.f32.mrb[0].mxu0
  %v577 = vadd.f32 0.0, %v576
  %v578 = vpop.f32.mrb[0].mxu0
  %v579 = vpop.f32.mrb[0].mxu0
  %v580 = vadd.f32 0.0, %v579
  %v581 = vpop.f32.mrb[0].mxu0
  %582 = vmatprep.mubr.bf16.mxu0 %v450
  %583 = vmatmul.mubr.bf16.gmra.mrb[0].mxu0 %v297
  %v584 = vpop.f32.mrb[0].mxu0
  %v585 = vadd.f32 0.0, %v584
  %v586 = vpop.f32.mrb[0].mxu0
  %v587 = vpop.f32.mrb[0].mxu0
  %v588 = vadd.f32 0.0, %v587
  %v589 = vpop.f32.mrb[0].mxu0
  %590 = vmatprep.mubr.bf16.mxu0 %v453
  %591 = vmatmul.mubr.bf16.gmra.mrb[0].mxu0 %v299
  %v592 = vpop.f32.mrb[0].mxu0
  %v593 = vadd.f32 0.0, %v592
  %v594 = vpop.f32.mrb[0].mxu0
  %v595 = vpop.f32.mrb[0].mxu0
  %v596 = vadd.f32 0.0, %v595
  %v597 = vpop.f32.mrb[0].mxu0
  %598 = vmatprep.mubr.bf16.mxu0 %v456
  %599 = vmatmul.mubr.bf16.gmra.mrb[0].mxu0 %v301
  %v600 = vpop.f32.mrb[0].mxu0
  %v601 = vadd.f32 0.0, %v600
  %v602 = vpop.f32.mrb[0].mxu0
  %v603 = vpop.f32.mrb[0].mxu0
  %v604 = vadd.f32 0.0, %v603
  %v605 = vpop.f32.mrb[0].mxu0
  %606 = vmatprep.mubr.bf16.mxu0 %v459
  %607 = vmatmul.mubr.bf16.gmra.mrb[0].mxu0 %v303
  %v608 = vpop.f32.mrb[0].mxu0
  %v609 = vadd.f32 0.0, %v608
  %v610 = vpop.f32.mrb[0].mxu0
  %v611 = vpop.f32.mrb[0].mxu0
  %v612 = vadd.f32 0.0, %v611
  %v613 = vpop.f32.mrb[0].mxu0
  %614 = vmatprep.mubr.bf16.mxu0 %v462
  %615 = vmatmul.mubr.bf16.gmra.mrb[0].mxu0 %v305
  %v616 = vpop.f32.mrb[0].mxu0
  %v617 = vadd.f32 0.0, %v616
  %v618 = vpop.f32.mrb[0].mxu0
  %v619 = vpop.f32.mrb[0].mxu0
  %v620 = vadd.f32 0.0, %v619
  %v621 = vpop.f32.mrb[0].mxu0
  %622 = vmatprep.mubr.bf16.mxu0 %v465
  %623 = vmatmul.mubr.bf16.gmra.mrb[0].mxu0 %v307
  %v624 = vpop.f32.mrb[0].mxu0
  %v625 = vadd.f32 0.0, %v624
  %v626 = vpop.f32.mrb[0].mxu0
  %v627 = vpop.f32.mrb[0].mxu0
  %v628 = vadd.f32 0.0, %v627
  %v629 = vpop.f32.mrb[0].mxu0
  %630 = vmatprep.mubr.bf16.mxu0 %v468
  %631 = vmatmul.mubr.bf16.gmra.mrb[0].mxu0 %v309
  %v632 = vpop.f32.mrb[0].mxu0
  %v633 = vadd.f32 0.0, %v632
  %v634 = vpop.f32.mrb[0].mxu0
  %v635 = vpop.f32.mrb[0].mxu0
  %v636 = vadd.f32 0.0, %v635
  %v637 = vpop.f32.mrb[0].mxu0
  %638 = vmatprep.mubr.bf16.mxu0 %v471
  %639 = vmatmul.mubr.bf16.gmra.mrb[0].mxu0 %v311
  %v640 = vpop.f32.mrb[0].mxu0
  %v641 = vadd.f32 0.0, %v640
  %v642 = vpop.f32.mrb[0].mxu0
  %v643 = vpop.f32.mrb[0].mxu0
  %v644 = vadd.f32 0.0, %v643
  %v645 = vpop.f32.mrb[0].mxu0
  %646 = vmatprep.mubr.bf16.mxu0 %v474
  %647 = vmatmul.mubr.bf16.gmra.mrb[0].mxu0 %v313
  %v648 = vpop.f32.mrb[0].mxu0
  %v649 = vadd.f32 0.0, %v648
  %v650 = vpop.f32.mrb[0].mxu0
  %v651 = vpop.f32.mrb[0].mxu0
  %v652 = vadd.f32 0.0, %v651
  %v653 = vpop.f32.mrb[0].mxu0
  %654 = vmatprep.mubr.bf16.mxu0 %v477
  %655 = vmatmul.mubr.bf16.gmra.mrb[0].mxu0 %v315
  %v656 = vpop.f32.mrb[0].mxu0
  %v657 = vadd.f32 0.0, %v656
  %v658 = vpop.f32.mrb[0].mxu0
  %v659 = vpop.f32.mrb[0].mxu0
  %v660 = vadd.f32 0.0, %v659
  %v661 = vpop.f32.mrb[0].mxu0
  %662 = vmatprep.mubr.bf16.mxu0 %v480
  %663 = vmatmul.mubr.bf16.gmra.mrb[0].mxu0 %v317
  %v664 = vpop.f32.mrb[0].mxu0
  %v665 = vadd.f32 0.0, %v664
  %v666 = vpop.f32.mrb[0].mxu0
  %v667 = vpop.f32.mrb[0].mxu0
  %v668 = vadd.f32 0.0, %v667
  %v669 = vpop.f32.mrb[0].mxu0
  %670 = vmatprep.mubr.bf16.mxu0 %v483
  %671 = vmatmul.mubr.bf16.gmra.mrb[0].mxu0 %v319
  %v672 = vpop.f32.mrb[0].mxu0
  %v673 = vadd.f32 0.0, %v672
  %v674 = vpop.f32.mrb[0].mxu0
  %v675 = vpop.f32.mrb[0].mxu0
  %v676 = vadd.f32 0.0, %v675
  %v677 = vpop.f32.mrb[0].mxu0
  %678 = vmatprep.mubr.bf16.mxu0 %v486
  %679 = vmatmul.mubr.bf16.gmra.mrb[0].mxu0 %v321
  %v680 = vpop.f32.mrb[0].mxu0
  %v681 = vadd.f32 0.0, %v680
  %v682 = vpop.f32.mrb[0].mxu0
  %v683 = vpop.f32.mrb[0].mxu0
  %v684 = vadd.f32 0.0, %v683
  %v685 = vpop.f32.mrb[0].mxu0
  %686 = vmatprep.mubr.bf16.mxu0 %v489
  %687 = vmatmul.mubr.bf16.gmra.mrb[0].mxu0 %v323
  %v688 = vpop.f32.mrb[0].mxu0
  %v689 = vadd.f32 0.0, %v688
  %v690 = vpop.f32.mrb[0].mxu0
  %v691 = vpop.f32.mrb[0].mxu0
  %v692 = vadd.f32 0.0, %v691
  %v693 = vpop.f32.mrb[0].mxu0
  %694 = vmatprep.mubr.bf16.mxu0 %v492
  %695 = vmatmul.mubr.bf16.gmra.mrb[0].mxu0 %v325
  %v696 = vpop.f32.mrb[0].mxu0
  %v697 = vadd.f32 0.0, %v696
  %v698 = vpop.f32.mrb[0].mxu0
  %v699 = vpop.f32.mrb[0].mxu0
  %v700 = vadd.f32 0.0, %v699
  %v701 = vpop.f32.mrb[0].mxu0
  %702 = vmatprep.mubr.bf16.mxu0 %v495
  %703 = vmatmul.mubr.bf16.gmra.mrb[0].mxu0 %v327
  %v704 = vpop.f32.mrb[0].mxu0
  %v705 = vadd.f32 0.0, %v704
  %v706 = vpop.f32.mrb[0].mxu0
  %v707 = vpop.f32.mrb[0].mxu0
  %v708 = vadd.f32 0.0, %v707
  %v709 = vpop.f32.mrb[0].mxu0
  %710 = vmatprep.mubr.bf16.mxu0 %v498
  %711 = vmatmul.mubr.bf16.gmra.mrb[0].mxu0 %v329
  %v712 = vpop.f32.mrb[0].mxu0
  %v713 = vadd.f32 0.0, %v712
  %v714 = vpop.f32.mrb[0].mxu0
  %v715 = vpop.f32.mrb[0].mxu0
  %v716 = vadd.f32 0.0, %v715
  %v717 = vpop.f32.mrb[0].mxu0
  %718 = vmatprep.mubr.bf16.mxu0 %v501
  %719 = vmatmul.mubr.bf16.gmra.mrb[0].mxu0 %v331
  %v720 = vpop.f32.mrb[0].mxu0
  %v721 = vadd.f32 0.0, %v720
  %v722 = vpop.f32.mrb[0].mxu0
  %v723 = vpop.f32.mrb[0].mxu0
  %v724 = vadd.f32 0.0, %v723
  %v725 = vpop.f32.mrb[0].mxu0
  %726 = vmatprep.mubr.bf16.mxu0 %v504
  %727 = vmatmul.mubr.bf16.gmra.mrb[0].mxu0 %v333
  %v728 = vpop.f32.mrb[0].mxu0
  %v729 = vadd.f32 0.0, %v728
  %v730 = vpop.f32.mrb[0].mxu0
  %v731 = vpop.f32.mrb[0].mxu0
  %v732 = vadd.f32 0.0, %v731
  %v733 = vpop.f32.mrb[0].mxu0
  %734 = vmatprep.mubr.bf16.mxu0 %v507
  %735 = vmatmul.mubr.bf16.gmra.mrb[0].mxu0 %v335
  %v736 = vpop.f32.mrb[0].mxu0
  %v737 = vadd.f32 0.0, %v736
  %v738 = vpop.f32.mrb[0].mxu0
  %v739 = vpop.f32.mrb[0].mxu0
  %v740 = vadd.f32 0.0, %v739
  %v741 = vpop.f32.mrb[0].mxu0
  %742 = vmatprep.mubr.bf16.mxu0 %v510
  %743 = vmatmul.mubr.bf16.gmra.mrb[0].mxu0 %v337
  %v744 = vpop.f32.mrb[0].mxu0
  %v745 = vadd.f32 0.0, %v744
  %v746 = vpop.f32.mrb[0].mxu0
  %v747 = vpop.f32.mrb[0].mxu0
  %v748 = vadd.f32 0.0, %v747
  %v749 = vpop.f32.mrb[0].mxu0
  %750 = vmatprep.mubr.bf16.mxu0 %v513
  %751 = vmatmul.mubr.bf16.gmra.mrb[0].mxu0 %v339
  %v752 = vpop.f32.mrb[0].mxu0
  %v753 = vadd.f32 0.0, %v752
  %v754 = vpop.f32.mrb[0].mxu0
  %v755 = vpop.f32.mrb[0].mxu0
  %v756 = vadd.f32 0.0, %v755
  %v757 = vpop.f32.mrb[0].mxu0
  %758 = vmatprep.mubr.bf16.mxu0 %v516
  %759 = vmatmul.mubr.bf16.gmra.mrb[0].mxu0 %v341
  %v760 = vpop.f32.mrb[0].mxu0
  %v761 = vadd.f32 0.0, %v760
  %v762 = vpop.f32.mrb[0].mxu0
  %v763 = vpop.f32.mrb[0].mxu0
  %v764 = vadd.f32 0.0, %v763
  %v765 = vpop.f32.mrb[0].mxu0
  %766 = vmatprep.mubr.bf16.mxu0 %v519
  %767 = vmatmul.mubr.bf16.gmra.mrb[0].mxu0 %v343
  %v768 = vpop.f32.mrb[0].mxu0
  %v769 = vadd.f32 0.0, %v768
  %v770 = vpop.f32.mrb[0].mxu0
  %v771 = vpop.f32.mrb[0].mxu0
  %v772 = vadd.f32 0.0, %v771
  %v773 = vpop.f32.mrb[0].mxu0
  %774 = vmatprep.mubr.bf16.mxu0 %v522
  %775 = vmatmul.mubr.bf16.gmra.mrb[0].mxu0 %v345
  %v776 = vpop.f32.mrb[0].mxu0
  %v777 = vadd.f32 0.0, %v776
  %v778 = vpop.f32.mrb[0].mxu0
  %v779 = vpop.f32.mrb[0].mxu0
  %v780 = vadd.f32 0.0, %v779
  %v781 = vpop.f32.mrb[0].mxu0
  %782 = vmatprep.mubr.bf16.mxu0 %v525
  %783 = vmatmul.mubr.bf16.gmra.mrb[0].mxu0 %v347
  %v784 = vpop.f32.mrb[0].mxu0
  %v785 = vadd.f32 0.0, %v784
  %v786 = vpop.f32.mrb[0].mxu0
  %v787 = vpop.f32.mrb[0].mxu0
  %v788 = vadd.f32 0.0, %v787
  %v789 = vpop.f32.mrb[0].mxu0
  %790 = vmatprep.mubr.bf16.mxu0 %v528
  %791 = vmatmul.mubr.bf16.gmra.mrb[0].mxu0 %v349
  %v792 = vpop.f32.mrb[0].mxu0
  %v793 = vadd.f32 0.0, %v792
  %v794 = vpop.f32.mrb[0].mxu0
  %v795 = vpop.f32.mrb[0].mxu0
  %v796 = vadd.f32 0.0, %v795
  %v797 = vpop.f32.mrb[0].mxu0
  %798 = vmatprep.mubr.bf16.mxu0 %v531
  %799 = vmatmul.mubr.bf16.gmra.mrb[0].mxu0 %v351
  %v800 = vpop.f32.mrb[0].mxu0
  %v801 = vadd.f32 0.0, %v800
  %v802 = vpop.f32.mrb[0].mxu0
  %v803 = vpop.f32.mrb[0].mxu0
  %v804 = vadd.f32 0.0, %v803
  %v805 = vpop.f32.mrb[0].mxu0
  %806 = vmatprep.mubr.bf16.mxu0 %v534
  %807 = vmatmul.mubr.bf16.gmra.mrb[0].mxu0 %v353
  %v808 = vpop.f32.mrb[0].mxu0
  %v809 = vadd.f32 0.0, %v808
  %v810 = vpop.f32.mrb[0].mxu0
  %v811 = vpop.f32.mrb[0].mxu0
  %v812 = vadd.f32 0.0, %v811
  %v813 = vpop.f32.mrb[0].mxu0
  %814 = vmatprep.mubr.bf16.mxu0 %v537
  %815 = vmatmul.mubr.bf16.gmra.mrb[0].mxu0 %v355
  %v816 = vpop.f32.mrb[0].mxu0
  %v817 = vadd.f32 0.0, %v816
  %v818 = vpop.f32.mrb[0].mxu0
  %v819 = vpop.f32.mrb[0].mxu0
  %v820 = vadd.f32 0.0, %v819
  %v821 = vpop.f32.mrb[0].mxu0
  %822 = vmatprep.mubr.bf16.mxu0 %v540
  %823 = vmatmul.mubr.bf16.gmra.mrb[0].mxu0 %v357
  %v824 = vpop.f32.mrb[0].mxu0
  %v825 = vadd.f32 0.0, %v824
  %v826 = vpop.f32.mrb[0].mxu0
  %v827 = vpop.f32.mrb[0].mxu0
  %v828 = vadd.f32 0.0, %v827
  %v829 = vpop.f32.mrb[0].mxu0
  %830 = vdwg.mxu0
  %vm831 = vcmask 261120
  %v832 = vsel %vm831, %v577, 0.0
  %v833 = vsel %vm831, %v580, 0.0
  %v834 = vadd.f32 %v832, %v833
  %v835 = vsel %vm831, %v585, 0.0
  %v836 = vadd.f32 %v834, %v835
  %v837 = vsel %vm831, %v588, 0.0
  %v838 = vadd.f32 %v836, %v837
  %v839 = vsel %vm831, %v593, 0.0
  %v840 = vadd.f32 %v838, %v839
  %v841 = vsel %vm831, %v596, 0.0
  %v842 = vadd.f32 %v840, %v841
  %v843 = vsel %vm831, %v601, 0.0
  %v844 = vadd.f32 %v842, %v843
  %v845 = vsel %vm831, %v604, 0.0
  %v846 = vadd.f32 %v844, %v845
  %v847 = vsel %vm831, %v609, 0.0
  %v848 = vadd.f32 %v846, %v847
  %v849 = vsel %vm831, %v612, 0.0
  %v850 = vadd.f32 %v848, %v849
  %v851 = vsel %vm831, %v617, 0.0
  %v852 = vadd.f32 %v850, %v851
  %v853 = vsel %vm831, %v620, 0.0
  %v854 = vadd.f32 %v852, %v853
  %v855 = vsel %vm831, %v625, 0.0
  %v856 = vadd.f32 %v854, %v855
  %v857 = vsel %vm831, %v628, 0.0
  %v858 = vadd.f32 %v856, %v857
  %v859 = vsel %vm831, %v633, 0.0
  %v860 = vadd.f32 %v858, %v859
  %v861 = vsel %vm831, %v636, 0.0
  %v862 = vadd.f32 %v860, %v861
  %v863 = vsel %vm831, %v641, 0.0
  %v864 = vadd.f32 %v862, %v863
  %v865 = vsel %vm831, %v644, 0.0
  %v866 = vadd.f32 %v864, %v865
  %v867 = vsel %vm831, %v649, 0.0
  %v868 = vadd.f32 %v866, %v867
  %v869 = vsel %vm831, %v652, 0.0
  %v870 = vadd.f32 %v868, %v869
  %v871 = vsel %vm831, %v657, 0.0
  %v872 = vadd.f32 %v870, %v871
  %v873 = vsel %vm831, %v660, 0.0
  %v874 = vadd.f32 %v872, %v873
  %v875 = vsel %vm831, %v665, 0.0
  %v876 = vadd.f32 %v874, %v875
  %v877 = vsel %vm831, %v668, 0.0
  %v878 = vadd.f32 %v876, %v877
  %v879 = vsel %vm831, %v673, 0.0
  %v880 = vadd.f32 %v878, %v879
  %v881 = vsel %vm831, %v676, 0.0
  %v882 = vadd.f32 %v880, %v881
  %v883 = vsel %vm831, %v681, 0.0
  %v884 = vadd.f32 %v882, %v883
  %v885 = vsel %vm831, %v684, 0.0
  %v886 = vadd.f32 %v884, %v885
  %v887 = vsel %vm831, %v689, 0.0
  %v888 = vadd.f32 %v886, %v887
  %v889 = vsel %vm831, %v692, 0.0
  %v890 = vadd.f32 %v888, %v889
  %v891 = vsel %vm831, %v697, 0.0
  %v892 = vadd.f32 %v890, %v891
  %v893 = vsel %vm831, %v700, 0.0
  %v894 = vadd.f32 %v892, %v893
  %v895 = vsel %vm831, %v705, 0.0
  %v896 = vadd.f32 %v894, %v895
  %v897 = vsel %vm831, %v708, 0.0
  %v898 = vadd.f32 %v896, %v897
  %v899 = vsel %vm831, %v713, 0.0
  %v900 = vadd.f32 %v898, %v899
  %v901 = vsel %vm831, %v716, 0.0
  %v902 = vadd.f32 %v900, %v901
  %v903 = vsel %vm831, %v721, 0.0
  %v904 = vadd.f32 %v902, %v903
  %v905 = vsel %vm831, %v724, 0.0
  %v906 = vadd.f32 %v904, %v905
  %v907 = vsel %vm831, %v729, 0.0
  %v908 = vadd.f32 %v906, %v907
  %v909 = vsel %vm831, %v732, 0.0
  %v910 = vadd.f32 %v908, %v909
  %v911 = vsel %vm831, %v737, 0.0
  %v912 = vadd.f32 %v910, %v911
  %v913 = vsel %vm831, %v740, 0.0
  %v914 = vadd.f32 %v912, %v913
  %v915 = vsel %vm831, %v745, 0.0
  %v916 = vadd.f32 %v914, %v915
  %v917 = vsel %vm831, %v748, 0.0
  %v918 = vadd.f32 %v916, %v917
  %v919 = vsel %vm831, %v753, 0.0
  %v920 = vadd.f32 %v918, %v919
  %v921 = vsel %vm831, %v756, 0.0
  %v922 = vadd.f32 %v920, %v921
  %v923 = vsel %vm831, %v761, 0.0
  %v924 = vadd.f32 %v922, %v923
  %v925 = vsel %vm831, %v764, 0.0
  %v926 = vadd.f32 %v924, %v925
  %v927 = vsel %vm831, %v769, 0.0
  %v928 = vadd.f32 %v926, %v927
  %v929 = vsel %vm831, %v772, 0.0
  %v930 = vadd.f32 %v928, %v929
  %v931 = vsel %vm831, %v777, 0.0
  %v932 = vadd.f32 %v930, %v931
  %v933 = vsel %vm831, %v780, 0.0
  %v934 = vadd.f32 %v932, %v933
  %v935 = vsel %vm831, %v785, 0.0
  %v936 = vadd.f32 %v934, %v935
  %v937 = vsel %vm831, %v788, 0.0
  %v938 = vadd.f32 %v936, %v937
  %v939 = vsel %vm831, %v793, 0.0
  %v940 = vadd.f32 %v938, %v939
  %v941 = vsel %vm831, %v796, 0.0
  %v942 = vadd.f32 %v940, %v941
  %v943 = vsel %vm831, %v801, 0.0
  %v944 = vadd.f32 %v942, %v943
  %v945 = vsel %vm831, %v804, 0.0
  %v946 = vadd.f32 %v944, %v945
  %v947 = vsel %vm831, %v809, 0.0
  %v948 = vadd.f32 %v946, %v947
  %v949 = vsel %vm831, %v812, 0.0
  %v950 = vadd.f32 %v948, %v949
  %v951 = vsel %vm831, %v817, 0.0
  %v952 = vadd.f32 %v950, %v951
  %v953 = vsel %vm831, %v820, 0.0
  %v954 = vadd.f32 %v952, %v953
  %v955 = vsel %vm831, %v825, 0.0
  %v956 = vadd.f32 %v954, %v955
  %v957 = vsel %vm831, %v828, 0.0
  %v958 = vadd.f32 %v956, %v957
  %v959 = vrot.slane %v958, 4
  %v960 = vadd.f32 %v958, %v959
  %v961 = vrot.slane %v960, 2
  %v962 = vadd.f32 %v960, %v961
  %v963 = vrot.slane %v962, 1
  %v964 = vadd.f32 %v962, %v963
  %v965 = vrcp.pop 512.0
  %v966 = vmul.f32 %v964, %v965
  %v967 = vld [vmem:[%s2] sm:$0xff]
  %v968 = vld [vmem:[%s2 + $0x8] sm:$0xff]
  %v969 = vld [vmem:[%s2 + $0x10] sm:$0xff]
  %v970 = vld [vmem:[%s2 + $0x18] sm:$0xff]
  %v972 = vsel %vm831, %v966, 0
  %974 = vmatprep.subr.mxu0 0.0
  %975 = vmatpush1.msra.mxu0 %v967
  %976 = vmatprep.subr.mxu0 0.0
  %977 = vmatpush1.msra.mxu0 %v968
  %978 = vmatprep.subr.mxu0 0.0
  %979 = vmatpush1.msra.mxu0 %v969
  %980 = vmatprep.subr.mxu0 0.0
  %981 = vmatpush1.msra.mxu0 %v970
  %982 = vmatprep.subr.mxu0 0.0
  %983 = vmatpush1.msra.mxu0 0.0
  %984 = vmatprep.subr.mxu0 0.0
  %985 = vmatpush1.msra.mxu0 0.0
  %986 = vmatprep.subr.mxu0 0.0
  %987 = vmatpush1.msra.mxu0 0.0
  %988 = vmatprep.subr.mxu0 0.0
  %989 = vmatpush1.msra.mxu0 0.0
  %990 = vmatprep.subr.mxu0 0.0
  %991 = vmatpush1.msra.mxu0 0.0
  %992 = vmatprep.subr.mxu0 0.0
  %993 = vmatpush1.msra.mxu0 0.0
  %994 = vmatprep.subr.mxu0 0.0
  %995 = vmatpush1.msra.mxu0 0.0
  %996 = vmatprep.subr.mxu0 0.0
  %997 = vmatpush1.msra.mxu0 0.0
  %998 = vmatprep.subr.mxu0 0.0
  %999 = vmatpush1.msra.mxu0 0.0
  %1000 = vmatprep.subr.mxu0 0.0
  %1001 = vmatpush1.msra.mxu0 0.0
  %1002 = vmatprep.subr.mxu0 0.0
  %1003 = vmatpush1.msra.mxu0 0.0
  %1004 = vmatprep.subr.mxu0 0.0
  %1005 = vmatpush1.msra.mxu0 0.0
  %1006 = vmatprep.subr.mxu0 0.0
  %1007 = vmatpush1.msra.mxu0 0.0
  %1008 = vmatprep.subr.mxu0 0.0
  %1009 = vmatpush1.msra.mxu0 0.0
  %1010 = vmatprep.subr.mxu0 0.0
  %1011 = vmatpush1.msra.mxu0 0.0
  %1012 = vmatprep.subr.mxu0 0.0
  %1013 = vmatpush1.msra.mxu0 0.0
  %1014 = vmatprep.subr.mxu0 0.0
  %1015 = vmatpush1.msra.mxu0 0.0
  %1016 = vmatprep.subr.mxu0 0.0
  %1017 = vmatpush1.msra.mxu0 0.0
  %1018 = vmatprep.subr.mxu0 0.0
  %1019 = vmatpush1.msra.mxu0 0.0
  %1020 = vmatprep.subr.mxu0 0.0
  %1021 = vmatpush1.msra.mxu0 0.0
  %1022 = vmatprep.subr.mxu0 0.0
  %1023 = vmatpush1.msra.mxu0 0.0
  %1024 = vmatprep.subr.mxu0 0.0
  %1025 = vmatpush1.msra.mxu0 0.0
  %1026 = vmatprep.subr.mxu0 0.0
  %1027 = vmatpush1.msra.mxu0 0.0
  %1028 = vmatprep.subr.mxu0 0.0
  %1029 = vmatpush1.msra.mxu0 0.0
  %1030 = vmatprep.subr.mxu0 0.0
  %1031 = vmatpush1.msra.mxu0 0.0
  %1032 = vmatprep.subr.mxu0 0.0
  %1033 = vmatpush1.msra.mxu0 0.0
  %1034 = vmatprep.subr.mxu0 0.0
  %1035 = vmatpush1.msra.mxu0 0.0
  %1036 = vmatprep.subr.mxu0 0.0
  %1037 = vmatpush1.msra.mxu0 0.0
  %1038 = vmatprep.mubr.f32.mxu0 0.0
  %1039 = vmatmul.mubr.f32.gmra.mrb[0].mxu0 %v972
  %v1040 = vpop.f32.mrb[0].mxu0
  %v1041 = vadd.f32 0.0, %v1040
  %v1042 = vpop.f32.mrb[0].mxu0
  %1043 = vdwg.mxu0
  %v1044 = vlaneseq
  %v1045 = vshrl.u32 %v1044, 7
  %v1046 = vsub.s32 0, %v1045
  %v1047 = vrot.slane %v1041, %v1046
  %v1048 = vsub.f32 %v577, %v1047
  %v1049 = vsub.f32 %v580, %v1047
  %v1050 = vsub.f32 %v585, %v1047
  %v1051 = vsub.f32 %v588, %v1047
  %v1052 = vsub.f32 %v593, %v1047
  %v1053 = vsub.f32 %v596, %v1047
  %v1054 = vsub.f32 %v601, %v1047
  %v1055 = vsub.f32 %v604, %v1047
  %v1056 = vsub.f32 %v609, %v1047
  %v1057 = vsub.f32 %v612, %v1047
  %v1058 = vsub.f32 %v617, %v1047
  %v1059 = vsub.f32 %v620, %v1047
  %v1060 = vsub.f32 %v625, %v1047
  %v1061 = vsub.f32 %v628, %v1047
  %v1062 = vsub.f32 %v633, %v1047
  %v1063 = vsub.f32 %v636, %v1047
  %v1064 = vsub.f32 %v641, %v1047
  %v1065 = vsub.f32 %v644, %v1047
  %v1066 = vsub.f32 %v649, %v1047
  %v1067 = vsub.f32 %v652, %v1047
  %v1068 = vsub.f32 %v657, %v1047
  %v1069 = vsub.f32 %v660, %v1047
  %v1070 = vsub.f32 %v665, %v1047
  %v1071 = vsub.f32 %v668, %v1047
  %v1072 = vsub.f32 %v673, %v1047
  %v1073 = vsub.f32 %v676, %v1047
  %v1074 = vsub.f32 %v681, %v1047
  %v1075 = vsub.f32 %v684, %v1047
  %v1076 = vsub.f32 %v689, %v1047
  %v1077 = vsub.f32 %v692, %v1047
  %v1078 = vsub.f32 %v697, %v1047
  %v1079 = vsub.f32 %v700, %v1047
  %v1080 = vsub.f32 %v705, %v1047
  %v1081 = vsub.f32 %v708, %v1047
  %v1082 = vsub.f32 %v713, %v1047
  %v1083 = vsub.f32 %v716, %v1047
  %v1084 = vsub.f32 %v721, %v1047
  %v1085 = vsub.f32 %v724, %v1047
  %v1086 = vsub.f32 %v729, %v1047
  %v1087 = vsub.f32 %v732, %v1047
  %v1088 = vsub.f32 %v737, %v1047
  %v1089 = vsub.f32 %v740, %v1047
  %v1090 = vsub.f32 %v745, %v1047
  %v1091 = vsub.f32 %v748, %v1047
  %v1092 = vsub.f32 %v753, %v1047
  %v1093 = vsub.f32 %v756, %v1047
  %v1094 = vsub.f32 %v761, %v1047
  %v1095 = vsub.f32 %v764, %v1047
  %v1096 = vsub.f32 %v769, %v1047
  %v1097 = vsub.f32 %v772, %v1047
  %v1098 = vsub.f32 %v777, %v1047
  %v1099 = vsub.f32 %v780, %v1047
  %v1100 = vsub.f32 %v785, %v1047
  %v1101 = vsub.f32 %v788, %v1047
  %v1102 = vsub.f32 %v793, %v1047
  %v1103 = vsub.f32 %v796, %v1047
  %v1104 = vsub.f32 %v801, %v1047
  %v1105 = vsub.f32 %v804, %v1047
  %v1106 = vsub.f32 %v809, %v1047
  %v1107 = vsub.f32 %v812, %v1047
  %v1108 = vsub.f32 %v817, %v1047
  %v1109 = vsub.f32 %v820, %v1047
  %v1110 = vsub.f32 %v825, %v1047
  %v1111 = vsub.f32 %v828, %v1047
  %v1112 = vmul.f32 %v1048, %v1048
  %v1113 = vmul.f32 %v1049, %v1049
  %v1114 = vmul.f32 %v1050, %v1050
  %v1115 = vmul.f32 %v1051, %v1051
  %v1116 = vmul.f32 %v1052, %v1052
  %v1117 = vmul.f32 %v1053, %v1053
  %v1118 = vmul.f32 %v1054, %v1054
  %v1119 = vmul.f32 %v1055, %v1055
  %v1120 = vmul.f32 %v1056, %v1056
  %v1121 = vmul.f32 %v1057, %v1057
  %v1122 = vmul.f32 %v1058, %v1058
  %v1123 = vmul.f32 %v1059, %v1059
  %v1124 = vmul.f32 %v1060, %v1060
  %v1125 = vmul.f32 %v1061, %v1061
  %v1126 = vmul.f32 %v1062, %v1062
  %v1127 = vmul.f32 %v1063, %v1063
  %v1128 = vmul.f32 %v1064, %v1064
  %v1129 = vmul.f32 %v1065, %v1065
  %v1130 = vmul.f32 %v1066, %v1066
  %v1131 = vmul.f32 %v1067, %v1067
  %v1132 = vmul.f32 %v1068, %v1068
  %v1133 = vmul.f32 %v1069, %v1069
  %v1134 = vmul.f32 %v1070, %v1070
  %v1135 = vmul.f32 %v1071, %v1071
  %v1136 = vmul.f32 %v1072, %v1072
  %v1137 = vmul.f32 %v1073, %v1073
  %v1138 = vmul.f32 %v1074, %v1074
  %v1139 = vmul.f32 %v1075, %v1075
  %v1140 = vmul.f32 %v1076, %v1076
  %v1141 = vmul.f32 %v1077, %v1077
  %v1142 = vmul.f32 %v1078, %v1078
  %v1143 = vmul.f32 %v1079, %v1079
  %v1144 = vmul.f32 %v1080, %v1080
  %v1145 = vmul.f32 %v1081, %v1081
  %v1146 = vmul.f32 %v1082, %v1082
  %v1147 = vmul.f32 %v1083, %v1083
  %v1148 = vmul.f32 %v1084, %v1084
  %v1149 = vmul.f32 %v1085, %v1085
  %v1150 = vmul.f32 %v1086, %v1086
  %v1151 = vmul.f32 %v1087, %v1087
  %v1152 = vmul.f32 %v1088, %v1088
  %v1153 = vmul.f32 %v1089, %v1089
  %v1154 = vmul.f32 %v1090, %v1090
  %v1155 = vmul.f32 %v1091, %v1091
  %v1156 = vmul.f32 %v1092, %v1092
  %v1157 = vmul.f32 %v1093, %v1093
  %v1158 = vmul.f32 %v1094, %v1094
  %v1159 = vmul.f32 %v1095, %v1095
  %v1160 = vmul.f32 %v1096, %v1096
  %v1161 = vmul.f32 %v1097, %v1097
  %v1162 = vmul.f32 %v1098, %v1098
  %v1163 = vmul.f32 %v1099, %v1099
  %v1164 = vmul.f32 %v1100, %v1100
  %v1165 = vmul.f32 %v1101, %v1101
  %v1166 = vmul.f32 %v1102, %v1102
  %v1167 = vmul.f32 %v1103, %v1103
  %v1168 = vmul.f32 %v1104, %v1104
  %v1169 = vmul.f32 %v1105, %v1105
  %v1170 = vmul.f32 %v1106, %v1106
  %v1171 = vmul.f32 %v1107, %v1107
  %v1172 = vmul.f32 %v1108, %v1108
  %v1173 = vmul.f32 %v1109, %v1109
  %v1174 = vmul.f32 %v1110, %v1110
  %v1175 = vmul.f32 %v1111, %v1111
  %v1176 = vsel %vm831, %v1112, 0.0
  %v1177 = vsel %vm831, %v1113, 0.0
  %v1178 = vadd.f32 %v1176, %v1177
  %v1179 = vsel %vm831, %v1114, 0.0
  %v1180 = vadd.f32 %v1178, %v1179
  %v1181 = vsel %vm831, %v1115, 0.0
  %v1182 = vadd.f32 %v1180, %v1181
  %v1183 = vsel %vm831, %v1116, 0.0
  %v1184 = vadd.f32 %v1182, %v1183
  %v1185 = vsel %vm831, %v1117, 0.0
  %v1186 = vadd.f32 %v1184, %v1185
  %v1187 = vsel %vm831, %v1118, 0.0
  %v1188 = vadd.f32 %v1186, %v1187
  %v1189 = vsel %vm831, %v1119, 0.0
  %v1190 = vadd.f32 %v1188, %v1189
  %v1191 = vsel %vm831, %v1120, 0.0
  %v1192 = vadd.f32 %v1190, %v1191
  %v1193 = vsel %vm831, %v1121, 0.0
  %v1194 = vadd.f32 %v1192, %v1193
  %v1195 = vsel %vm831, %v1122, 0.0
  %v1196 = vadd.f32 %v1194, %v1195
  %v1197 = vsel %vm831, %v1123, 0.0
  %v1198 = vadd.f32 %v1196, %v1197
  %v1199 = vsel %vm831, %v1124, 0.0
  %v1200 = vadd.f32 %v1198, %v1199
  %v1201 = vsel %vm831, %v1125, 0.0
  %v1202 = vadd.f32 %v1200, %v1201
  %v1203 = vsel %vm831, %v1126, 0.0
  %v1204 = vadd.f32 %v1202, %v1203
  %v1205 = vsel %vm831, %v1127, 0.0
  %v1206 = vadd.f32 %v1204, %v1205
  %v1207 = vsel %vm831, %v1128, 0.0
  %v1208 = vadd.f32 %v1206, %v1207
  %v1209 = vsel %vm831, %v1129, 0.0
  %v1210 = vadd.f32 %v1208, %v1209
  %v1211 = vsel %vm831, %v1130, 0.0
  %v1212 = vadd.f32 %v1210, %v1211
  %v1213 = vsel %vm831, %v1131, 0.0
  %v1214 = vadd.f32 %v1212, %v1213
  %v1215 = vsel %vm831, %v1132, 0.0
  %v1216 = vadd.f32 %v1214, %v1215
  %v1217 = vsel %vm831, %v1133, 0.0
  %v1218 = vadd.f32 %v1216, %v1217
  %v1219 = vsel %vm831, %v1134, 0.0
  %v1220 = vadd.f32 %v1218, %v1219
  %v1221 = vsel %vm831, %v1135, 0.0
  %v1222 = vadd.f32 %v1220, %v1221
  %v1223 = vsel %vm831, %v1136, 0.0
  %v1224 = vadd.f32 %v1222, %v1223
  %v1225 = vsel %vm831, %v1137, 0.0
  %v1226 = vadd.f32 %v1224, %v1225
  %v1227 = vsel %vm831, %v1138, 0.0
  %v1228 = vadd.f32 %v1226, %v1227
  %v1229 = vsel %vm831, %v1139, 0.0
  %v1230 = vadd.f32 %v1228, %v1229
  %v1231 = vsel %vm831, %v1140, 0.0
  %v1232 = vadd.f32 %v1230, %v1231
  %v1233 = vsel %vm831, %v1141, 0.0
  %v1234 = vadd.f32 %v1232, %v1233
  %v1235 = vsel %vm831, %v1142, 0.0
  %v1236 = vadd.f32 %v1234, %v1235
  %v1237 = vsel %vm831, %v1143, 0.0
  %v1238 = vadd.f32 %v1236, %v1237
  %v1239 = vsel %vm831, %v1144, 0.0
  %v1240 = vadd.f32 %v1238, %v1239
  %v1241 = vsel %vm831, %v1145, 0.0
  %v1242 = vadd.f32 %v1240, %v1241
  %v1243 = vsel %vm831, %v1146, 0.0
  %v1244 = vadd.f32 %v1242, %v1243
  %v1245 = vsel %vm831, %v1147, 0.0
  %v1246 = vadd.f32 %v1244, %v1245
  %v1247 = vsel %vm831, %v1148, 0.0
  %v1248 = vadd.f32 %v1246, %v1247
  %v1249 = vsel %vm831, %v1149, 0.0
  %v1250 = vadd.f32 %v1248, %v1249
  %v1251 = vsel %vm831, %v1150, 0.0
  %v1252 = vadd.f32 %v1250, %v1251
  %v1253 = vsel %vm831, %v1151, 0.0
  %v1254 = vadd.f32 %v1252, %v1253
  %v1255 = vsel %vm831, %v1152, 0.0
  %v1256 = vadd.f32 %v1254, %v1255
  %v1257 = vsel %vm831, %v1153, 0.0
  %v1258 = vadd.f32 %v1256, %v1257
  %v1259 = vsel %vm831, %v1154, 0.0
  %v1260 = vadd.f32 %v1258, %v1259
  %v1261 = vsel %vm831, %v1155, 0.0
  %v1262 = vadd.f32 %v1260, %v1261
  %v1263 = vsel %vm831, %v1156, 0.0
  %v1264 = vadd.f32 %v1262, %v1263
  %v1265 = vsel %vm831, %v1157, 0.0
  %v1266 = vadd.f32 %v1264, %v1265
  %v1267 = vsel %vm831, %v1158, 0.0
  %v1268 = vadd.f32 %v1266, %v1267
  %v1269 = vsel %vm831, %v1159, 0.0
  %v1270 = vadd.f32 %v1268, %v1269
  %v1271 = vsel %vm831, %v1160, 0.0
  %v1272 = vadd.f32 %v1270, %v1271
  %v1273 = vsel %vm831, %v1161, 0.0
  %v1274 = vadd.f32 %v1272, %v1273
  %v1275 = vsel %vm831, %v1162, 0.0
  %v1276 = vadd.f32 %v1274, %v1275
  %v1277 = vsel %vm831, %v1163, 0.0
  %v1278 = vadd.f32 %v1276, %v1277
  %v1279 = vsel %vm831, %v1164, 0.0
  %v1280 = vadd.f32 %v1278, %v1279
  %v1281 = vsel %vm831, %v1165, 0.0
  %v1282 = vadd.f32 %v1280, %v1281
  %v1283 = vsel %vm831, %v1166, 0.0
  %v1284 = vadd.f32 %v1282, %v1283
  %v1285 = vsel %vm831, %v1167, 0.0
  %v1286 = vadd.f32 %v1284, %v1285
  %v1287 = vsel %vm831, %v1168, 0.0
  %v1288 = vadd.f32 %v1286, %v1287
  %v1289 = vsel %vm831, %v1169, 0.0
  %v1290 = vadd.f32 %v1288, %v1289
  %v1291 = vsel %vm831, %v1170, 0.0
  %v1292 = vadd.f32 %v1290, %v1291
  %v1293 = vsel %vm831, %v1171, 0.0
  %v1294 = vadd.f32 %v1292, %v1293
  %v1295 = vsel %vm831, %v1172, 0.0
  %v1296 = vadd.f32 %v1294, %v1295
  %v1297 = vsel %vm831, %v1173, 0.0
  %v1298 = vadd.f32 %v1296, %v1297
  %v1299 = vsel %vm831, %v1174, 0.0
  %v1300 = vadd.f32 %v1298, %v1299
  %v1301 = vsel %vm831, %v1175, 0.0
  %v1302 = vadd.f32 %v1300, %v1301
  %v1303 = vrot.slane %v1302, 4
  %v1304 = vadd.f32 %v1302, %v1303
  %v1305 = vrot.slane %v1304, 2
  %v1306 = vadd.f32 %v1304, %v1305
  %v1307 = vrot.slane %v1306, 1
  %v1308 = vadd.f32 %v1306, %v1307
  %v1309 = vmul.f32 %v1308, %v965
  %v1311 = vsel %vm831, %v1309, 0
  %1313 = vmatprep.subr.mxu0 0.0
  %1314 = vmatpush1.msra.mxu0 %v967
  %1315 = vmatprep.subr.mxu0 0.0
  %1316 = vmatpush1.msra.mxu0 %v968
  %1317 = vmatprep.subr.mxu0 0.0
  %1318 = vmatpush1.msra.mxu0 %v969
  %1319 = vmatprep.subr.mxu0 0.0
  %1320 = vmatpush1.msra.mxu0 %v970
  %1321 = vmatprep.subr.mxu0 0.0
  %1322 = vmatpush1.msra.mxu0 0.0
  %1323 = vmatprep.subr.mxu0 0.0
  %1324 = vmatpush1.msra.mxu0 0.0
  %1325 = vmatprep.subr.mxu0 0.0
  %1326 = vmatpush1.msra.mxu0 0.0
  %1327 = vmatprep.subr.mxu0 0.0
  %1328 = vmatpush1.msra.mxu0 0.0
  %1329 = vmatprep.subr.mxu0 0.0
  %1330 = vmatpush1.msra.mxu0 0.0
  %1331 = vmatprep.subr.mxu0 0.0
  %1332 = vmatpush1.msra.mxu0 0.0
  %1333 = vmatprep.subr.mxu0 0.0
  %1334 = vmatpush1.msra.mxu0 0.0
  %1335 = vmatprep.subr.mxu0 0.0
  %1336 = vmatpush1.msra.mxu0 0.0
  %1337 = vmatprep.subr.mxu0 0.0
  %1338 = vmatpush1.msra.mxu0 0.0
  %1339 = vmatprep.subr.mxu0 0.0
  %1340 = vmatpush1.msra.mxu0 0.0
  %1341 = vmatprep.subr.mxu0 0.0
  %1342 = vmatpush1.msra.mxu0 0.0
  %1343 = vmatprep.subr.mxu0 0.0
  %1344 = vmatpush1.msra.mxu0 0.0
  %1345 = vmatprep.subr.mxu0 0.0
  %1346 = vmatpush1.msra.mxu0 0.0
  %1347 = vmatprep.subr.mxu0 0.0
  %1348 = vmatpush1.msra.mxu0 0.0
  %1349 = vmatprep.subr.mxu0 0.0
  %1350 = vmatpush1.msra.mxu0 0.0
  %1351 = vmatprep.subr.mxu0 0.0
  %1352 = vmatpush1.msra.mxu0 0.0
  %1353 = vmatprep.subr.mxu0 0.0
  %1354 = vmatpush1.msra.mxu0 0.0
  %1355 = vmatprep.subr.mxu0 0.0
  %1356 = vmatpush1.msra.mxu0 0.0
  %1357 = vmatprep.subr.mxu0 0.0
  %1358 = vmatpush1.msra.mxu0 0.0
  %1359 = vmatprep.subr.mxu0 0.0
  %1360 = vmatpush1.msra.mxu0 0.0
  %1361 = vmatprep.subr.mxu0 0.0
  %1362 = vmatpush1.msra.mxu0 0.0
  %1363 = vmatprep.subr.mxu0 0.0
  %1364 = vmatpush1.msra.mxu0 0.0
  %1365 = vmatprep.subr.mxu0 0.0
  %1366 = vmatpush1.msra.mxu0 0.0
  %1367 = vmatprep.subr.mxu0 0.0
  %1368 = vmatpush1.msra.mxu0 0.0
  %1369 = vmatprep.subr.mxu0 0.0
  %1370 = vmatpush1.msra.mxu0 0.0
  %1371 = vmatprep.subr.mxu0 0.0
  %1372 = vmatpush1.msra.mxu0 0.0
  %1373 = vmatprep.subr.mxu0 0.0
  %1374 = vmatpush1.msra.mxu0 0.0
  %1375 = vmatprep.subr.mxu0 0.0
  %1376 = vmatpush1.msra.mxu0 0.0
  %1377 = vmatprep.mubr.f32.mxu0 0.0
  %1378 = vmatmul.mubr.f32.gmra.mrb[0].mxu0 %v1311
  %v1379 = vpop.f32.mrb[0].mxu0
  %v1380 = vadd.f32 1e-05, %v1379
  %v1381 = vpop.f32.mrb[0].mxu0
  %1382 = vdwg.mxu0
  %v1383 = vrsqrt.pop %v1380
  %v1384 = vlaneseq
  %v1385 = vshrl.u32 %v1384, 7
  %v1386 = vsub.s32 0, %v1385
  %v1387 = vrot.slane %v1383, %v1386
  %v1388 = vmul.f32 %v1048, %v1387
  %v1389 = vmul.f32 %v1049, %v1387
  %v1390 = vmul.f32 %v1050, %v1387
  %v1391 = vmul.f32 %v1051, %v1387
  %v1392 = vmul.f32 %v1052, %v1387
  %v1393 = vmul.f32 %v1053, %v1387
  %v1394 = vmul.f32 %v1054, %v1387
  %v1395 = vmul.f32 %v1055, %v1387
  %v1396 = vmul.f32 %v1056, %v1387
  %v1397 = vmul.f32 %v1057, %v1387
  %v1398 = vmul.f32 %v1058, %v1387
  %v1399 = vmul.f32 %v1059, %v1387
  %v1400 = vmul.f32 %v1060, %v1387
  %v1401 = vmul.f32 %v1061, %v1387
  %v1402 = vmul.f32 %v1062, %v1387
  %v1403 = vmul.f32 %v1063, %v1387
  %v1404 = vmul.f32 %v1064, %v1387
  %v1405 = vmul.f32 %v1065, %v1387
  %v1406 = vmul.f32 %v1066, %v1387
  %v1407 = vmul.f32 %v1067, %v1387
  %v1408 = vmul.f32 %v1068, %v1387
  %v1409 = vmul.f32 %v1069, %v1387
  %v1410 = vmul.f32 %v1070, %v1387
  %v1411 = vmul.f32 %v1071, %v1387
  %v1412 = vmul.f32 %v1072, %v1387
  %v1413 = vmul.f32 %v1073, %v1387
  %v1414 = vmul.f32 %v1074, %v1387
  %v1415 = vmul.f32 %v1075, %v1387
  %v1416 = vmul.f32 %v1076, %v1387
  %v1417 = vmul.f32 %v1077, %v1387
  %v1418 = vmul.f32 %v1078, %v1387
  %v1419 = vmul.f32 %v1079, %v1387
  %v1420 = vmul.f32 %v1080, %v1387
  %v1421 = vmul.f32 %v1081, %v1387
  %v1422 = vmul.f32 %v1082, %v1387
  %v1423 = vmul.f32 %v1083, %v1387
  %v1424 = vmul.f32 %v1084, %v1387
  %v1425 = vmul.f32 %v1085, %v1387
  %v1426 = vmul.f32 %v1086, %v1387
  %v1427 = vmul.f32 %v1087, %v1387
  %v1428 = vmul.f32 %v1088, %v1387
  %v1429 = vmul.f32 %v1089, %v1387
  %v1430 = vmul.f32 %v1090, %v1387
  %v1431 = vmul.f32 %v1091, %v1387
  %v1432 = vmul.f32 %v1092, %v1387
  %v1433 = vmul.f32 %v1093, %v1387
  %v1434 = vmul.f32 %v1094, %v1387
  %v1435 = vmul.f32 %v1095, %v1387
  %v1436 = vmul.f32 %v1096, %v1387
  %v1437 = vmul.f32 %v1097, %v1387
  %v1438 = vmul.f32 %v1098, %v1387
  %v1439 = vmul.f32 %v1099, %v1387
  %v1440 = vmul.f32 %v1100, %v1387
  %v1441 = vmul.f32 %v1101, %v1387
  %v1442 = vmul.f32 %v1102, %v1387
  %v1443 = vmul.f32 %v1103, %v1387
  %v1444 = vmul.f32 %v1104, %v1387
  %v1445 = vmul.f32 %v1105, %v1387
  %v1446 = vmul.f32 %v1106, %v1387
  %v1447 = vmul.f32 %v1107, %v1387
  %v1448 = vmul.f32 %v1108, %v1387
  %v1449 = vmul.f32 %v1109, %v1387
  %v1450 = vmul.f32 %v1110, %v1387
  %v1451 = vmul.f32 %v1111, %v1387
  %v1452 = vld [vmem:[%s3] sm:$0x1]
  %v1454 = vlaneseq
  %v1455 = vshrl.u32 %v1454, 7
  %v1456 = vsub.s32 0, %v1455
  %v1457 = vrot.slane %v1452, %v1456
  %v1459 = vmul.f32 %v1388, %v1457
  %v1460 = vmul.f32 %v1389, %v1457
  %v1461 = vmul.f32 %v1390, %v1457
  %v1462 = vmul.f32 %v1391, %v1457
  %v1463 = vmul.f32 %v1392, %v1457
  %v1464 = vmul.f32 %v1393, %v1457
  %v1465 = vmul.f32 %v1394, %v1457
  %v1466 = vmul.f32 %v1395, %v1457
  %v1467 = vmul.f32 %v1396, %v1457
  %v1468 = vmul.f32 %v1397, %v1457
  %v1469 = vmul.f32 %v1398, %v1457
  %v1470 = vmul.f32 %v1399, %v1457
  %v1471 = vmul.f32 %v1400, %v1457
  %v1472 = vmul.f32 %v1401, %v1457
  %v1473 = vmul.f32 %v1402, %v1457
  %v1474 = vmul.f32 %v1403, %v1457
  %v1475 = vmul.f32 %v1404, %v1457
  %v1476 = vmul.f32 %v1405, %v1457
  %v1477 = vmul.f32 %v1406, %v1457
  %v1478 = vmul.f32 %v1407, %v1457
  %v1479 = vmul.f32 %v1408, %v1457
  %v1480 = vmul.f32 %v1409, %v1457
  %v1481 = vmul.f32 %v1410, %v1457
  %v1482 = vmul.f32 %v1411, %v1457
  %v1483 = vmul.f32 %v1412, %v1457
  %v1484 = vmul.f32 %v1413, %v1457
  %v1485 = vmul.f32 %v1414, %v1457
  %v1486 = vmul.f32 %v1415, %v1457
  %v1487 = vmul.f32 %v1416, %v1457
  %v1488 = vmul.f32 %v1417, %v1457
  %v1489 = vmul.f32 %v1418, %v1457
  %v1490 = vmul.f32 %v1419, %v1457
  %v1491 = vmul.f32 %v1420, %v1457
  %v1492 = vmul.f32 %v1421, %v1457
  %v1493 = vmul.f32 %v1422, %v1457
  %v1494 = vmul.f32 %v1423, %v1457
  %v1495 = vmul.f32 %v1424, %v1457
  %v1496 = vmul.f32 %v1425, %v1457
  %v1497 = vmul.f32 %v1426, %v1457
  %v1498 = vmul.f32 %v1427, %v1457
  %v1499 = vmul.f32 %v1428, %v1457
  %v1500 = vmul.f32 %v1429, %v1457
  %v1501 = vmul.f32 %v1430, %v1457
  %v1502 = vmul.f32 %v1431, %v1457
  %v1503 = vmul.f32 %v1432, %v1457
  %v1504 = vmul.f32 %v1433, %v1457
  %v1505 = vmul.f32 %v1434, %v1457
  %v1506 = vmul.f32 %v1435, %v1457
  %v1507 = vmul.f32 %v1436, %v1457
  %v1508 = vmul.f32 %v1437, %v1457
  %v1509 = vmul.f32 %v1438, %v1457
  %v1510 = vmul.f32 %v1439, %v1457
  %v1511 = vmul.f32 %v1440, %v1457
  %v1512 = vmul.f32 %v1441, %v1457
  %v1513 = vmul.f32 %v1442, %v1457
  %v1514 = vmul.f32 %v1443, %v1457
  %v1515 = vmul.f32 %v1444, %v1457
  %v1516 = vmul.f32 %v1445, %v1457
  %v1517 = vmul.f32 %v1446, %v1457
  %v1518 = vmul.f32 %v1447, %v1457
  %v1519 = vmul.f32 %v1448, %v1457
  %v1520 = vmul.f32 %v1449, %v1457
  %v1521 = vmul.f32 %v1450, %v1457
  %v1522 = vmul.f32 %v1451, %v1457
  %v1523 = vld [vmem:[%s4] sm:$0x1]
  %v1525 = vlaneseq
  %v1526 = vshrl.u32 %v1525, 7
  %v1527 = vsub.s32 0, %v1526
  %v1528 = vrot.slane %v1523, %v1527
  %v1530 = vadd.f32 %v1459, %v1528
  %v1531 = vadd.f32 %v1460, %v1528
  %v1532 = vadd.f32 %v1461, %v1528
  %v1533 = vadd.f32 %v1462, %v1528
  %v1534 = vadd.f32 %v1463, %v1528
  %v1535 = vadd.f32 %v1464, %v1528
  %v1536 = vadd.f32 %v1465, %v1528
  %v1537 = vadd.f32 %v1466, %v1528
  %v1538 = vadd.f32 %v1467, %v1528
  %v1539 = vadd.f32 %v1468, %v1528
  %v1540 = vadd.f32 %v1469, %v1528
  %v1541 = vadd.f32 %v1470, %v1528
  %v1542 = vadd.f32 %v1471, %v1528
  %v1543 = vadd.f32 %v1472, %v1528
  %v1544 = vadd.f32 %v1473, %v1528
  %v1545 = vadd.f32 %v1474, %v1528
  %v1546 = vadd.f32 %v1475, %v1528
  %v1547 = vadd.f32 %v1476, %v1528
  %v1548 = vadd.f32 %v1477, %v1528
  %v1549 = vadd.f32 %v1478, %v1528
  %v1550 = vadd.f32 %v1479, %v1528
  %v1551 = vadd.f32 %v1480, %v1528
  %v1552 = vadd.f32 %v1481, %v1528
  %v1553 = vadd.f32 %v1482, %v1528
  %v1554 = vadd.f32 %v1483, %v1528
  %v1555 = vadd.f32 %v1484, %v1528
  %v1556 = vadd.f32 %v1485, %v1528
  %v1557 = vadd.f32 %v1486, %v1528
  %v1558 = vadd.f32 %v1487, %v1528
  %v1559 = vadd.f32 %v1488, %v1528
  %v1560 = vadd.f32 %v1489, %v1528
  %v1561 = vadd.f32 %v1490, %v1528
  %v1562 = vadd.f32 %v1491, %v1528
  %v1563 = vadd.f32 %v1492, %v1528
  %v1564 = vadd.f32 %v1493, %v1528
  %v1565 = vadd.f32 %v1494, %v1528
  %v1566 = vadd.f32 %v1495, %v1528
  %v1567 = vadd.f32 %v1496, %v1528
  %v1568 = vadd.f32 %v1497, %v1528
  %v1569 = vadd.f32 %v1498, %v1528
  %v1570 = vadd.f32 %v1499, %v1528
  %v1571 = vadd.f32 %v1500, %v1528
  %v1572 = vadd.f32 %v1501, %v1528
  %v1573 = vadd.f32 %v1502, %v1528
  %v1574 = vadd.f32 %v1503, %v1528
  %v1575 = vadd.f32 %v1504, %v1528
  %v1576 = vadd.f32 %v1505, %v1528
  %v1577 = vadd.f32 %v1506, %v1528
  %v1578 = vadd.f32 %v1507, %v1528
  %v1579 = vadd.f32 %v1508, %v1528
  %v1580 = vadd.f32 %v1509, %v1528
  %v1581 = vadd.f32 %v1510, %v1528
  %v1582 = vadd.f32 %v1511, %v1528
  %v1583 = vadd.f32 %v1512, %v1528
  %v1584 = vadd.f32 %v1513, %v1528
  %v1585 = vadd.f32 %v1514, %v1528
  %v1586 = vadd.f32 %v1515, %v1528
  %v1587 = vadd.f32 %v1516, %v1528
  %v1588 = vadd.f32 %v1517, %v1528
  %v1589 = vadd.f32 %v1518, %v1528
  %v1590 = vadd.f32 %v1519, %v1528
  %v1591 = vadd.f32 %v1520, %v1528
  %v1592 = vadd.f32 %v1521, %v1528
  %v1593 = vadd.f32 %v1522, %v1528
  %v1594 = vmax.f32 %v1530, 0.0
  %v1595 = vmax.f32 %v1531, 0.0
  %v1596 = vmax.f32 %v1532, 0.0
  %v1597 = vmax.f32 %v1533, 0.0
  %v1598 = vmax.f32 %v1534, 0.0
  %v1599 = vmax.f32 %v1535, 0.0
  %v1600 = vmax.f32 %v1536, 0.0
  %v1601 = vmax.f32 %v1537, 0.0
  %v1602 = vmax.f32 %v1538, 0.0
  %v1603 = vmax.f32 %v1539, 0.0
  %v1604 = vmax.f32 %v1540, 0.0
  %v1605 = vmax.f32 %v1541, 0.0
  %v1606 = vmax.f32 %v1542, 0.0
  %v1607 = vmax.f32 %v1543, 0.0
  %v1608 = vmax.f32 %v1544, 0.0
  %v1609 = vmax.f32 %v1545, 0.0
  %v1610 = vmax.f32 %v1546, 0.0
  %v1611 = vmax.f32 %v1547, 0.0
  %v1612 = vmax.f32 %v1548, 0.0
  %v1613 = vmax.f32 %v1549, 0.0
  %v1614 = vmax.f32 %v1550, 0.0
  %v1615 = vmax.f32 %v1551, 0.0
  %v1616 = vmax.f32 %v1552, 0.0
  %v1617 = vmax.f32 %v1553, 0.0
  %v1618 = vmax.f32 %v1554, 0.0
  %v1619 = vmax.f32 %v1555, 0.0
  %v1620 = vmax.f32 %v1556, 0.0
  %v1621 = vmax.f32 %v1557, 0.0
  %v1622 = vmax.f32 %v1558, 0.0
  %v1623 = vmax.f32 %v1559, 0.0
  %v1624 = vmax.f32 %v1560, 0.0
  %v1625 = vmax.f32 %v1561, 0.0
  %v1626 = vmax.f32 %v1562, 0.0
  %v1627 = vmax.f32 %v1563, 0.0
  %v1628 = vmax.f32 %v1564, 0.0
  %v1629 = vmax.f32 %v1565, 0.0
  %v1630 = vmax.f32 %v1566, 0.0
  %v1631 = vmax.f32 %v1567, 0.0
  %v1632 = vmax.f32 %v1568, 0.0
  %v1633 = vmax.f32 %v1569, 0.0
  %v1634 = vmax.f32 %v1570, 0.0
  %v1635 = vmax.f32 %v1571, 0.0
  %v1636 = vmax.f32 %v1572, 0.0
  %v1637 = vmax.f32 %v1573, 0.0
  %v1638 = vmax.f32 %v1574, 0.0
  %v1639 = vmax.f32 %v1575, 0.0
  %v1640 = vmax.f32 %v1576, 0.0
  %v1641 = vmax.f32 %v1577, 0.0
  %v1642 = vmax.f32 %v1578, 0.0
  %v1643 = vmax.f32 %v1579, 0.0
  %v1644 = vmax.f32 %v1580, 0.0
  %v1645 = vmax.f32 %v1581, 0.0
  %v1646 = vmax.f32 %v1582, 0.0
  %v1647 = vmax.f32 %v1583, 0.0
  %v1648 = vmax.f32 %v1584, 0.0
  %v1649 = vmax.f32 %v1585, 0.0
  %v1650 = vmax.f32 %v1586, 0.0
  %v1651 = vmax.f32 %v1587, 0.0
  %v1652 = vmax.f32 %v1588, 0.0
  %v1653 = vmax.f32 %v1589, 0.0
  %v1654 = vmax.f32 %v1590, 0.0
  %v1655 = vmax.f32 %v1591, 0.0
  %v1656 = vmax.f32 %v1592, 0.0
  %v1657 = vmax.f32 %v1593, 0.0
  %v1658 = vpack.c.bf16 %v1595, %v1594
  %v1659 = vpack.c.bf16 %v1597, %v1596
  %v1660 = vpack.c.bf16 %v1599, %v1598
  %v1661 = vpack.c.bf16 %v1601, %v1600
  %v1662 = vpack.c.bf16 %v1603, %v1602
  %v1663 = vpack.c.bf16 %v1605, %v1604
  %v1664 = vpack.c.bf16 %v1607, %v1606
  %v1665 = vpack.c.bf16 %v1609, %v1608
  %v1666 = vpack.c.bf16 %v1611, %v1610
  %v1667 = vpack.c.bf16 %v1613, %v1612
  %v1668 = vpack.c.bf16 %v1615, %v1614
  %v1669 = vpack.c.bf16 %v1617, %v1616
  %v1670 = vpack.c.bf16 %v1619, %v1618
  %v1671 = vpack.c.bf16 %v1621, %v1620
  %v1672 = vpack.c.bf16 %v1623, %v1622
  %v1673 = vpack.c.bf16 %v1625, %v1624
  %v1674 = vpack.c.bf16 %v1627, %v1626
  %v1675 = vpack.c.bf16 %v1629, %v1628
  %v1676 = vpack.c.bf16 %v1631, %v1630
  %v1677 = vpack.c.bf16 %v1633, %v1632
  %v1678 = vpack.c.bf16 %v1635, %v1634
  %v1679 = vpack.c.bf16 %v1637, %v1636
  %v1680 = vpack.c.bf16 %v1639, %v1638
  %v1681 = vpack.c.bf16 %v1641, %v1640
  %v1682 = vpack.c.bf16 %v1643, %v1642
  %v1683 = vpack.c.bf16 %v1645, %v1644
  %v1684 = vpack.c.bf16 %v1647, %v1646
  %v1685 = vpack.c.bf16 %v1649, %v1648
  %v1686 = vpack.c.bf16 %v1651, %v1650
  %v1687 = vpack.c.bf16 %v1653, %v1652
  %v1688 = vpack.c.bf16 %v1655, %v1654
  %v1689 = vpack.c.bf16 %v1657, %v1656
  %v1722 = vunpack.c.l.b16 %v1658
  %v1723 = vunpack.c.h.b16 %v1658
  %v1724 = vunpack.c.l.b16 %v1659
  %v1725 = vunpack.c.h.b16 %v1659
  %v1726 = vunpack.c.l.b16 %v1660
  %v1727 = vunpack.c.h.b16 %v1660
  %v1728 = vunpack.c.l.b16 %v1661
  %v1729 = vunpack.c.h.b16 %v1661
  %v1730 = vunpack.c.l.b16 %v1662
  %v1731 = vunpack.c.h.b16 %v1662
  %v1732 = vunpack.c.l.b16 %v1663
  %v1733 = vunpack.c.h.b16 %v1663
  %v1734 = vunpack.c.l.b16 %v1664
  %v1735 = vunpack.c.h.b16 %v1664
  %v1736 = vunpack.c.l.b16 %v1665
  %v1737 = vunpack.c.h.b16 %v1665
  %v1738 = vunpack.c.l.b16 %v1666
  %v1739 = vunpack.c.h.b16 %v1666
  %v1740 = vunpack.c.l.b16 %v1667
  %v1741 = vunpack.c.h.b16 %v1667
  %v1742 = vunpack.c.l.b16 %v1668
  %v1743 = vunpack.c.h.b16 %v1668
  %v1744 = vunpack.c.l.b16 %v1669
  %v1745 = vunpack.c.h.b16 %v1669
  %v1746 = vunpack.c.l.b16 %v1670
  %v1747 = vunpack.c.h.b16 %v1670
  %v1748 = vunpack.c.l.b16 %v1671
  %v1749 = vunpack.c.h.b16 %v1671
  %v1750 = vunpack.c.l.b16 %v1672
  %v1751 = vunpack.c.h.b16 %v1672
  %v1752 = vunpack.c.l.b16 %v1673
  %v1753 = vunpack.c.h.b16 %v1673
  %v1754 = vunpack.c.l.b16 %v1674
  %v1755 = vunpack.c.h.b16 %v1674
  %v1756 = vunpack.c.l.b16 %v1675
  %v1757 = vunpack.c.h.b16 %v1675
  %v1758 = vunpack.c.l.b16 %v1676
  %v1759 = vunpack.c.h.b16 %v1676
  %v1760 = vunpack.c.l.b16 %v1677
  %v1761 = vunpack.c.h.b16 %v1677
  %v1762 = vunpack.c.l.b16 %v1678
  %v1763 = vunpack.c.h.b16 %v1678
  %v1764 = vunpack.c.l.b16 %v1679
  %v1765 = vunpack.c.h.b16 %v1679
  %v1766 = vunpack.c.l.b16 %v1680
  %v1767 = vunpack.c.h.b16 %v1680
  %v1768 = vunpack.c.l.b16 %v1681
  %v1769 = vunpack.c.h.b16 %v1681
  %v1770 = vunpack.c.l.b16 %v1682
  %v1771 = vunpack.c.h.b16 %v1682
  %v1772 = vunpack.c.l.b16 %v1683
  %v1773 = vunpack.c.h.b16 %v1683
  %v1774 = vunpack.c.l.b16 %v1684
  %v1775 = vunpack.c.h.b16 %v1684
  %v1776 = vunpack.c.l.b16 %v1685
  %v1777 = vunpack.c.h.b16 %v1685
  %v1778 = vunpack.c.l.b16 %v1686
  %v1779 = vunpack.c.h.b16 %v1686
  %v1780 = vunpack.c.l.b16 %v1687
  %v1781 = vunpack.c.h.b16 %v1687
  %v1782 = vunpack.c.l.b16 %v1688
  %v1783 = vunpack.c.h.b16 %v1688
  %v1784 = vunpack.c.l.b16 %v1689
  %v1785 = vunpack.c.h.b16 %v1689
  %v1786 = vpack.c.b16 %v1722, %v1722
  %v1787 = vpack.c.b16 %v1723, %v1723
  %v1788 = vpack.c.b16 %v1724, %v1724
  %v1789 = vpack.c.b16 %v1725, %v1725
  %v1790 = vpack.c.b16 %v1726, %v1726
  %v1791 = vpack.c.b16 %v1727, %v1727
  %v1792 = vpack.c.b16 %v1728, %v1728
  %v1793 = vpack.c.b16 %v1729, %v1729
  %v1794 = vpack.c.b16 %v1730, %v1730
  %v1795 = vpack.c.b16 %v1731, %v1731
  %v1796 = vpack.c.b16 %v1732, %v1732
  %v1797 = vpack.c.b16 %v1733, %v1733
  %v1798 = vpack.c.b16 %v1734, %v1734
  %v1799 = vpack.c.b16 %v1735, %v1735
  %v1800 = vpack.c.b16 %v1736, %v1736
  %v1801 = vpack.c.b16 %v1737, %v1737
  %v1802 = vpack.c.b16 %v1738, %v1738
  %v1803 = vpack.c.b16 %v1739, %v1739
  %v1804 = vpack.c.b16 %v1740, %v1740
  %v1805 = vpack.c.b16 %v1741, %v1741
  %v1806 = vpack.c.b16 %v1742, %v1742
  %v1807 = vpack.c.b16 %v1743, %v1743
  %v1808 = vpack.c.b16 %v1744, %v1744
  %v1809 = vpack.c.b16 %v1745, %v1745
  %v1810 = vpack.c.b16 %v1746, %v1746
  %v1811 = vpack.c.b16 %v1747, %v1747
  %v1812 = vpack.c.b16 %v1748, %v1748
  %v1813 = vpack.c.b16 %v1749, %v1749
  %v1814 = vpack.c.b16 %v1750, %v1750
  %v1815 = vpack.c.b16 %v1751, %v1751
  %v1816 = vpack.c.b16 %v1752, %v1752
  %v1817 = vpack.c.b16 %v1753, %v1753
  %v1818 = vpack.c.b16 %v1754, %v1754
  %v1819 = vpack.c.b16 %v1755, %v1755
  %v1820 = vpack.c.b16 %v1756, %v1756
  %v1821 = vpack.c.b16 %v1757, %v1757
  %v1822 = vpack.c.b16 %v1758, %v1758
  %v1823 = vpack.c.b16 %v1759, %v1759
  %v1824 = vpack.c.b16 %v1760, %v1760
  %v1825 = vpack.c.b16 %v1761, %v1761
  %v1826 = vpack.c.b16 %v1762, %v1762
  %v1827 = vpack.c.b16 %v1763, %v1763
  %v1828 = vpack.c.b16 %v1764, %v1764
  %v1829 = vpack.c.b16 %v1765, %v1765
  %v1830 = vpack.c.b16 %v1766, %v1766
  %v1831 = vpack.c.b16 %v1767, %v1767
  %v1832 = vpack.c.b16 %v1768, %v1768
  %v1833 = vpack.c.b16 %v1769, %v1769
  %v1834 = vpack.c.b16 %v1770, %v1770
  %v1835 = vpack.c.b16 %v1771, %v1771
  %v1836 = vpack.c.b16 %v1772, %v1772
  %v1837 = vpack.c.b16 %v1773, %v1773
  %v1838 = vpack.c.b16 %v1774, %v1774
  %v1839 = vpack.c.b16 %v1775, %v1775
  %v1840 = vpack.c.b16 %v1776, %v1776
  %v1841 = vpack.c.b16 %v1777, %v1777
  %v1842 = vpack.c.b16 %v1778, %v1778
  %v1843 = vpack.c.b16 %v1779, %v1779
  %v1844 = vpack.c.b16 %v1780, %v1780
  %v1845 = vpack.c.b16 %v1781, %v1781
  %v1846 = vpack.c.b16 %v1782, %v1782
  %v1847 = vpack.c.b16 %v1783, %v1783
  %v1848 = vpack.c.b16 %v1784, %v1784
  %v1849 = vpack.c.b16 %v1785, %v1785
  %vm1914 = vcmask 257024
  %1915 = vst.msk [vmem:[%s5] sm:$0xf] %vm1914, %v1786
  %1916 = vst.msk [vmem:[%s5 + $0x4] sm:$0xf] %vm1914, %v1787
  %1917 = vst.msk [vmem:[%s5 + $0x8] sm:$0xf] %vm1914, %v1788
  %1918 = vst.msk [vmem:[%s5 + $0xc] sm:$0xf] %vm1914, %v1789
  %1919 = vst.msk [vmem:[%s5 + $0x10] sm:$0xf] %vm1914, %v1790
  %1920 = vst.msk [vmem:[%s5 + $0x14] sm:$0xf] %vm1914, %v1791
  %1921 = vst.msk [vmem:[%s5 + $0x18] sm:$0xf] %vm1914, %v1792
  %1922 = vst.msk [vmem:[%s5 + $0x1c] sm:$0xf] %vm1914, %v1793
  %1923 = vst.msk [vmem:[%s5 + $0x20] sm:$0xf] %vm1914, %v1794
  %1924 = vst.msk [vmem:[%s5 + $0x24] sm:$0xf] %vm1914, %v1795
  %1925 = vst.msk [vmem:[%s5 + $0x28] sm:$0xf] %vm1914, %v1796
  %1926 = vst.msk [vmem:[%s5 + $0x2c] sm:$0xf] %vm1914, %v1797
  %1927 = vst.msk [vmem:[%s5 + $0x30] sm:$0xf] %vm1914, %v1798
  %1928 = vst.msk [vmem:[%s5 + $0x34] sm:$0xf] %vm1914, %v1799
  %1929 = vst.msk [vmem:[%s5 + $0x38] sm:$0xf] %vm1914, %v1800
  %1930 = vst.msk [vmem:[%s5 + $0x3c] sm:$0xf] %vm1914, %v1801
  %1931 = vst.msk [vmem:[%s5 + $0x40] sm:$0xf] %vm1914, %v1802
  %1932 = vst.msk [vmem:[%s5 + $0x44] sm:$0xf] %vm1914, %v1803
  %1933 = vst.msk [vmem:[%s5 + $0x48] sm:$0xf] %vm1914, %v1804
  %1934 = vst.msk [vmem:[%s5 + $0x4c] sm:$0xf] %vm1914, %v1805
  %1935 = vst.msk [vmem:[%s5 + $0x50] sm:$0xf] %vm1914, %v1806
  %1936 = vst.msk [vmem:[%s5 + $0x54] sm:$0xf] %vm1914, %v1807
  %1937 = vst.msk [vmem:[%s5 + $0x58] sm:$0xf] %vm1914, %v1808
  %1938 = vst.msk [vmem:[%s5 + $0x5c] sm:$0xf] %vm1914, %v1809
  %1939 = vst.msk [vmem:[%s5 + $0x60] sm:$0xf] %vm1914, %v1810
  %1940 = vst.msk [vmem:[%s5 + $0x64] sm:$0xf] %vm1914, %v1811
  %1941 = vst.msk [vmem:[%s5 + $0x68] sm:$0xf] %vm1914, %v1812
  %1942 = vst.msk [vmem:[%s5 + $0x6c] sm:$0xf] %vm1914, %v1813
  %1943 = vst.msk [vmem:[%s5 + $0x70] sm:$0xf] %vm1914, %v1814
  %1944 = vst.msk [vmem:[%s5 + $0x74] sm:$0xf] %vm1914, %v1815
  %1945 = vst.msk [vmem:[%s5 + $0x78] sm:$0xf] %vm1914, %v1816
  %1946 = vst.msk [vmem:[%s5 + $0x7c] sm:$0xf] %vm1914, %v1817
  %1947 = vst.msk [vmem:[%s5 + $0x80] sm:$0xf] %vm1914, %v1818
  %1948 = vst.msk [vmem:[%s5 + $0x84] sm:$0xf] %vm1914, %v1819
  %1949 = vst.msk [vmem:[%s5 + $0x88] sm:$0xf] %vm1914, %v1820
  %1950 = vst.msk [vmem:[%s5 + $0x8c] sm:$0xf] %vm1914, %v1821
  %1951 = vst.msk [vmem:[%s5 + $0x90] sm:$0xf] %vm1914, %v1822
  %1952 = vst.msk [vmem:[%s5 + $0x94] sm:$0xf] %vm1914, %v1823
  %1953 = vst.msk [vmem:[%s5 + $0x98] sm:$0xf] %vm1914, %v1824
  %1954 = vst.msk [vmem:[%s5 + $0x9c] sm:$0xf] %vm1914, %v1825
  %1955 = vst.msk [vmem:[%s5 + $0xa0] sm:$0xf] %vm1914, %v1826
  %1956 = vst.msk [vmem:[%s5 + $0xa4] sm:$0xf] %vm1914, %v1827
  %1957 = vst.msk [vmem:[%s5 + $0xa8] sm:$0xf] %vm1914, %v1828
  %1958 = vst.msk [vmem:[%s5 + $0xac] sm:$0xf] %vm1914, %v1829
  %1959 = vst.msk [vmem:[%s5 + $0xb0] sm:$0xf] %vm1914, %v1830
  %1960 = vst.msk [vmem:[%s5 + $0xb4] sm:$0xf] %vm1914, %v1831
  %1961 = vst.msk [vmem:[%s5 + $0xb8] sm:$0xf] %vm1914, %v1832
  %1962 = vst.msk [vmem:[%s5 + $0xbc] sm:$0xf] %vm1914, %v1833
  %1963 = vst.msk [vmem:[%s5 + $0xc0] sm:$0xf] %vm1914, %v1834
  %1964 = vst.msk [vmem:[%s5 + $0xc4] sm:$0xf] %vm1914, %v1835
  %1965 = vst.msk [vmem:[%s5 + $0xc8] sm:$0xf] %vm1914, %v1836
  %1966 = vst.msk [vmem:[%s5 + $0xcc] sm:$0xf] %vm1914, %v1837
  %1967 = vst.msk [vmem:[%s5 + $0xd0] sm:$0xf] %vm1914, %v1838
  %1968 = vst.msk [vmem:[%s5 + $0xd4] sm:$0xf] %vm1914, %v1839
  %1969 = vst.msk [vmem:[%s5 + $0xd8] sm:$0xf] %vm1914, %v1840
  %1970 = vst.msk [vmem:[%s5 + $0xdc] sm:$0xf] %vm1914, %v1841
  %1971 = vst.msk [vmem:[%s5 + $0xe0] sm:$0xf] %vm1914, %v1842
  %1972 = vst.msk [vmem:[%s5 + $0xe4] sm:$0xf] %vm1914, %v1843
  %1973 = vst.msk [vmem:[%s5 + $0xe8] sm:$0xf] %vm1914, %v1844
  %1974 = vst.msk [vmem:[%s5 + $0xec] sm:$0xf] %vm1914, %v1845
  %1975 = vst.msk [vmem:[%s5 + $0xf0] sm:$0xf] %vm1914, %v1846
  %1976 = vst.msk [vmem:[%s5 + $0xf4] sm:$0xf] %vm1914, %v1847
  %1977 = vst.msk [vmem:[%s5 + $0xf8] sm:$0xf] %vm1914, %v1848
  %1978 = vst.msk [vmem:[%s5 + $0xfc] sm:$0xf] %vm1914, %v1849
  // Predicated region
  $region22: #{generator_forward.10} parent=0 // pred_check
    _
  $region23: #{generator_forward.10} parent=0 // pred_check_branch
    %1980 = sbr.rel (0) target = $region25
  $region24: #{generator_forward.10} parent=0 // pred_region
    _
  $region25: #{generator_forward.10} parent=0 // pred_fallthru
    _
  // Predicated region
  $region26: #{generator_forward.10} parent=0 // pred_check
    _
  $region27: #{generator_forward.10} parent=0 // pred_check_branch
    %1982 = sbr.rel (0) target = $region29
  $region28: #{generator_forward.10} parent=0 // pred_region
    _
  $region29: #{generator_forward.10} parent=0 // pred_fallthru
    _

// kernel: generator_forward.11
$region0: #{generator_forward.11}
  #allocation0 [shape = 'u32[]', space=smem, size = 0x4, offset = 0x4, fixed_abs, tag = 'smem constant byte address 0x4 - core index']
  #allocation1 [shape = 'u32[144,128]{1,0:T(1,128)}', space=vmem, size = 0x12000, scoped, tag = 'internal scratch']
  %s0 = inlined_call_operand.vmem [shape: bf16[3,200], index: 0, kind: input, shape index: {}]
  %s1 = inlined_call_operand.vmem [shape: bf16[200,2048], index: 1, kind: input, shape index: {}]
  %s2 = inlined_call_operand.vmem [shape: f32[3,2048], index: 2, kind: output, shape index: {}]
  %s3 = sld [smem:[#allocation0]]
  $region64: #{generator_forward.11} parent=0
    _
  %s5 = ssub.s32 1, %s3
  %s6 = scalar_select 0, %s5, %s3
  $region1: #{generator_forward.11} parent=0
    #allocation2 [shape = 'u8[819200]{0}', space=vmem, size = 0xc8000, scoped, tag = 'input window, operand 1']
    loop: start=0, step=1, limit=4
    $region2: #{generator_forward.11} parent=1 // loop_pre_header
      _
    $region3: #{generator_forward.11} parent=1 // loop_header
      %s8 = sphi 0, %s12
      %p9 = scmp.ge.s32.totalorder %s8, 4
      %s16 = sphi 0, %s16
      %s18 = sphi 0, %s16
      %s19 = sphi 0, %s18
      %s33 = sphi 0, %s19
      %s39 = sphi 0, %s41
      %s42 = sphi 0, %s39
      %s43 = sphi 0, %s42
      %s59 = sphi 0, %s43
      %s65 = sphi 0, %s67
      %s68 = sphi 0, %s65
      %s69 = sphi 0, %s68
      %s85 = sphi 0, %s69
    $region4: #{generator_forward.11} parent=1 // loop_header_branch
      %11 = sbr.rel (%p9) target = $region8
    $region5: #{generator_forward.11} parent=1 // loop_body
      %s13 = ssub.s32 %s8, 1
      %s14 = ssub.s32 %s8, 2
      %s15 = sadd.s32 %s8, 1
      %s17 = sadd.s32 %s16, 1
      %p20 = scmp.eq.s32.totalorder %s8, 1
      %p21 = scmp.ne.s32.totalorder %s16, %s18
      %p22 = scmp.eq.s32.totalorder %s8, 0
      %p23 = por %p21, %p22
      %p24 = scmp.ne.s32.totalorder %s16, %s18
      %p25 = scmp.eq.s32.totalorder %s13, 1
      %p26 = por %p24, %p25
      %p27 = scmp.ne.s32.totalorder %s18, %s19
      %p28 = scmp.eq.s32.totalorder %s13, 0
      %p29 = por %p27, %p28
      %p30 = scmp.ne.s32.totalorder %s18, %s19
      %p31 = scmp.eq.s32.totalorder %s14, 1
      %p32 = por %p30, %p31
      %p34 = scmp.ne.s32.totalorder %s19, %s33
      %p35 = scmp.eq.s32.totalorder %s14, 0
      %p36 = por %p34, %p35
      %s37 = ssub.s32 %s8, %s15
      %p38 = scmp.eq.s32.totalorder %s37, 0
      %s40 = sadd.s32 %s39, 1
      %s41 = scalar_select %p38, %s39, %s40
      %p44 = pneg %p38
      %p45 = scmp.eq.s32.totalorder %s8, 1
      %p46 = por %p44, %p45
      %p47 = scmp.ne.s32.totalorder %s39, %s42
      %p48 = scmp.eq.s32.totalorder %s8, 0
      %p49 = por %p47, %p48
      %p50 = scmp.ne.s32.totalorder %s39, %s42
      %p51 = scmp.eq.s32.totalorder %s13, 1
      %p52 = por %p50, %p51
      %p53 = scmp.ne.s32.totalorder %s42, %s43
      %p54 = scmp.eq.s32.totalorder %s13, 0
      %p55 = por %p53, %p54
      %p56 = scmp.ne.s32.totalorder %s42, %s43
      %p57 = scmp.eq.s32.totalorder %s14, 1
      %p58 = por %p56, %p57
      %p60 = scmp.ne.s32.totalorder %s43, %s59
      %p61 = scmp.eq.s32.totalorder %s14, 0
      %p62 = por %p60, %p61
      %s63 = ssub.s32 %s8, %s15
      %p64 = scmp.eq.s32.totalorder %s63, 0
      %s66 = sadd.s32 %s65, 1
      %s67 = scalar_select %p64, %s65, %s66
      %p70 = pneg %p64
      %p71 = scmp.eq.s32.totalorder %s8, 1
      %p72 = por %p70, %p71
      %p73 = scmp.ne.s32.totalorder %s65, %s68
      %p74 = scmp.eq.s32.totalorder %s8, 0
      %p75 = por %p73, %p74
      %p76 = scmp.ne.s32.totalorder %s65, %s68
      %p77 = scmp.eq.s32.totalorder %s13, 1
      %p78 = por %p76, %p77
      %p79 = scmp.ne.s32.totalorder %s68, %s69
      %p80 = scmp.eq.s32.totalorder %s13, 0
      %p81 = por %p79, %p80
      %p82 = scmp.ne.s32.totalorder %s68, %s69
      %p83 = scmp.eq.s32.totalorder %s14, 1
      %p84 = por %p82, %p83
      %p86 = scmp.ne.s32.totalorder %s69, %s85
      %p87 = scmp.eq.s32.totalorder %s14, 0
      %p88 = por %p86, %p87
      %p89 = scmp.le.s32.totalorder 1, %s8
      %p90 = scmp.lt.s32.totalorder %s8, 3
      %p91 = pnand %p89, %p90
      %p92 = pneg %p91
      // Predicated region
      $region9: #{generator_forward.11} parent=5 // pred_check
        _
      $region10: #{generator_forward.11} parent=5 // pred_check_branch
        %94 = sbr.rel (%p91) target = $region12
      $region11: #{generator_forward.11} parent=5 // pred_region
        %s95 = ssub.s32 %s8, 1
        // Predicated region
        $region13: #{generator_forward.11} parent=11 // pred_check
          %p96 = pneg %p29
        $region14: #{generator_forward.11} parent=11 // pred_check_branch
          %98 = sbr.rel (%p96) target = $region16
        $region15: #{generator_forward.11} parent=11 // pred_region
          _
        $region16: #{generator_forward.11} parent=11 // pred_fallthru
          _
      $region12: #{generator_forward.11} parent=5 // pred_fallthru
        _
      %p99 = scmp.lt.s32.totalorder %s8, 2
      // Predicated region
      $region17: #{generator_forward.11} parent=5 // pred_check
        %p100 = pneg %p99
      $region18: #{generator_forward.11} parent=5 // pred_check_branch
        %102 = sbr.rel (%p100) target = $region20
      $region19: #{generator_forward.11} parent=5 // pred_region
        // Predicated region
        $region21: #{generator_forward.11} parent=19 // pred_check
          %p103 = pneg %p49
        $region22: #{generator_forward.11} parent=19 // pred_check_branch
          %105 = sbr.rel (%p103) target = $region24
        $region23: #{generator_forward.11} parent=19 // pred_region
          %s106 = sand.u32 %s39, 1
          %s107 = sand.u32 %s39, 1
          %s108 = smul.addr %s107, 800
          %s109 = scalar_lea.vmem [#allocation2], %s108
          %s110 = smul.u32 8, %s8
          %s111 = smul.addr %s110, 4
          %s112 = scalar_lea.vmem %s1, %s111
          // Predicated region
          $region25: #{generator_forward.11} parent=23 // pred_check
            _
          $region26: #{generator_forward.11} parent=23 // pred_check_branch
            %114 = sbr.rel (0) target = $region28
          $region27: #{generator_forward.11} parent=23 // pred_region
            // Predicated region
            $region29: #{generator_forward.11} parent=27 // pred_check
              _
            $region30: #{generator_forward.11} parent=27 // pred_check_branch
              %116 = sbr.rel (0) target = $region32
            $region31: #{generator_forward.11} parent=27 // pred_region
              loop: start=0, step=1, limit=1
              $region33: #{generator_forward.11} parent=31 // loop_pre_header
                _
              $region34: #{generator_forward.11} parent=31 // loop_header
                %s118 = sphi 0, %s122
                %p119 = scmp.ge.s32.totalorder %s118, 1
                %s123 = sphi %s112, %s112
                %s124 = sphi %s109, %s109
              $region35: #{generator_forward.11} parent=31 // loop_header_branch
                %121 = sbr.rel (%p119) target = $region39
              $region36: #{generator_forward.11} parent=31 // loop_body
                %v125 = vld [vmem:[%s123] sm:$0xff]
                %126 = vst [vmem:[%s124] sm:$0xff] %v125
                %v127 = vld [vmem:[%s123 + $0x8] sm:$0xff]
                %128 = vst [vmem:[%s124 + $0x8] sm:$0xff] %v127
                %v129 = vld [vmem:[%s123 + $0x10] sm:$0xff]
                %130 = vst [vmem:[%s124 + $0x10] sm:$0xff] %v129
                %v131 = vld [vmem:[%s123 + $0x18] sm:$0xff]
                %132 = vst [vmem:[%s124 + $0x18] sm:$0xff] %v131
                %v133 = vld [vmem:[%s123 + $0x40] sm:$0xff]
                %134 = vst [vmem:[%s124 + $0x20] sm:$0xff] %v133
                %v135 = vld [vmem:[%s123 + $0x48] sm:$0xff]
                %136 = vst [vmem:[%s124 + $0x28] sm:$0xff] %v135
                %v137 = vld [vmem:[%s123 + $0x50] sm:$0xff]
                %138 = vst [vmem:[%s124 + $0x30] sm:$0xff] %v137
                %v139 = vld [vmem:[%s123 + $0x58] sm:$0xff]
                %140 = vst [vmem:[%s124 + $0x38] sm:$0xff] %v139
                %v141 = vld [vmem:[%s123 + $0x80] sm:$0xff]
                %142 = vst [vmem:[%s124 + $0x40] sm:$0xff] %v141
                %v143 = vld [vmem:[%s123 + $0x88] sm:$0xff]
                %144 = vst [vmem:[%s124 + $0x48] sm:$0xff] %v143
                %v145 = vld [vmem:[%s123 + $0x90] sm:$0xff]
                %146 = vst [vmem:[%s124 + $0x50] sm:$0xff] %v145
                %v147 = vld [vmem:[%s123 + $0x98] sm:$0xff]
                %148 = vst [vmem:[%s124 + $0x58] sm:$0xff] %v147
                %v149 = vld [vmem:[%s123 + $0xc0] sm:$0xff]
                %150 = vst [vmem:[%s124 + $0x60] sm:$0xff] %v149
                %v151 = vld [vmem:[%s123 + $0xc8] sm:$0xff]
                %152 = vst [vmem:[%s124 + $0x68] sm:$0xff] %v151
                %v153 = vld [vmem:[%s123 + $0xd0] sm:$0xff]
                %154 = vst [vmem:[%s124 + $0x70] sm:$0xff] %v153
                %v155 = vld [vmem:[%s123 + $0xd8] sm:$0xff]
                %156 = vst [vmem:[%s124 + $0x78] sm:$0xff] %v155
                %v157 = vld [vmem:[%s123 + $0x100] sm:$0xff]
                %158 = vst [vmem:[%s124 + $0x80] sm:$0xff] %v157
                %v159 = vld [vmem:[%s123 + $0x108] sm:$0xff]
                %160 = vst [vmem:[%s124 + $0x88] sm:$0xff] %v159
                %v161 = vld [vmem:[%s123 + $0x110] sm:$0xff]
                %162 = vst [vmem:[%s124 + $0x90] sm:$0xff] %v161
                %v163 = vld [vmem:[%s123 + $0x118] sm:$0xff]
                %164 = vst [vmem:[%s124 + $0x98] sm:$0xff] %v163
                %v165 = vld [vmem:[%s123 + $0x140] sm:$0xff]
                %166 = vst [vmem:[%s124 + $0xa0] sm:$0xff] %v165
                %v167 = vld [vmem:[%s123 + $0x148] sm:$0xff]
                %168 = vst [vmem:[%s124 + $0xa8] sm:$0xff] %v167
                %v169 = vld [vmem:[%s123 + $0x150] sm:$0xff]
                %170 = vst [vmem:[%s124 + $0xb0] sm:$0xff] %v169
                %v171 = vld [vmem:[%s123 + $0x158] sm:$0xff]
                %172 = vst [vmem:[%s124 + $0xb8] sm:$0xff] %v171
                %v173 = vld [vmem:[%s123 + $0x180] sm:$0xff]
                %174 = vst [vmem:[%s124 + $0xc0] sm:$0xff] %v173
                %v175 = vld [vmem:[%s123 + $0x188] sm:$0xff]
                %176 = vst [vmem:[%s124 + $0xc8] sm:$0xff] %v175
                %v177 = vld [vmem:[%s123 + $0x190] sm:$0xff]
                %178 = vst [vmem:[%s124 + $0xd0] sm:$0xff] %v177
                %v179 = vld [vmem:[%s123 + $0x198] sm:$0xff]
                %180 = vst [vmem:[%s124 + $0xd8] sm:$0xff] %v179
                %v181 = vld [vmem:[%s123 + $0x1c0] sm:$0xff]
                %182 = vst [vmem:[%s124 + $0xe0] sm:$0xff] %v181
                %v183 = vld [vmem:[%s123 + $0x1c8] sm:$0xff]
                %184 = vst [vmem:[%s124 + $0xe8] sm:$0xff] %v183
                %v185 = vld [vmem:[%s123 + $0x1d0] sm:$0xff]
                %186 = vst [vmem:[%s124 + $0xf0] sm:$0xff] %v185
                %v187 = vld [vmem:[%s123 + $0x1d8] sm:$0xff]
                %188 = vst [vmem:[%s124 + $0xf8] sm:$0xff] %v187
                %v189 = vld [vmem:[%s123 + $0x200] sm:$0xff]
                %190 = vst [vmem:[%s124 + $0x100] sm:$0xff] %v189
                %v191 = vld [vmem:[%s123 + $0x208] sm:$0xff]
                %192 = vst [vmem:[%s124 + $0x108] sm:$0xff] %v191
                %v193 = vld [vmem:[%s123 + $0x210] sm:$0xff]
                %194 = vst [vmem:[%s124 + $0x110] sm:$0xff] %v193
                %v195 = vld [vmem:[%s123 + $0x218] sm:$0xff]
                %196 = vst [vmem:[%s124 + $0x118] sm:$0xff] %v195
                %v197 = vld [vmem:[%s123 + $0x240] sm:$0xff]
                %198 = vst [vmem:[%s124 + $0x120] sm:$0xff] %v197
                %v199 = vld [vmem:[%s123 + $0x248] sm:$0xff]
                %200 = vst [vmem:[%s124 + $0x128] sm:$0xff] %v199
                %v201 = vld [vmem:[%s123 + $0x250] sm:$0xff]
                %202 = vst [vmem:[%s124 + $0x130] sm:$0xff] %v201
                %v203 = vld [vmem:[%s123 + $0x258] sm:$0xff]
                %204 = vst [vmem:[%s124 + $0x138] sm:$0xff] %v203
                %v205 = vld [vmem:[%s123 + $0x280] sm:$0xff]
                %206 = vst [vmem:[%s124 + $0x140] sm:$0xff] %v205
                %v207 = vld [vmem:[%s123 + $0x288] sm:$0xff]
                %208 = vst [vmem:[%s124 + $0x148] sm:$0xff] %v207
                %v209 = vld [vmem:[%s123 + $0x290] sm:$0xff]
                %210 = vst [vmem:[%s124 + $0x150] sm:$0xff] %v209
                %v211 = vld [vmem:[%s123 + $0x298] sm:$0xff]
                %212 = vst [vmem:[%s124 + $0x158] sm:$0xff] %v211
                %v213 = vld [vmem:[%s123 + $0x2c0] sm:$0xff]
                %214 = vst [vmem:[%s124 + $0x160] sm:$0xff] %v213
                %v215 = vld [vmem:[%s123 + $0x2c8] sm:$0xff]
                %216 = vst [vmem:[%s124 + $0x168] sm:$0xff] %v215
                %v217 = vld [vmem:[%s123 + $0x2d0] sm:$0xff]
                %218 = vst [vmem:[%s124 + $0x170] sm:$0xff] %v217
                %v219 = vld [vmem:[%s123 + $0x2d8] sm:$0xff]
                %220 = vst [vmem:[%s124 + $0x178] sm:$0xff] %v219
                %v221 = vld [vmem:[%s123 + $0x300] sm:$0xff]
                %222 = vst [vmem:[%s124 + $0x180] sm:$0xff] %v221
                %v223 = vld [vmem:[%s123 + $0x308] sm:$0xff]
                %224 = vst [vmem:[%s124 + $0x188] sm:$0xff] %v223
                %v225 = vld [vmem:[%s123 + $0x310] sm:$0xff]
                %226 = vst [vmem:[%s124 + $0x190] sm:$0xff] %v225
                %v227 = vld [vmem:[%s123 + $0x318] sm:$0xff]
                %228 = vst [vmem:[%s124 + $0x198] sm:$0xff] %v227
                %v229 = vld [vmem:[%s123 + $0x340] sm:$0xff]
                %230 = vst [vmem:[%s124 + $0x1a0] sm:$0xff] %v229
                %v231 = vld [vmem:[%s123 + $0x348] sm:$0xff]
                %232 = vst [vmem:[%s124 + $0x1a8] sm:$0xff] %v231
                %v233 = vld [vmem:[%s123 + $0x350] sm:$0xff]
                %234 = vst [vmem:[%s124 + $0x1b0] sm:$0xff] %v233
                %v235 = vld [vmem:[%s123 + $0x358] sm:$0xff]
                %236 = vst [vmem:[%s124 + $0x1b8] sm:$0xff] %v235
                %v237 = vld [vmem:[%s123 + $0x380] sm:$0xff]
                %238 = vst [vmem:[%s124 + $0x1c0] sm:$0xff] %v237
                %v239 = vld [vmem:[%s123 + $0x388] sm:$0xff]
                %240 = vst [vmem:[%s124 + $0x1c8] sm:$0xff] %v239
                %v241 = vld [vmem:[%s123 + $0x390] sm:$0xff]
                %242 = vst [vmem:[%s124 + $0x1d0] sm:$0xff] %v241
                %v243 = vld [vmem:[%s123 + $0x398] sm:$0xff]
                %244 = vst [vmem:[%s124 + $0x1d8] sm:$0xff] %v243
                %v245 = vld [vmem:[%s123 + $0x3c0] sm:$0xff]
                %246 = vst [vmem:[%s124 + $0x1e0] sm:$0xff] %v245
                %v247 = vld [vmem:[%s123 + $0x3c8] sm:$0xff]
                %248 = vst [vmem:[%s124 + $0x1e8] sm:$0xff] %v247
                %v249 = vld [vmem:[%s123 + $0x3d0] sm:$0xff]
                %250 = vst [vmem:[%s124 + $0x1f0] sm:$0xff] %v249
                %v251 = vld [vmem:[%s123 + $0x3d8] sm:$0xff]
                %252 = vst [vmem:[%s124 + $0x1f8] sm:$0xff] %v251
                %v253 = vld [vmem:[%s123 + $0x400] sm:$0xff]
                %254 = vst [vmem:[%s124 + $0x200] sm:$0xff] %v253
                %v255 = vld [vmem:[%s123 + $0x408] sm:$0xff]
                %256 = vst [vmem:[%s124 + $0x208] sm:$0xff] %v255
                %v257 = vld [vmem:[%s123 + $0x410] sm:$0xff]
                %258 = vst [vmem:[%s124 + $0x210] sm:$0xff] %v257
                %v259 = vld [vmem:[%s123 + $0x418] sm:$0xff]
                %260 = vst [vmem:[%s124 + $0x218] sm:$0xff] %v259
                %v261 = vld [vmem:[%s123 + $0x440] sm:$0xff]
                %262 = vst [vmem:[%s124 + $0x220] sm:$0xff] %v261
                %v263 = vld [vmem:[%s123 + $0x448] sm:$0xff]
                %264 = vst [vmem:[%s124 + $0x228] sm:$0xff] %v263
                %v265 = vld [vmem:[%s123 + $0x450] sm:$0xff]
                %266 = vst [vmem:[%s124 + $0x230] sm:$0xff] %v265
                %v267 = vld [vmem:[%s123 + $0x458] sm:$0xff]
                %268 = vst [vmem:[%s124 + $0x238] sm:$0xff] %v267
                %v269 = vld [vmem:[%s123 + $0x480] sm:$0xff]
                %270 = vst [vmem:[%s124 + $0x240] sm:$0xff] %v269
                %v271 = vld [vmem:[%s123 + $0x488] sm:$0xff]
                %272 = vst [vmem:[%s124 + $0x248] sm:$0xff] %v271
                %v273 = vld [vmem:[%s123 + $0x490] sm:$0xff]
                %274 = vst [vmem:[%s124 + $0x250] sm:$0xff] %v273
                %v275 = vld [vmem:[%s123 + $0x498] sm:$0xff]
                %276 = vst [vmem:[%s124 + $0x258] sm:$0xff] %v275
                %v277 = vld [vmem:[%s123 + $0x4c0] sm:$0xff]
                %278 = vst [vmem:[%s124 + $0x260] sm:$0xff] %v277
                %v279 = vld [vmem:[%s123 + $0x4c8] sm:$0xff]
                %280 = vst [vmem:[%s124 + $0x268] sm:$0xff] %v279
                %v281 = vld [vmem:[%s123 + $0x4d0] sm:$0xff]
                %282 = vst [vmem:[%s124 + $0x270] sm:$0xff] %v281
                %v283 = vld [vmem:[%s123 + $0x4d8] sm:$0xff]
                %284 = vst [vmem:[%s124 + $0x278] sm:$0xff] %v283
                %v285 = vld [vmem:[%s123 + $0x500] sm:$0xff]
                %286 = vst [vmem:[%s124 + $0x280] sm:$0xff] %v285
                %v287 = vld [vmem:[%s123 + $0x508] sm:$0xff]
                %288 = vst [vmem:[%s124 + $0x288] sm:$0xff] %v287
                %v289 = vld [vmem:[%s123 + $0x510] sm:$0xff]
                %290 = vst [vmem:[%s124 + $0x290] sm:$0xff] %v289
                %v291 = vld [vmem:[%s123 + $0x518] sm:$0xff]
                %292 = vst [vmem:[%s124 + $0x298] sm:$0xff] %v291
                %v293 = vld [vmem:[%s123 + $0x540] sm:$0xff]
                %294 = vst [vmem:[%s124 + $0x2a0] sm:$0xff] %v293
                %v295 = vld [vmem:[%s123 + $0x548] sm:$0xff]
                %296 = vst [vmem:[%s124 + $0x2a8] sm:$0xff] %v295
                %v297 = vld [vmem:[%s123 + $0x550] sm:$0xff]
                %298 = vst [vmem:[%s124 + $0x2b0] sm:$0xff] %v297
                %v299 = vld [vmem:[%s123 + $0x558] sm:$0xff]
                %300 = vst [vmem:[%s124 + $0x2b8] sm:$0xff] %v299
                %v301 = vld [vmem:[%s123 + $0x580] sm:$0xff]
                %302 = vst [vmem:[%s124 + $0x2c0] sm:$0xff] %v301
                %v303 = vld [vmem:[%s123 + $0x588] sm:$0xff]
                %304 = vst [vmem:[%s124 + $0x2c8] sm:$0xff] %v303
                %v305 = vld [vmem:[%s123 + $0x590] sm:$0xff]
                %306 = vst [vmem:[%s124 + $0x2d0] sm:$0xff] %v305
                %v307 = vld [vmem:[%s123 + $0x598] sm:$0xff]
                %308 = vst [vmem:[%s124 + $0x2d8] sm:$0xff] %v307
                %v309 = vld [vmem:[%s123 + $0x5c0] sm:$0xff]
                %310 = vst [vmem:[%s124 + $0x2e0] sm:$0xff] %v309
                %v311 = vld [vmem:[%s123 + $0x5c8] sm:$0xff]
                %312 = vst [vmem:[%s124 + $0x2e8] sm:$0xff] %v311
                %v313 = vld [vmem:[%s123 + $0x5d0] sm:$0xff]
                %314 = vst [vmem:[%s124 + $0x2f0] sm:$0xff] %v313
                %v315 = vld [vmem:[%s123 + $0x5d8] sm:$0xff]
                %316 = vst [vmem:[%s124 + $0x2f8] sm:$0xff] %v315
                %v317 = vld [vmem:[%s123 + $0x600] sm:$0xff]
                %318 = vst [vmem:[%s124 + $0x300] sm:$0xff] %v317
                %v319 = vld [vmem:[%s123 + $0x608] sm:$0xff]
                %320 = vst [vmem:[%s124 + $0x308] sm:$0xff] %v319
                %v321 = vld [vmem:[%s123 + $0x610] sm:$0xff]
                %322 = vst [vmem:[%s124 + $0x310] sm:$0xff] %v321
                %v323 = vld [vmem:[%s123 + $0x618] sm:$0xff]
                %324 = vst [vmem:[%s124 + $0x318] sm:$0xff] %v323
              $region37: #{generator_forward.11} parent=31 // loop_footer
                %s122 = sadd.s32 1, %s118
              $region38: #{generator_forward.11} parent=31 // loop_footer_branch
                %117 = sbr.rel target = $region34
              $region39: #{generator_forward.11} parent=31 // loop_exit
                _
            $region32: #{generator_forward.11} parent=27 // pred_fallthru
              _
            // Predicated region
            $region40: #{generator_forward.11} parent=27 // pred_check
              _
            $region41: #{generator_forward.11} parent=27 // pred_check_branch
              %326 = sbr.rel target = $region43
            $region42: #{generator_forward.11} parent=27 // pred_region
              _
            $region43: #{generator_forward.11} parent=27 // pred_fallthru
              _
          $region28: #{generator_forward.11} parent=23 // pred_fallthru
            _
          %327 = vnop
        $region24: #{generator_forward.11} parent=19 // pred_fallthru
          _
      $region20: #{generator_forward.11} parent=5 // pred_fallthru
        _
      %p328 = scmp.le.s32.totalorder 1, %s8
      %p329 = scmp.lt.s32.totalorder %s8, 3
      %p330 = pnand %p328, %p329
      %p331 = pneg %p330
      // Predicated region
      $region44: #{generator_forward.11} parent=5 // pred_check
        _
      $region45: #{generator_forward.11} parent=5 // pred_check_branch
        %333 = sbr.rel (%p330) target = $region47
      $region46: #{generator_forward.11} parent=5 // pred_region
        %s334 = ssub.s32 %s8, 1
        %s335 = sand.u32 %s42, 1
        %s336 = sand.u32 %s42, 1
        %s337 = smul.addr %s336, 800
        %s338 = scalar_lea.vmem [#allocation2], %s337
        // Predicated region
        $region48: #{generator_forward.11} parent=46 // pred_check
          %p339 = pneg %p55
        $region49: #{generator_forward.11} parent=46 // pred_check_branch
          %341 = sbr.rel (%p339) target = $region51
        $region50: #{generator_forward.11} parent=46 // pred_region
          _
        $region51: #{generator_forward.11} parent=46 // pred_fallthru
          _
        %p342 = pneg %p29
        %p343 = pneg %p26
        %s344 = sand.u32 %s42, 1
        %s345 = sand.u32 %s42, 1
        %s346 = smul.addr %s345, 800
        %s347 = scalar_lea.vmem [#allocation2], %s346
        %p348 = pneg %p55
        %p349 = pneg %p52
        %p350 = pneg %p81
        %p351 = pneg %p78
        %s352 = smul.u32 8, %s13
        %p353 = scmp.lt.s32.totalorder %s352, 15
        %s354 = scalar_select %p353, %s352, 15
        %s355 = smul.addr %s354, 4
        %s356 = scalar_lea.vmem %s2, %s355
        %s357 = smul.u32 8, %s13
        %s358 = smul.u32 8, %s13
        %p359 = scmp.lt.s32.totalorder %s358, 15
        %s360 = scalar_select %p359, %s358, 15
        %s361 = smul.addr %s360, 4
        %s362 = scalar_lea.vmem %s2, %s361
        %s363 = smul.u32 8, %s13
        %v365 = vld [vmem:[%s0] sm:$0xf]
        %v366 = vld [vmem:[%s338] sm:$0xff]
        %v367 = vld [vmem:[%s338 + $0x8] sm:$0xff]
        %v368 = vld [vmem:[%s338 + $0x10] sm:$0xff]
        %v369 = vld [vmem:[%s338 + $0x18] sm:$0xff]
        %v370 = vld [vmem:[%s338 + $0x20] sm:$0xff]
        %v371 = vld [vmem:[%s338 + $0x28] sm:$0xff]
        %v372 = vld [vmem:[%s338 + $0x30] sm:$0xff]
        %v373 = vld [vmem:[%s338 + $0x38] sm:$0xff]
        %v374 = vld [vmem:[%s338 + $0x40] sm:$0xff]
        %v375 = vld [vmem:[%s338 + $0x48] sm:$0xff]
        %v376 = vld [vmem:[%s338 + $0x50] sm:$0xff]
        %v377 = vld [vmem:[%s338 + $0x58] sm:$0xff]
        %v378 = vld [vmem:[%s338 + $0x60] sm:$0xff]
        %v379 = vld [vmem:[%s338 + $0x68] sm:$0xff]
        %v380 = vld [vmem:[%s338 + $0x70] sm:$0xff]
        %v381 = vld [vmem:[%s338 + $0x78] sm:$0xff]
        %v382 = vld [vmem:[%s338 + $0x80] sm:$0xff]
        %v383 = vld [vmem:[%s338 + $0x88] sm:$0xff]
        %v384 = vld [vmem:[%s338 + $0x90] sm:$0xff]
        %v385 = vld [vmem:[%s338 + $0x98] sm:$0xff]
        %v386 = vld [vmem:[%s338 + $0xa0] sm:$0xff]
        %v387 = vld [vmem:[%s338 + $0xa8] sm:$0xff]
        %v388 = vld [vmem:[%s338 + $0xb0] sm:$0xff]
        %v389 = vld [vmem:[%s338 + $0xb8] sm:$0xff]
        %v390 = vld [vmem:[%s338 + $0xc0] sm:$0xff]
        %v391 = vld [vmem:[%s338 + $0xc8] sm:$0xff]
        %v392 = vld [vmem:[%s338 + $0xd0] sm:$0xff]
        %v393 = vld [vmem:[%s338 + $0xd8] sm:$0xff]
        %v394 = vld [vmem:[%s338 + $0xe0] sm:$0xff]
        %v395 = vld [vmem:[%s338 + $0xe8] sm:$0xff]
        %v396 = vld [vmem:[%s338 + $0xf0] sm:$0xff]
        %v397 = vld [vmem:[%s338 + $0xf8] sm:$0xff]
        %v398 = vld [vmem:[%s338 + $0x100] sm:$0xff]
        %v399 = vld [vmem:[%s338 + $0x108] sm:$0xff]
        %v400 = vld [vmem:[%s338 + $0x110] sm:$0xff]
        %v401 = vld [vmem:[%s338 + $0x118] sm:$0xff]
        %v402 = vld [vmem:[%s338 + $0x120] sm:$0xff]
        %v403 = vld [vmem:[%s338 + $0x128] sm:$0xff]
        %v404 = vld [vmem:[%s338 + $0x130] sm:$0xff]
        %v405 = vld [vmem:[%s338 + $0x138] sm:$0xff]
        %v406 = vld [vmem:[%s338 + $0x140] sm:$0xff]
        %v407 = vld [vmem:[%s338 + $0x148] sm:$0xff]
        %v408 = vld [vmem:[%s338 + $0x150] sm:$0xff]
        %v409 = vld [vmem:[%s338 + $0x158] sm:$0xff]
        %v410 = vld [vmem:[%s338 + $0x160] sm:$0xff]
        %v411 = vld [vmem:[%s338 + $0x168] sm:$0xff]
        %v412 = vld [vmem:[%s338 + $0x170] sm:$0xff]
        %v413 = vld [vmem:[%s338 + $0x178] sm:$0xff]
        %v414 = vld [vmem:[%s338 + $0x180] sm:$0xff]
        %v415 = vld [vmem:[%s338 + $0x188] sm:$0xff]
        %v416 = vld [vmem:[%s338 + $0x190] sm:$0xff]
        %v417 = vld [vmem:[%s338 + $0x198] sm:$0xff]
        %v418 = vld [vmem:[%s338 + $0x1a0] sm:$0xff]
        %v419 = vld [vmem:[%s338 + $0x1a8] sm:$0xff]
        %v420 = vld [vmem:[%s338 + $0x1b0] sm:$0xff]
        %v421 = vld [vmem:[%s338 + $0x1b8] sm:$0xff]
        %v422 = vld [vmem:[%s338 + $0x1c0] sm:$0xff]
        %v423 = vld [vmem:[%s338 + $0x1c8] sm:$0xff]
        %v424 = vld [vmem:[%s338 + $0x1d0] sm:$0xff]
        %v425 = vld [vmem:[%s338 + $0x1d8] sm:$0xff]
        %v426 = vld [vmem:[%s338 + $0x1e0] sm:$0xff]
        %v427 = vld [vmem:[%s338 + $0x1e8] sm:$0xff]
        %v428 = vld [vmem:[%s338 + $0x1f0] sm:$0xff]
        %v429 = vld [vmem:[%s338 + $0x1f8] sm:$0xff]
        %v430 = vld [vmem:[%s338 + $0x200] sm:$0xff]
        %v431 = vld [vmem:[%s338 + $0x208] sm:$0xff]
        %v432 = vld [vmem:[%s338 + $0x210] sm:$0xff]
        %v433 = vld [vmem:[%s338 + $0x218] sm:$0xff]
        %v434 = vld [vmem:[%s338 + $0x220] sm:$0xff]
        %v435 = vld [vmem:[%s338 + $0x228] sm:$0xff]
        %v436 = vld [vmem:[%s338 + $0x230] sm:$0xff]
        %v437 = vld [vmem:[%s338 + $0x238] sm:$0xff]
        %v438 = vld [vmem:[%s338 + $0x240] sm:$0xff]
        %v439 = vld [vmem:[%s338 + $0x248] sm:$0xff]
        %v440 = vld [vmem:[%s338 + $0x250] sm:$0xff]
        %v441 = vld [vmem:[%s338 + $0x258] sm:$0xff]
        %v442 = vld [vmem:[%s338 + $0x260] sm:$0xff]
        %v443 = vld [vmem:[%s338 + $0x268] sm:$0xff]
        %v444 = vld [vmem:[%s338 + $0x270] sm:$0xff]
        %v445 = vld [vmem:[%s338 + $0x278] sm:$0xff]
        %v446 = vld [vmem:[%s338 + $0x280] sm:$0xff]
        %v447 = vld [vmem:[%s338 + $0x288] sm:$0xff]
        %v448 = vld [vmem:[%s338 + $0x290] sm:$0xff]
        %v449 = vld [vmem:[%s338 + $0x298] sm:$0xff]
        %v450 = vld [vmem:[%s338 + $0x2a0] sm:$0xff]
        %v451 = vld [vmem:[%s338 + $0x2a8] sm:$0xff]
        %v452 = vld [vmem:[%s338 + $0x2b0] sm:$0xff]
        %v453 = vld [vmem:[%s338 + $0x2b8] sm:$0xff]
        %v454 = vld [vmem:[%s338 + $0x2c0] sm:$0xff]
        %v455 = vld [vmem:[%s338 + $0x2c8] sm:$0xff]
        %v456 = vld [vmem:[%s338 + $0x2d0] sm:$0xff]
        %v457 = vld [vmem:[%s338 + $0x2d8] sm:$0xff]
        %v458 = vld [vmem:[%s338 + $0x2e0] sm:$0xff]
        %v459 = vld [vmem:[%s338 + $0x2e8] sm:$0xff]
        %v460 = vld [vmem:[%s338 + $0x2f0] sm:$0xff]
        %v461 = vld [vmem:[%s338 + $0x2f8] sm:$0xff]
        %v462 = vld [vmem:[%s338 + $0x300] sm:$0xff]
        %v463 = vld [vmem:[%s338 + $0x308] sm:$0xff]
        %v464 = vld [vmem:[%s338 + $0x310] sm:$0xff]
        %v465 = vld [vmem:[%s338 + $0x318] sm:$0xff]
        %v468 = vunpack.c.l.s4 1983009808
        %v469 = vunpack.c.0.s8 %v468
        %v470 = vlaneseq
        %v471 = vshrl.u32 %v470, 7
        %v472 = vsub.s32 %v469, %v471
        %v473 = vrot.slane %v365, %v472
        %v474 = vcombine.high %v473, %v473
        %v576 = vunpack.c.l.b16 %v366
        %v577 = vunpack.c.h.b16 %v366
        %v578 = vunpack.c.l.b16 %v367
        %v579 = vunpack.c.h.b16 %v367
        %v580 = vunpack.c.l.b16 %v368
        %v581 = vunpack.c.h.b16 %v368
        %v582 = vunpack.c.l.b16 %v369
        %v583 = vunpack.c.h.b16 %v369
        %v584 = vunpack.c.l.b16 %v370
        %v585 = vunpack.c.h.b16 %v370
        %v586 = vunpack.c.l.b16 %v371
        %v587 = vunpack.c.h.b16 %v371
        %v588 = vunpack.c.l.b16 %v372
        %v589 = vunpack.c.h.b16 %v372
        %v590 = vunpack.c.l.b16 %v373
        %v591 = vunpack.c.h.b16 %v373
        %v592 = vunpack.c.l.b16 %v374
        %v593 = vunpack.c.h.b16 %v374
        %v594 = vunpack.c.l.b16 %v375
        %v595 = vunpack.c.h.b16 %v375
        %v596 = vunpack.c.l.b16 %v376
        %v597 = vunpack.c.h.b16 %v376
        %v598 = vunpack.c.l.b16 %v377
        %v599 = vunpack.c.h.b16 %v377
        %v600 = vunpack.c.l.b16 %v378
        %v601 = vunpack.c.h.b16 %v378
        %v602 = vunpack.c.l.b16 %v379
        %v603 = vunpack.c.h.b16 %v379
        %v604 = vunpack.c.l.b16 %v380
        %v605 = vunpack.c.h.b16 %v380
        %v606 = vunpack.c.l.b16 %v381
        %v607 = vunpack.c.h.b16 %v381
        %v608 = vunpack.c.l.b16 %v382
        %v609 = vunpack.c.h.b16 %v382
        %v610 = vunpack.c.l.b16 %v383
        %v611 = vunpack.c.h.b16 %v383
        %v612 = vunpack.c.l.b16 %v384
        %v613 = vunpack.c.h.b16 %v384
        %v614 = vunpack.c.l.b16 %v385
        %v615 = vunpack.c.h.b16 %v385
        %v616 = vunpack.c.l.b16 %v386
        %v617 = vunpack.c.h.b16 %v386
        %v618 = vunpack.c.l.b16 %v387
        %v619 = vunpack.c.h.b16 %v387
        %v620 = vunpack.c.l.b16 %v388
        %v621 = vunpack.c.h.b16 %v388
        %v622 = vunpack.c.l.b16 %v389
        %v623 = vunpack.c.h.b16 %v389
        %v624 = vunpack.c.l.b16 %v390
        %v625 = vunpack.c.h.b16 %v390
        %v626 = vunpack.c.l.b16 %v391
        %v627 = vunpack.c.h.b16 %v391
        %v628 = vunpack.c.l.b16 %v392
        %v629 = vunpack.c.h.b16 %v392
        %v630 = vunpack.c.l.b16 %v393
        %v631 = vunpack.c.h.b16 %v393
        %v632 = vunpack.c.l.b16 %v394
        %v633 = vunpack.c.h.b16 %v394
        %v634 = vunpack.c.l.b16 %v395
        %v635 = vunpack.c.h.b16 %v395
        %v636 = vunpack.c.l.b16 %v396
        %v637 = vunpack.c.h.b16 %v396
        %v638 = vunpack.c.l.b16 %v397
        %v639 = vunpack.c.h.b16 %v397
        %v640 = vunpack.c.l.b16 %v398
        %v641 = vunpack.c.h.b16 %v398
        %v642 = vunpack.c.l.b16 %v399
        %v643 = vunpack.c.h.b16 %v399
        %v644 = vunpack.c.l.b16 %v400
        %v645 = vunpack.c.h.b16 %v400
        %v646 = vunpack.c.l.b16 %v401
        %v647 = vunpack.c.h.b16 %v401
        %v648 = vunpack.c.l.b16 %v402
        %v649 = vunpack.c.h.b16 %v402
        %v650 = vunpack.c.l.b16 %v403
        %v651 = vunpack.c.h.b16 %v403
        %v652 = vunpack.c.l.b16 %v404
        %v653 = vunpack.c.h.b16 %v404
        %v654 = vunpack.c.l.b16 %v405
        %v655 = vunpack.c.h.b16 %v405
        %v656 = vunpack.c.l.b16 %v406
        %v657 = vunpack.c.h.b16 %v406
        %v658 = vunpack.c.l.b16 %v407
        %v659 = vunpack.c.h.b16 %v407
        %v660 = vunpack.c.l.b16 %v408
        %v661 = vunpack.c.h.b16 %v408
        %v662 = vunpack.c.l.b16 %v409
        %v663 = vunpack.c.h.b16 %v409
        %v664 = vunpack.c.l.b16 %v410
        %v665 = vunpack.c.h.b16 %v410
        %v666 = vunpack.c.l.b16 %v411
        %v667 = vunpack.c.h.b16 %v411
        %v668 = vunpack.c.l.b16 %v412
        %v669 = vunpack.c.h.b16 %v412
        %v670 = vunpack.c.l.b16 %v413
        %v671 = vunpack.c.h.b16 %v413
        %v672 = vunpack.c.l.b16 %v414
        %v673 = vunpack.c.h.b16 %v414
        %v674 = vunpack.c.l.b16 %v415
        %v675 = vunpack.c.h.b16 %v415
        %v676 = vunpack.c.l.b16 %v416
        %v677 = vunpack.c.h.b16 %v416
        %v678 = vunpack.c.l.b16 %v417
        %v679 = vunpack.c.h.b16 %v417
        %v680 = vunpack.c.l.b16 %v418
        %v681 = vunpack.c.h.b16 %v418
        %v682 = vunpack.c.l.b16 %v419
        %v683 = vunpack.c.h.b16 %v419
        %v684 = vunpack.c.l.b16 %v420
        %v685 = vunpack.c.h.b16 %v420
        %v686 = vunpack.c.l.b16 %v421
        %v687 = vunpack.c.h.b16 %v421
        %v688 = vunpack.c.l.b16 %v422
        %v689 = vunpack.c.h.b16 %v422
        %v690 = vunpack.c.l.b16 %v423
        %v691 = vunpack.c.h.b16 %v423
        %v692 = vunpack.c.l.b16 %v424
        %v693 = vunpack.c.h.b16 %v424
        %v694 = vunpack.c.l.b16 %v425
        %v695 = vunpack.c.h.b16 %v425
        %v696 = vunpack.c.l.b16 %v426
        %v697 = vunpack.c.h.b16 %v426
        %v698 = vunpack.c.l.b16 %v427
        %v699 = vunpack.c.h.b16 %v427
        %v700 = vunpack.c.l.b16 %v428
        %v701 = vunpack.c.h.b16 %v428
        %v702 = vunpack.c.l.b16 %v429
        %v703 = vunpack.c.h.b16 %v429
        %v704 = vunpack.c.l.b16 %v430
        %v705 = vunpack.c.h.b16 %v430
        %v706 = vunpack.c.l.b16 %v431
        %v707 = vunpack.c.h.b16 %v431
        %v708 = vunpack.c.l.b16 %v432
        %v709 = vunpack.c.h.b16 %v432
        %v710 = vunpack.c.l.b16 %v433
        %v711 = vunpack.c.h.b16 %v433
        %v712 = vunpack.c.l.b16 %v434
        %v713 = vunpack.c.h.b16 %v434
        %v714 = vunpack.c.l.b16 %v435
        %v715 = vunpack.c.h.b16 %v435
        %v716 = vunpack.c.l.b16 %v436
        %v717 = vunpack.c.h.b16 %v436
        %v718 = vunpack.c.l.b16 %v437
        %v719 = vunpack.c.h.b16 %v437
        %v720 = vunpack.c.l.b16 %v438
        %v721 = vunpack.c.h.b16 %v438
        %v722 = vunpack.c.l.b16 %v439
        %v723 = vunpack.c.h.b16 %v439
        %v724 = vunpack.c.l.b16 %v440
        %v725 = vunpack.c.h.b16 %v440
        %v726 = vunpack.c.l.b16 %v441
        %v727 = vunpack.c.h.b16 %v441
        %v728 = vunpack.c.l.b16 %v442
        %v729 = vunpack.c.h.b16 %v442
        %v730 = vunpack.c.l.b16 %v443
        %v731 = vunpack.c.h.b16 %v443
        %v732 = vunpack.c.l.b16 %v444
        %v733 = vunpack.c.h.b16 %v444
        %v734 = vunpack.c.l.b16 %v445
        %v735 = vunpack.c.h.b16 %v445
        %v736 = vunpack.c.l.b16 %v446
        %v737 = vunpack.c.h.b16 %v446
        %v738 = vunpack.c.l.b16 %v447
        %v739 = vunpack.c.h.b16 %v447
        %v740 = vunpack.c.l.b16 %v448
        %v741 = vunpack.c.h.b16 %v448
        %v742 = vunpack.c.l.b16 %v449
        %v743 = vunpack.c.h.b16 %v449
        %v744 = vunpack.c.l.b16 %v450
        %v745 = vunpack.c.h.b16 %v450
        %v746 = vunpack.c.l.b16 %v451
        %v747 = vunpack.c.h.b16 %v451
        %v748 = vunpack.c.l.b16 %v452
        %v749 = vunpack.c.h.b16 %v452
        %v750 = vunpack.c.l.b16 %v453
        %v751 = vunpack.c.h.b16 %v453
        %v752 = vunpack.c.l.b16 %v454
        %v753 = vunpack.c.h.b16 %v454
        %v754 = vunpack.c.l.b16 %v455
        %v755 = vunpack.c.h.b16 %v455
        %v756 = vunpack.c.l.b16 %v456
        %v757 = vunpack.c.h.b16 %v456
        %v758 = vunpack.c.l.b16 %v457
        %v759 = vunpack.c.h.b16 %v457
        %v760 = vunpack.c.l.b16 %v458
        %v761 = vunpack.c.h.b16 %v458
        %v762 = vunpack.c.l.b16 %v459
        %v763 = vunpack.c.h.b16 %v459
        %v764 = vunpack.c.l.b16 %v460
        %v765 = vunpack.c.h.b16 %v460
        %v766 = vunpack.c.l.b16 %v461
        %v767 = vunpack.c.h.b16 %v461
        %v768 = vunpack.c.l.b16 %v462
        %v769 = vunpack.c.h.b16 %v462
        %v770 = vunpack.c.l.b16 %v463
        %v771 = vunpack.c.h.b16 %v463
        %v772 = vunpack.c.l.b16 %v464
        %v773 = vunpack.c.h.b16 %v464
        %v774 = vunpack.c.l.b16 %v465
        %v775 = vunpack.c.h.b16 %v465
        %v776 = vpack.c.b16 %v584, %v576
        %v777 = vpack.c.b16 %v585, %v577
        %v778 = vpack.c.b16 %v586, %v578
        %v779 = vpack.c.b16 %v587, %v579
        %v780 = vpack.c.b16 %v588, %v580
        %v781 = vpack.c.b16 %v589, %v581
        %v782 = vpack.c.b16 %v590, %v582
        %v783 = vpack.c.b16 %v591, %v583
        %v784 = vpack.c.b16 %v600, %v592
        %v785 = vpack.c.b16 %v601, %v593
        %v786 = vpack.c.b16 %v602, %v594
        %v787 = vpack.c.b16 %v603, %v595
        %v788 = vpack.c.b16 %v604, %v596
        %v789 = vpack.c.b16 %v605, %v597
        %v790 = vpack.c.b16 %v606, %v598
        %v791 = vpack.c.b16 %v607, %v599
        %v792 = vpack.c.b16 %v616, %v608
        %v793 = vpack.c.b16 %v617, %v609
        %v794 = vpack.c.b16 %v618, %v610
        %v795 = vpack.c.b16 %v619, %v611
        %v796 = vpack.c.b16 %v620, %v612
        %v797 = vpack.c.b16 %v621, %v613
        %v798 = vpack.c.b16 %v622, %v614
        %v799 = vpack.c.b16 %v623, %v615
        %v800 = vpack.c.b16 %v632, %v624
        %v801 = vpack.c.b16 %v633, %v625
        %v802 = vpack.c.b16 %v634, %v626
        %v803 = vpack.c.b16 %v635, %v627
        %v804 = vpack.c.b16 %v636, %v628
        %v805 = vpack.c.b16 %v637, %v629
        %v806 = vpack.c.b16 %v638, %v630
        %v807 = vpack.c.b16 %v639, %v631
        %v808 = vpack.c.b16 %v648, %v640
        %v809 = vpack.c.b16 %v649, %v641
        %v810 = vpack.c.b16 %v650, %v642
        %v811 = vpack.c.b16 %v651, %v643
        %v812 = vpack.c.b16 %v652, %v644
        %v813 = vpack.c.b16 %v653, %v645
        %v814 = vpack.c.b16 %v654, %v646
        %v815 = vpack.c.b16 %v655, %v647
        %v816 = vpack.c.b16 %v664, %v656
        %v817 = vpack.c.b16 %v665, %v657
        %v818 = vpack.c.b16 %v666, %v658
        %v819 = vpack.c.b16 %v667, %v659
        %v820 = vpack.c.b16 %v668, %v660
        %v821 = vpack.c.b16 %v669, %v661
        %v822 = vpack.c.b16 %v670, %v662
        %v823 = vpack.c.b16 %v671, %v663
        %v824 = vpack.c.b16 %v680, %v672
        %v825 = vpack.c.b16 %v681, %v673
        %v826 = vpack.c.b16 %v682, %v674
        %v827 = vpack.c.b16 %v683, %v675
        %v828 = vpack.c.b16 %v684, %v676
        %v829 = vpack.c.b16 %v685, %v677
        %v830 = vpack.c.b16 %v686, %v678
        %v831 = vpack.c.b16 %v687, %v679
        %v832 = vpack.c.b16 %v696, %v688
        %v833 = vpack.c.b16 %v697, %v689
        %v834 = vpack.c.b16 %v698, %v690
        %v835 = vpack.c.b16 %v699, %v691
        %v836 = vpack.c.b16 %v700, %v692
        %v837 = vpack.c.b16 %v701, %v693
        %v838 = vpack.c.b16 %v702, %v694
        %v839 = vpack.c.b16 %v703, %v695
        %v840 = vpack.c.b16 %v712, %v704
        %v841 = vpack.c.b16 %v713, %v705
        %v842 = vpack.c.b16 %v714, %v706
        %v843 = vpack.c.b16 %v715, %v707
        %v844 = vpack.c.b16 %v716, %v708
        %v845 = vpack.c.b16 %v717, %v709
        %v846 = vpack.c.b16 %v718, %v710
        %v847 = vpack.c.b16 %v719, %v711
        %v848 = vpack.c.b16 %v728, %v720
        %v849 = vpack.c.b16 %v729, %v721
        %v850 = vpack.c.b16 %v730, %v722
        %v851 = vpack.c.b16 %v731, %v723
        %v852 = vpack.c.b16 %v732, %v724
        %v853 = vpack.c.b16 %v733, %v725
        %v854 = vpack.c.b16 %v734, %v726
        %v855 = vpack.c.b16 %v735, %v727
        %v856 = vpack.c.b16 %v744, %v736
        %v857 = vpack.c.b16 %v745, %v737
        %v858 = vpack.c.b16 %v746, %v738
        %v859 = vpack.c.b16 %v747, %v739
        %v860 = vpack.c.b16 %v748, %v740
        %v861 = vpack.c.b16 %v749, %v741
        %v862 = vpack.c.b16 %v750, %v742
        %v863 = vpack.c.b16 %v751, %v743
        %v864 = vpack.c.b16 %v760, %v752
        %v865 = vpack.c.b16 %v761, %v753
        %v866 = vpack.c.b16 %v762, %v754
        %v867 = vpack.c.b16 %v763, %v755
        %v868 = vpack.c.b16 %v764, %v756
        %v869 = vpack.c.b16 %v765, %v757
        %v870 = vpack.c.b16 %v766, %v758
        %v871 = vpack.c.b16 %v767, %v759
        %v872 = vpack.c.b16 %v768, %v768
        %v873 = vpack.c.b16 %v769, %v769
        %v874 = vpack.c.b16 %v770, %v770
        %v875 = vpack.c.b16 %v771, %v771
        %v876 = vpack.c.b16 %v772, %v772
        %v877 = vpack.c.b16 %v773, %v773
        %v878 = vpack.c.b16 %v774, %v774
        %v879 = vpack.c.b16 %v775, %v775
        %vm976 = vcmask 588800
        %v978 = vsel %vm976, %v474, 0
        %vm980 = vcmask 1043456
        %v982 = vsel %vm980, %v872, 0
        %v985 = vsel %vm980, %v873, 0
        %v988 = vsel %vm980, %v874, 0
        %v991 = vsel %vm980, %v875, 0
        %v994 = vsel %vm980, %v876, 0
        %v997 = vsel %vm980, %v877, 0
        %v1000 = vsel %vm980, %v878, 0
        %v1003 = vsel %vm980, %v879, 0
        %1005 = vmatprep.subr.bf16.mxu0 %v777
        %1006 = vmatpush1.bf16.msra.mxu0 %v776
        %1007 = vmatprep.subr.bf16.mxu0 %v785
        %1008 = vmatpush1.bf16.msra.mxu0 %v784
        %1009 = vmatprep.subr.bf16.mxu0 %v793
        %1010 = vmatpush1.bf16.msra.mxu0 %v792
        %1011 = vmatprep.subr.bf16.mxu0 %v801
        %1012 = vmatpush1.bf16.msra.mxu0 %v800
        %1013 = vmatprep.subr.bf16.mxu0 %v809
        %1014 = vmatpush1.bf16.msra.mxu0 %v808
        %1015 = vmatprep.subr.bf16.mxu0 %v817
        %1016 = vmatpush1.bf16.msra.mxu0 %v816
        %1017 = vmatprep.subr.bf16.mxu0 %v825
        %1018 = vmatpush1.bf16.msra.mxu0 %v824
        %1019 = vmatprep.subr.bf16.mxu0 %v833
        %1020 = vmatpush1.bf16.msra.mxu0 %v832
        %1021 = vmatprep.subr.bf16.mxu0 %v841
        %1022 = vmatpush1.bf16.msra.mxu0 %v840
        %1023 = vmatprep.subr.bf16.mxu0 %v849
        %1024 = vmatpush1.bf16.msra.mxu0 %v848
        %1025 = vmatprep.subr.bf16.mxu0 %v857
        %1026 = vmatpush1.bf16.msra.mxu0 %v856
        %1027 = vmatprep.subr.bf16.mxu0 %v865
        %1028 = vmatpush1.bf16.msra.mxu0 %v864
        %1029 = vmatprep.subr.bf16.mxu0 %v985
        %1030 = vmatpush1.bf16.msra.mxu0 %v982
        %1031 = vmatprep.subr.bf16.mxu0 0
        %1032 = vmatpush1.bf16.msra.mxu0 0
        %1033 = vmatprep.subr.bf16.mxu0 0
        %1034 = vmatpush1.bf16.msra.mxu0 0
        %1035 = vmatprep.subr.bf16.mxu0 0
        %1036 = vmatpush1.bf16.msra.mxu0 0
        %1037 = vmatprep.mubr.bf16.mxu0 %v978
        %1038 = vmatmul.mubr.bf16.gmra.mrb[0].mxu0 %v473
        %v1039 = vpop.f32.mrb[0].mxu0
        %v1040 = vadd.f32 0.0, %v1039
        %v1041 = vpop.f32.mrb[0].mxu0
        %v1042 = vadd.f32 0.0, %v1041
        %v1043 = vpop.f32.mrb[0].mxu0
        %v1044 = vpop.f32.mrb[0].mxu0
        %1045 = vdwg.mxu0
        %1046 = vmatprep.subr.bf16.mxu0 %v779
        %1047 = vmatpush1.bf16.msra.mxu0 %v778
        %1048 = vmatprep.subr.bf16.mxu0 %v787
        %1049 = vmatpush1.bf16.msra.mxu0 %v786
        %1050 = vmatprep.subr.bf16.mxu0 %v795
        %1051 = vmatpush1.bf16.msra.mxu0 %v794
        %1052 = vmatprep.subr.bf16.mxu0 %v803
        %1053 = vmatpush1.bf16.msra.mxu0 %v802
        %1054 = vmatprep.subr.bf16.mxu0 %v811
        %1055 = vmatpush1.bf16.msra.mxu0 %v810
        %1056 = vmatprep.subr.bf16.mxu0 %v819
        %1057 = vmatpush1.bf16.msra.mxu0 %v818
        %1058 = vmatprep.subr.bf16.mxu0 %v827
        %1059 = vmatpush1.bf16.msra.mxu0 %v826
        %1060 = vmatprep.subr.bf16.mxu0 %v835
        %1061 = vmatpush1.bf16.msra.mxu0 %v834
        %1062 = vmatprep.subr.bf16.mxu0 %v843
        %1063 = vmatpush1.bf16.msra.mxu0 %v842
        %1064 = vmatprep.subr.bf16.mxu0 %v851
        %1065 = vmatpush1.bf16.msra.mxu0 %v850
        %1066 = vmatprep.subr.bf16.mxu0 %v859
        %1067 = vmatpush1.bf16.msra.mxu0 %v858
        %1068 = vmatprep.subr.bf16.mxu0 %v867
        %1069 = vmatpush1.bf16.msra.mxu0 %v866
        %1070 = vmatprep.subr.bf16.mxu0 %v991
        %1071 = vmatpush1.bf16.msra.mxu0 %v988
        %1072 = vmatprep.subr.bf16.mxu0 0
        %1073 = vmatpush1.bf16.msra.mxu0 0
        %1074 = vmatprep.subr.bf16.mxu0 0
        %1075 = vmatpush1.bf16.msra.mxu0 0
        %1076 = vmatprep.subr.bf16.mxu0 0
        %1077 = vmatpush1.bf16.msra.mxu0 0
        %1078 = vmatprep.mubr.bf16.mxu0 %v978
        %1079 = vmatmul.mubr.bf16.gmra.mrb[0].mxu0 %v473
        %v1080 = vpop.f32.mrb[0].mxu0
        %v1081 = vadd.f32 0.0, %v1080
        %v1082 = vpop.f32.mrb[0].mxu0
        %v1083 = vadd.f32 0.0, %v1082
        %v1084 = vpop.f32.mrb[0].mxu0
        %v1085 = vpop.f32.mrb[0].mxu0
        %1086 = vdwg.mxu0
        %1087 = vmatprep.subr.bf16.mxu0 %v781
        %1088 = vmatpush1.bf16.msra.mxu0 %v780
        %1089 = vmatprep.subr.bf16.mxu0 %v789
        %1090 = vmatpush1.bf16.msra.mxu0 %v788
        %1091 = vmatprep.subr.bf16.mxu0 %v797
        %1092 = vmatpush1.bf16.msra.mxu0 %v796
        %1093 = vmatprep.subr.bf16.mxu0 %v805
        %1094 = vmatpush1.bf16.msra.mxu0 %v804
        %1095 = vmatprep.subr.bf16.mxu0 %v813
        %1096 = vmatpush1.bf16.msra.mxu0 %v812
        %1097 = vmatprep.subr.bf16.mxu0 %v821
        %1098 = vmatpush1.bf16.msra.mxu0 %v820
        %1099 = vmatprep.subr.bf16.mxu0 %v829
        %1100 = vmatpush1.bf16.msra.mxu0 %v828
        %1101 = vmatprep.subr.bf16.mxu0 %v837
        %1102 = vmatpush1.bf16.msra.mxu0 %v836
        %1103 = vmatprep.subr.bf16.mxu0 %v845
        %1104 = vmatpush1.bf16.msra.mxu0 %v844
        %1105 = vmatprep.subr.bf16.mxu0 %v853
        %1106 = vmatpush1.bf16.msra.mxu0 %v852
        %1107 = vmatprep.subr.bf16.mxu0 %v861
        %1108 = vmatpush1.bf16.msra.mxu0 %v860
        %1109 = vmatprep.subr.bf16.mxu0 %v869
        %1110 = vmatpush1.bf16.msra.mxu0 %v868
        %1111 = vmatprep.subr.bf16.mxu0 %v997
        %1112 = vmatpush1.bf16.msra.mxu0 %v994
        %1113 = vmatprep.subr.bf16.mxu0 0
        %1114 = vmatpush1.bf16.msra.mxu0 0
        %1115 = vmatprep.subr.bf16.mxu0 0
        %1116 = vmatpush1.bf16.msra.mxu0 0
        %1117 = vmatprep.subr.bf16.mxu0 0
        %1118 = vmatpush1.bf16.msra.mxu0 0
        %1119 = vmatprep.mubr.bf16.mxu0 %v978
        %1120 = vmatmul.mubr.bf16.gmra.mrb[0].mxu0 %v473
        %v1121 = vpop.f32.mrb[0].mxu0
        %v1122 = vadd.f32 0.0, %v1121
        %v1123 = vpop.f32.mrb[0].mxu0
        %v1124 = vadd.f32 0.0, %v1123
        %v1125 = vpop.f32.mrb[0].mxu0
        %v1126 = vpop.f32.mrb[0].mxu0
        %1127 = vdwg.mxu0
        %1128 = vmatprep.subr.bf16.mxu0 %v783
        %1129 = vmatpush1.bf16.msra.mxu0 %v782
        %1130 = vmatprep.subr.bf16.mxu0 %v791
        %1131 = vmatpush1.bf16.msra.mxu0 %v790
        %1132 = vmatprep.subr.bf16.mxu0 %v799
        %1133 = vmatpush1.bf16.msra.mxu0 %v798
        %1134 = vmatprep.subr.bf16.mxu0 %v807
        %1135 = vmatpush1.bf16.msra.mxu0 %v806
        %1136 = vmatprep.subr.bf16.mxu0 %v815
        %1137 = vmatpush1.bf16.msra.mxu0 %v814
        %1138 = vmatprep.subr.bf16.mxu0 %v823
        %1139 = vmatpush1.bf16.msra.mxu0 %v822
        %1140 = vmatprep.subr.bf16.mxu0 %v831
        %1141 = vmatpush1.bf16.msra.mxu0 %v830
        %1142 = vmatprep.subr.bf16.mxu0 %v839
        %1143 = vmatpush1.bf16.msra.mxu0 %v838
        %1144 = vmatprep.subr.bf16.mxu0 %v847
        %1145 = vmatpush1.bf16.msra.mxu0 %v846
        %1146 = vmatprep.subr.bf16.mxu0 %v855
        %1147 = vmatpush1.bf16.msra.mxu0 %v854
        %1148 = vmatprep.subr.bf16.mxu0 %v863
        %1149 = vmatpush1.bf16.msra.mxu0 %v862
        %1150 = vmatprep.subr.bf16.mxu0 %v871
        %1151 = vmatpush1.bf16.msra.mxu0 %v870
        %1152 = vmatprep.subr.bf16.mxu0 %v1003
        %1153 = vmatpush1.bf16.msra.mxu0 %v1000
        %1154 = vmatprep.subr.bf16.mxu0 0
        %1155 = vmatpush1.bf16.msra.mxu0 0
        %1156 = vmatprep.subr.bf16.mxu0 0
        %1157 = vmatpush1.bf16.msra.mxu0 0
        %1158 = vmatprep.subr.bf16.mxu0 0
        %1159 = vmatpush1.bf16.msra.mxu0 0
        %1160 = vmatprep.mubr.bf16.mxu0 %v978
        %1161 = vmatmul.mubr.bf16.gmra.mrb[0].mxu0 %v473
        %v1162 = vpop.f32.mrb[0].mxu0
        %v1163 = vadd.f32 0.0, %v1162
        %v1164 = vpop.f32.mrb[0].mxu0
        %v1165 = vadd.f32 0.0, %v1164
        %v1166 = vpop.f32.mrb[0].mxu0
        %v1167 = vpop.f32.mrb[0].mxu0
        %1168 = vdwg.mxu0
        %v1169 = vtanh.pop %v1040
        %v1170 = vtanh.pop %v1042
        %v1171 = vtanh.pop %v1081
        %v1172 = vtanh.pop %v1083
        %v1173 = vtanh.pop %v1122
        %v1174 = vtanh.pop %v1124
        %v1175 = vtanh.pop %v1163
        %v1176 = vtanh.pop %v1165
        %v1185 = vcombine.low %v1169, %v1170
        %v1186 = vcombine.low %v1171, %v1172
        %v1187 = vcombine.low %v1173, %v1174
        %v1188 = vcombine.low %v1175, %v1176
        %1193 = vst [vmem:[%s362] sm:$0x77] %v1185
        %1194 = vst [vmem:[%s362 + $0x8] sm:$0x77] %v1186
        %1195 = vst [vmem:[%s362 + $0x10] sm:$0x77] %v1187
        %1196 = vst [vmem:[%s362 + $0x18] sm:$0x77] %v1188
        %s1197 = smul.u32 8, %s13
        %p1198 = scmp.lt.s32.totalorder %s1197, 15
        %s1199 = scalar_select %p1198, %s1197, 15
        %s1200 = smul.addr %s1199, 4
        %s1201 = scalar_lea.vmem %s2, %s1200
        // Predicated region
        $region52: #{generator_forward.11} parent=46 // pred_check
          %p1202 = pneg %p78
        $region53: #{generator_forward.11} parent=46 // pred_check_branch
          %1204 = sbr.rel (%p1202) target = $region55
        $region54: #{generator_forward.11} parent=46 // pred_region
          %s1205 = smul.u32 8, %s13
        $region55: #{generator_forward.11} parent=46 // pred_fallthru
          _
      $region47: #{generator_forward.11} parent=5 // pred_fallthru
        _
      %p1206 = scmp.le.s32.totalorder 2, %s8
      // Predicated region
      $region56: #{generator_forward.11} parent=5 // pred_check
        %p1207 = pneg %p1206
      $region57: #{generator_forward.11} parent=5 // pred_check_branch
        %1209 = sbr.rel (%p1207) target = $region59
      $region58: #{generator_forward.11} parent=5 // pred_region
        %s1210 = ssub.s32 %s8, 2
        // Predicated region
        $region60: #{generator_forward.11} parent=58 // pred_check
          %p1211 = pneg %p84
        $region61: #{generator_forward.11} parent=58 // pred_check_branch
          %1213 = sbr.rel (%p1211) target = $region63
        $region62: #{generator_forward.11} parent=58 // pred_region
          %s1214 = smul.u32 8, %s14
          %p1215 = scmp.lt.s32.totalorder %s1214, 15
          %s1216 = scalar_select %p1215, %s1214, 15
          %s1217 = smul.addr %s1216, 4
          %s1218 = scalar_lea.vmem %s2, %s1217
        $region63: #{generator_forward.11} parent=58 // pred_fallthru
          _
      $region59: #{generator_forward.11} parent=5 // pred_fallthru
        _
    $region6: #{generator_forward.11} parent=1 // loop_footer
      %s12 = sadd.s32 1, %s8
    $region7: #{generator_forward.11} parent=1 // loop_footer_branch
      %7 = sbr.rel target = $region3
    $region8: #{generator_forward.11} parent=1 // loop_exit
      _

</llo_original>
